<compile_context>
chip_gen: v6e
topology: v6e:2x2x1
jax: 0.10.0
libtpu: 0.0.40
codegen_flags: <defaults>
</compile_context>

<pallas_src>
import math

import jax
import jax.numpy as jnp
from jax.experimental import pallas as pl
from jax.experimental.pallas import tpu as pltpu


def _mha_kernel(q_ref, k_ref, v_ref,
                wq_ref, bq_ref, wk_ref, bk_ref, wv_ref, bv_ref,
                wo_ref, bo_ref, o_ref):
    f32, bf16 = jnp.float32, jnp.bfloat16
    B = q_ref.shape[0]
    H = wq_ref.shape[0]

    # Load activations once, cast MXU operands to bf16.
    xq = q_ref[...].astype(bf16)          # (B, S, D_in)
    xk = k_ref[...].astype(bf16)
    xv = v_ref[...].astype(bf16)

    acc = jnp.zeros(o_ref.shape, f32)     # (B, S, D_in) f32 accumulator

    for h in range(H):                    # static unroll; leading-axis ref indexing is free
        # Per-head weights (bf16), broadcast along the batch dim so every
        # matmul is a plain leading-batch batched matmul (no reshapes).
        wq_b = jnp.broadcast_to(wq_ref[h], (B,) + wq_ref.shape[1:])   # (B, D_in, Dq)
        wk_b = jnp.broadcast_to(wk_ref[h], (B,) + wk_ref.shape[1:])   # (B, D_in, Dk)
        wv_b = jnp.broadcast_to(wv_ref[h], (B,) + wv_ref.shape[1:])   # (B, D_in, Dk)

        # Projections: bf16 operands, f32 accumulation; bias add in f32.
        # (1/sqrt(Dq) is already folded into wq/bq at prep time.)
        q_h = jnp.einsum('bsd,bde->bse', xq, wq_b,
                         preferred_element_type=f32) + bq_ref[h]       # (B, S, Dq) f32
        k_h = jnp.einsum('bsd,bde->bse', xk, wk_b,
                         preferred_element_type=f32) + bk_ref[h]       # (B, S, Dk) f32
        v_h = jnp.einsum('bsd,bde->bse', xv, wv_b,
                         preferred_element_type=f32) + bv_ref[h]       # (B, S, Dk) f32

        # Scores: contract the last dims directly (no K transpose), f32 out.
        s = jnp.einsum('bqd,bkd->bqk', q_h.astype(bf16), k_h.astype(bf16),
                       preferred_element_type=f32)                     # (B, S, S)

        # Softmax in f32; reciprocal on the EUP slot.
        s = s - jnp.max(s, axis=-1, keepdims=True)
        p = jnp.exp(s)
        p = p * pl.reciprocal(jnp.sum(p, axis=-1, keepdims=True), approx=True)

        head = jnp.einsum('bqk,bkd->bqd', p.astype(bf16), v_h.astype(bf16),
                          preferred_element_type=f32)                  # (B, S, Dk)

        # Output projection contribution of this head (replaces concat+Linear).
        wo_b = jnp.broadcast_to(wo_ref[h], (B,) + wo_ref.shape[1:])    # (B, Dk, D_in)
        acc = acc + jnp.einsum('bsd,bde->bse', head.astype(bf16), wo_b,
                               preferred_element_type=f32)             # (B, S, D_in)

    o_ref[...] = (acc + bo_ref[...]).astype(o_ref.dtype)


def prepare_mha_params(params):
    """One-time (per-parameter-set) layout/dtype prep, hoisted off the call path."""
    wq, bq, wk, bk, wv, bv, wo, bo = params
    dq = wq.shape[-1]
    inv_sqrt_dq = 1.0 / math.sqrt(dq)
    return dict(
        # Scale folded into the query projection (exact: (xW+b)/sqrt(d) = x(W/sqrt d) + b/sqrt d).
        wq=(wq * inv_sqrt_dq).astype(jnp.bfloat16),   # (H, D_in, Dq)
        bq=(bq * inv_sqrt_dq).astype(jnp.float32),    # (H, 1, Dq)
        wk=wk.astype(jnp.bfloat16),                   # (H, D_in, Dk)
        bk=bk.astype(jnp.float32),                    # (H, 1, Dk)
        wv=wv.astype(jnp.bfloat16),                   # (H, D_in, Dk)
        bv=bv.astype(jnp.float32),                    # (H, 1, Dk)
        wo=wo.astype(jnp.bfloat16),                   # (H, Dk, D_in)
        bo=bo.astype(jnp.float32),                    # (1, D_in)
    )


def multi_head_attention(query, key, value, prep):
    """query/key/value: [B, S, D_in] f32. prep: output of prepare_mha_params."""
    B, S, D_in = query.shape
    vmem = pl.BlockSpec(memory_space=pltpu.MemorySpace.VMEM)  # whole array resident in VMEM
    return pl.pallas_call(
        _mha_kernel,
        out_shape=jax.ShapeDtypeStruct((B, S, D_in), jnp.float32),
        in_specs=[vmem] * 11,
        out_specs=vmem,
    )(query, key, value,
      prep["wq"], prep["bq"], prep["wk"], prep["bk"],
      prep["wv"], prep["bv"], prep["wo"], prep["bo"])


def reference_mha(query, key, value, params):
    wq, bq, wk, bk, wv, bv, wo, bo = params
    H = wq.shape[0]
    dq = wq.shape[-1]
    heads = []
    for h in range(H):
        q = query @ wq[h] + bq[h]
        k = key @ wk[h] + bk[h]
        v = value @ wv[h] + bv[h]
        s = jnp.einsum("bqd,bkd->bqk", q, k) / math.sqrt(dq)
        p = jax.nn.softmax(s, axis=-1)
        heads.append(jnp.einsum("bqk,bkd->bqd", p, v))
    cat = jnp.concatenate(heads, axis=-1)                 # [B, S, H*Dk]
    wo_flat = wo.reshape(-1, wo.shape[-1])                # [H*Dk, D_in]
    return cat @ wo_flat + bo[0]


if __name__ == "__main__":
    B, S = 2, 8
    num_heads, input_dim, query_dim, key_dim = 4, 32, 16, 16

    key0 = jax.random.PRNGKey(0)
    ks = jax.random.split(key0, 12)

    def init(k, shape, fan_in):
        bound = 1.0 / math.sqrt(fan_in)
        return jax.random.uniform(k, shape, jnp.float32, -bound, bound)

    # stacked per-head parameters (deterministic synthetic init)
    wq = init(ks[0], (num_heads, input_dim, query_dim), input_dim)
    bq = init(ks[1], (num_heads, 1, query_dim), input_dim)
    wk = init(ks[2], (num_heads, input_dim, key_dim), input_dim)
    bk = init(ks[3], (num_heads, 1, key_dim), input_dim)
    wv = init(ks[4], (num_heads, input_dim, key_dim), input_dim)
    bv = init(ks[5], (num_heads, 1, key_dim), input_dim)
    wo = init(ks[6], (num_heads, key_dim, input_dim), num_heads * key_dim)
    bo = init(ks[7], (1, input_dim), num_heads * key_dim)
    params = (wq, bq, wk, bk, wv, bv, wo, bo)

    query = jax.random.normal(ks[8], (B, S, input_dim), jnp.float32)
    key_t = jax.random.normal(ks[9], (B, S, input_dim), jnp.float32)
    value = jax.random.normal(ks[10], (B, S, input_dim), jnp.float32)

    prep = prepare_mha_params(params)          # one-time layout/dtype prep
    out = multi_head_attention(query, key_t, value, prep)
    out = jax.block_until_ready(out)

    ref = reference_mha(query, key_t, value, params)
    assert out.shape == (B, S, input_dim)
    # Tolerance accounts for bf16 MXU operands + approx reciprocal in softmax;
    # observed error is well below this bound for the f32 reference.
    assert jnp.allclose(out, ref, atol=3e-2, rtol=3e-2), "mismatch vs reference"

    print("KERNEL_OK")
</pallas_src>

<mosaic_0001>
module attributes {stable_mosaic.version = 11 : i64} {
  func.func @_mha_kernel(%arg0: memref<2x8x32xf32, #tpu.memory_space<vmem>>, %arg1: memref<2x8x32xf32, #tpu.memory_space<vmem>>, %arg2: memref<2x8x32xf32, #tpu.memory_space<vmem>>, %arg3: memref<4x32x16xbf16, #tpu.memory_space<vmem>>, %arg4: memref<4x1x16xf32, #tpu.memory_space<vmem>>, %arg5: memref<4x32x16xbf16, #tpu.memory_space<vmem>>, %arg6: memref<4x1x16xf32, #tpu.memory_space<vmem>>, %arg7: memref<4x32x16xbf16, #tpu.memory_space<vmem>>, %arg8: memref<4x1x16xf32, #tpu.memory_space<vmem>>, %arg9: memref<4x16x32xbf16, #tpu.memory_space<vmem>>, %arg10: memref<1x32xf32, #tpu.memory_space<vmem>>, %arg11: memref<2x8x32xf32, #tpu.memory_space<vmem>>) attributes {dimension_semantics = [], scalar_prefetch = 0 : i64, scratch_operands = 0 : i64, tpu.core_type = #tpu.core_type<tc>} {
    %c0 = arith.constant 0 : index
    %c0_0 = arith.constant 0 : index
    %c0_1 = arith.constant 0 : index
    %0 = vector.load %arg0[%c0, %c0_0, %c0_1] : memref<2x8x32xf32, #tpu.memory_space<vmem>>, vector<2x8x32xf32>
    %1 = arith.truncf %0 : vector<2x8x32xf32> to vector<2x8x32xbf16>
    %c0_2 = arith.constant 0 : index
    %c0_3 = arith.constant 0 : index
    %c0_4 = arith.constant 0 : index
    %2 = vector.load %arg1[%c0_2, %c0_3, %c0_4] : memref<2x8x32xf32, #tpu.memory_space<vmem>>, vector<2x8x32xf32>
    %3 = arith.truncf %2 : vector<2x8x32xf32> to vector<2x8x32xbf16>
    %c0_5 = arith.constant 0 : index
    %c0_6 = arith.constant 0 : index
    %c0_7 = arith.constant 0 : index
    %4 = vector.load %arg2[%c0_5, %c0_6, %c0_7] : memref<2x8x32xf32, #tpu.memory_space<vmem>>, vector<2x8x32xf32>
    %5 = arith.truncf %4 : vector<2x8x32xf32> to vector<2x8x32xbf16>
    %cst = arith.constant 0.000000e+00 : f32
    %6 = vector.broadcast %cst : f32 to vector<2x8x32xf32>
    %c0_8 = arith.constant 0 : index
    %c0_9 = arith.constant 0 : index
    %c0_10 = arith.constant 0 : index
    %7 = vector.load %arg3[%c0_8, %c0_9, %c0_10] : memref<4x32x16xbf16, #tpu.memory_space<vmem>>, vector<1x32x16xbf16>
    %8 = vector.shape_cast %7 : vector<1x32x16xbf16> to vector<32x16xbf16>
    %9 = vector.shape_cast %8 : vector<32x16xbf16> to vector<1x32x16xbf16>
    %10 = vector.broadcast %9 : vector<1x32x16xbf16> to vector<2x32x16xbf16>
    %c0_11 = arith.constant 0 : index
    %c0_12 = arith.constant 0 : index
    %c0_13 = arith.constant 0 : index
    %11 = vector.load %arg5[%c0_11, %c0_12, %c0_13] : memref<4x32x16xbf16, #tpu.memory_space<vmem>>, vector<1x32x16xbf16>
    %12 = vector.shape_cast %11 : vector<1x32x16xbf16> to vector<32x16xbf16>
    %13 = vector.shape_cast %12 : vector<32x16xbf16> to vector<1x32x16xbf16>
    %14 = vector.broadcast %13 : vector<1x32x16xbf16> to vector<2x32x16xbf16>
    %c0_14 = arith.constant 0 : index
    %c0_15 = arith.constant 0 : index
    %c0_16 = arith.constant 0 : index
    %15 = vector.load %arg7[%c0_14, %c0_15, %c0_16] : memref<4x32x16xbf16, #tpu.memory_space<vmem>>, vector<1x32x16xbf16>
    %16 = vector.shape_cast %15 : vector<1x32x16xbf16> to vector<32x16xbf16>
    %17 = vector.shape_cast %16 : vector<32x16xbf16> to vector<1x32x16xbf16>
    %18 = vector.broadcast %17 : vector<1x32x16xbf16> to vector<2x32x16xbf16>
    "tpu.trace_start"() <{level = 10 : i32, message = "bsd,bde->bse"}> : () -> ()
    %cst_17 = arith.constant dense<0.000000e+00> : vector<2x8x16xf32>
    %19 = tpu.matmul %1, %10, %cst_17 {dimension_numbers = #tpu.dot_dimension_numbers<[2], [1], [1], [2], [0, 0, 0, 1, 1, 2], [0], [0]>} : vector<2x8x32xbf16>, vector<2x32x16xbf16>, vector<2x8x16xf32> -> vector<2x8x16xf32>
    "tpu.trace_stop"() : () -> ()
    %c0_18 = arith.constant 0 : index
    %c0_19 = arith.constant 0 : index
    %c0_20 = arith.constant 0 : index
    %20 = vector.load %arg4[%c0_18, %c0_19, %c0_20] : memref<4x1x16xf32, #tpu.memory_space<vmem>>, vector<1x1x16xf32>
    %21 = vector.shape_cast %20 : vector<1x1x16xf32> to vector<1x16xf32>
    %22 = vector.shape_cast %21 : vector<1x16xf32> to vector<1x1x16xf32>
    %23 = vector.broadcast %22 : vector<1x1x16xf32> to vector<2x8x16xf32>
    %24 = arith.addf %19, %23 : vector<2x8x16xf32>
    "tpu.trace_start"() <{level = 10 : i32, message = "bsd,bde->bse"}> : () -> ()
    %cst_21 = arith.constant dense<0.000000e+00> : vector<2x8x16xf32>
    %25 = tpu.matmul %3, %14, %cst_21 {dimension_numbers = #tpu.dot_dimension_numbers<[2], [1], [1], [2], [0, 0, 0, 1, 1, 2], [0], [0]>} : vector<2x8x32xbf16>, vector<2x32x16xbf16>, vector<2x8x16xf32> -> vector<2x8x16xf32>
    "tpu.trace_stop"() : () -> ()
    %c0_22 = arith.constant 0 : index
    %c0_23 = arith.constant 0 : index
    %c0_24 = arith.constant 0 : index
    %26 = vector.load %arg6[%c0_22, %c0_23, %c0_24] : memref<4x1x16xf32, #tpu.memory_space<vmem>>, vector<1x1x16xf32>
    %27 = vector.shape_cast %26 : vector<1x1x16xf32> to vector<1x16xf32>
    %28 = vector.shape_cast %27 : vector<1x16xf32> to vector<1x1x16xf32>
    %29 = vector.broadcast %28 : vector<1x1x16xf32> to vector<2x8x16xf32>
    %30 = arith.addf %25, %29 : vector<2x8x16xf32>
    "tpu.trace_start"() <{level = 10 : i32, message = "bsd,bde->bse"}> : () -> ()
    %cst_25 = arith.constant dense<0.000000e+00> : vector<2x8x16xf32>
    %31 = tpu.matmul %5, %18, %cst_25 {dimension_numbers = #tpu.dot_dimension_numbers<[2], [1], [1], [2], [0, 0, 0, 1, 1, 2], [0], [0]>} : vector<2x8x32xbf16>, vector<2x32x16xbf16>, vector<2x8x16xf32> -> vector<2x8x16xf32>
    "tpu.trace_stop"() : () -> ()
    %c0_26 = arith.constant 0 : index
    %c0_27 = arith.constant 0 : index
    %c0_28 = arith.constant 0 : index
    %32 = vector.load %arg8[%c0_26, %c0_27, %c0_28] : memref<4x1x16xf32, #tpu.memory_space<vmem>>, vector<1x1x16xf32>
    %33 = vector.shape_cast %32 : vector<1x1x16xf32> to vector<1x16xf32>
    %34 = vector.shape_cast %33 : vector<1x16xf32> to vector<1x1x16xf32>
    %35 = vector.broadcast %34 : vector<1x1x16xf32> to vector<2x8x16xf32>
    %36 = arith.addf %31, %35 : vector<2x8x16xf32>
    %37 = arith.truncf %24 : vector<2x8x16xf32> to vector<2x8x16xbf16>
    %38 = arith.truncf %30 : vector<2x8x16xf32> to vector<2x8x16xbf16>
    "tpu.trace_start"() <{level = 10 : i32, message = "bqd,bkd->bqk"}> : () -> ()
    %cst_29 = arith.constant dense<0.000000e+00> : vector<2x8x8xf32>
    %39 = tpu.matmul %37, %38, %cst_29 {dimension_numbers = #tpu.dot_dimension_numbers<[2], [2], [1], [1], [0, 0, 0, 1, 1, 1], [0], [0]>} : vector<2x8x16xbf16>, vector<2x8x16xbf16>, vector<2x8x8xf32> -> vector<2x8x8xf32>
    "tpu.trace_stop"() : () -> ()
    %cst_30 = arith.constant dense<0xFF800000> : vector<2x8xf32>
    %40 = vector.multi_reduction <maximumf>, %39, %cst_30 [2] : vector<2x8x8xf32> to vector<2x8xf32>
    %41 = vector.shape_cast %40 : vector<2x8xf32> to vector<2x8x1xf32>
    %42 = vector.broadcast %41 : vector<2x8x1xf32> to vector<2x8x8xf32>
    %43 = arith.subf %39, %42 : vector<2x8x8xf32>
    %44 = math.exp %43 : vector<2x8x8xf32>
    %cst_31 = arith.constant dense<0.000000e+00> : vector<2x8xf32>
    %45 = vector.multi_reduction <add>, %44, %cst_31 [2] : vector<2x8x8xf32> to vector<2x8xf32>
    %46 = vector.shape_cast %45 : vector<2x8xf32> to vector<2x8x1xf32>
    %47 = tpu.reciprocal %46 {approx = true} : vector<2x8x1xf32> -> vector<2x8x1xf32>
    %48 = vector.broadcast %47 : vector<2x8x1xf32> to vector<2x8x8xf32>
    %49 = arith.mulf %44, %48 : vector<2x8x8xf32>
    %50 = arith.truncf %49 : vector<2x8x8xf32> to vector<2x8x8xbf16>
    %51 = arith.truncf %36 : vector<2x8x16xf32> to vector<2x8x16xbf16>
    "tpu.trace_start"() <{level = 10 : i32, message = "bqk,bkd->bqd"}> : () -> ()
    %cst_32 = arith.constant dense<0.000000e+00> : vector<2x8x16xf32>
    %52 = tpu.matmul %50, %51, %cst_32 {dimension_numbers = #tpu.dot_dimension_numbers<[2], [1], [1], [2], [0, 0, 0, 1, 1, 2], [0], [0]>} : vector<2x8x8xbf16>, vector<2x8x16xbf16>, vector<2x8x16xf32> -> vector<2x8x16xf32>
    "tpu.trace_stop"() : () -> ()
    %c0_33 = arith.constant 0 : index
    %c0_34 = arith.constant 0 : index
    %c0_35 = arith.constant 0 : index
    %53 = vector.load %arg9[%c0_33, %c0_34, %c0_35] : memref<4x16x32xbf16, #tpu.memory_space<vmem>>, vector<1x16x32xbf16>
    %54 = vector.shape_cast %53 : vector<1x16x32xbf16> to vector<16x32xbf16>
    %55 = vector.shape_cast %54 : vector<16x32xbf16> to vector<1x16x32xbf16>
    %56 = vector.broadcast %55 : vector<1x16x32xbf16> to vector<2x16x32xbf16>
    %57 = arith.truncf %52 : vector<2x8x16xf32> to vector<2x8x16xbf16>
    "tpu.trace_start"() <{level = 10 : i32, message = "bsd,bde->bse"}> : () -> ()
    %cst_36 = arith.constant dense<0.000000e+00> : vector<2x8x32xf32>
    %58 = tpu.matmul %57, %56, %cst_36 {dimension_numbers = #tpu.dot_dimension_numbers<[2], [1], [1], [2], [0, 0, 0, 1, 1, 2], [0], [0]>} : vector<2x8x16xbf16>, vector<2x16x32xbf16>, vector<2x8x32xf32> -> vector<2x8x32xf32>
    "tpu.trace_stop"() : () -> ()
    %59 = arith.addf %6, %58 : vector<2x8x32xf32>
    %c1 = arith.constant 1 : index
    %c0_37 = arith.constant 0 : index
    %c0_38 = arith.constant 0 : index
    %60 = vector.load %arg3[%c1, %c0_37, %c0_38] : memref<4x32x16xbf16, #tpu.memory_space<vmem>>, vector<1x32x16xbf16>
    %61 = vector.shape_cast %60 : vector<1x32x16xbf16> to vector<32x16xbf16>
    %62 = vector.shape_cast %61 : vector<32x16xbf16> to vector<1x32x16xbf16>
    %63 = vector.broadcast %62 : vector<1x32x16xbf16> to vector<2x32x16xbf16>
    %c1_39 = arith.constant 1 : index
    %c0_40 = arith.constant 0 : index
    %c0_41 = arith.constant 0 : index
    %64 = vector.load %arg5[%c1_39, %c0_40, %c0_41] : memref<4x32x16xbf16, #tpu.memory_space<vmem>>, vector<1x32x16xbf16>
    %65 = vector.shape_cast %64 : vector<1x32x16xbf16> to vector<32x16xbf16>
    %66 = vector.shape_cast %65 : vector<32x16xbf16> to vector<1x32x16xbf16>
    %67 = vector.broadcast %66 : vector<1x32x16xbf16> to vector<2x32x16xbf16>
    %c1_42 = arith.constant 1 : index
    %c0_43 = arith.constant 0 : index
    %c0_44 = arith.constant 0 : index
    %68 = vector.load %arg7[%c1_42, %c0_43, %c0_44] : memref<4x32x16xbf16, #tpu.memory_space<vmem>>, vector<1x32x16xbf16>
    %69 = vector.shape_cast %68 : vector<1x32x16xbf16> to vector<32x16xbf16>
    %70 = vector.shape_cast %69 : vector<32x16xbf16> to vector<1x32x16xbf16>
    %71 = vector.broadcast %70 : vector<1x32x16xbf16> to vector<2x32x16xbf16>
    "tpu.trace_start"() <{level = 10 : i32, message = "bsd,bde->bse"}> : () -> ()
    %cst_45 = arith.constant dense<0.000000e+00> : vector<2x8x16xf32>
    %72 = tpu.matmul %1, %63, %cst_45 {dimension_numbers = #tpu.dot_dimension_numbers<[2], [1], [1], [2], [0, 0, 0, 1, 1, 2], [0], [0]>} : vector<2x8x32xbf16>, vector<2x32x16xbf16>, vector<2x8x16xf32> -> vector<2x8x16xf32>
    "tpu.trace_stop"() : () -> ()
    %c1_46 = arith.constant 1 : index
    %c0_47 = arith.constant 0 : index
    %c0_48 = arith.constant 0 : index
    %73 = vector.load %arg4[%c1_46, %c0_47, %c0_48] : memref<4x1x16xf32, #tpu.memory_space<vmem>>, vector<1x1x16xf32>
    %74 = vector.shape_cast %73 : vector<1x1x16xf32> to vector<1x16xf32>
    %75 = vector.shape_cast %74 : vector<1x16xf32> to vector<1x1x16xf32>
    %76 = vector.broadcast %75 : vector<1x1x16xf32> to vector<2x8x16xf32>
    %77 = arith.addf %72, %76 : vector<2x8x16xf32>
    "tpu.trace_start"() <{level = 10 : i32, message = "bsd,bde->bse"}> : () -> ()
    %cst_49 = arith.constant dense<0.000000e+00> : vector<2x8x16xf32>
    %78 = tpu.matmul %3, %67, %cst_49 {dimension_numbers = #tpu.dot_dimension_numbers<[2], [1], [1], [2], [0, 0, 0, 1, 1, 2], [0], [0]>} : vector<2x8x32xbf16>, vector<2x32x16xbf16>, vector<2x8x16xf32> -> vector<2x8x16xf32>
    "tpu.trace_stop"() : () -> ()
    %c1_50 = arith.constant 1 : index
    %c0_51 = arith.constant 0 : index
    %c0_52 = arith.constant 0 : index
    %79 = vector.load %arg6[%c1_50, %c0_51, %c0_52] : memref<4x1x16xf32, #tpu.memory_space<vmem>>, vector<1x1x16xf32>
    %80 = vector.shape_cast %79 : vector<1x1x16xf32> to vector<1x16xf32>
    %81 = vector.shape_cast %80 : vector<1x16xf32> to vector<1x1x16xf32>
    %82 = vector.broadcast %81 : vector<1x1x16xf32> to vector<2x8x16xf32>
    %83 = arith.addf %78, %82 : vector<2x8x16xf32>
    "tpu.trace_start"() <{level = 10 : i32, message = "bsd,bde->bse"}> : () -> ()
    %cst_53 = arith.constant dense<0.000000e+00> : vector<2x8x16xf32>
    %84 = tpu.matmul %5, %71, %cst_53 {dimension_numbers = #tpu.dot_dimension_numbers<[2], [1], [1], [2], [0, 0, 0, 1, 1, 2], [0], [0]>} : vector<2x8x32xbf16>, vector<2x32x16xbf16>, vector<2x8x16xf32> -> vector<2x8x16xf32>
    "tpu.trace_stop"() : () -> ()
    %c1_54 = arith.constant 1 : index
    %c0_55 = arith.constant 0 : index
    %c0_56 = arith.constant 0 : index
    %85 = vector.load %arg8[%c1_54, %c0_55, %c0_56] : memref<4x1x16xf32, #tpu.memory_space<vmem>>, vector<1x1x16xf32>
    %86 = vector.shape_cast %85 : vector<1x1x16xf32> to vector<1x16xf32>
    %87 = vector.shape_cast %86 : vector<1x16xf32> to vector<1x1x16xf32>
    %88 = vector.broadcast %87 : vector<1x1x16xf32> to vector<2x8x16xf32>
    %89 = arith.addf %84, %88 : vector<2x8x16xf32>
    %90 = arith.truncf %77 : vector<2x8x16xf32> to vector<2x8x16xbf16>
    %91 = arith.truncf %83 : vector<2x8x16xf32> to vector<2x8x16xbf16>
    "tpu.trace_start"() <{level = 10 : i32, message = "bqd,bkd->bqk"}> : () -> ()
    %cst_57 = arith.constant dense<0.000000e+00> : vector<2x8x8xf32>
    %92 = tpu.matmul %90, %91, %cst_57 {dimension_numbers = #tpu.dot_dimension_numbers<[2], [2], [1], [1], [0, 0, 0, 1, 1, 1], [0], [0]>} : vector<2x8x16xbf16>, vector<2x8x16xbf16>, vector<2x8x8xf32> -> vector<2x8x8xf32>
    "tpu.trace_stop"() : () -> ()
    %cst_58 = arith.constant dense<0xFF800000> : vector<2x8xf32>
    %93 = vector.multi_reduction <maximumf>, %92, %cst_58 [2] : vector<2x8x8xf32> to vector<2x8xf32>
    %94 = vector.shape_cast %93 : vector<2x8xf32> to vector<2x8x1xf32>
    %95 = vector.broadcast %94 : vector<2x8x1xf32> to vector<2x8x8xf32>
    %96 = arith.subf %92, %95 : vector<2x8x8xf32>
    %97 = math.exp %96 : vector<2x8x8xf32>
    %cst_59 = arith.constant dense<0.000000e+00> : vector<2x8xf32>
    %98 = vector.multi_reduction <add>, %97, %cst_59 [2] : vector<2x8x8xf32> to vector<2x8xf32>
    %99 = vector.shape_cast %98 : vector<2x8xf32> to vector<2x8x1xf32>
    %100 = tpu.reciprocal %99 {approx = true} : vector<2x8x1xf32> -> vector<2x8x1xf32>
    %101 = vector.broadcast %100 : vector<2x8x1xf32> to vector<2x8x8xf32>
    %102 = arith.mulf %97, %101 : vector<2x8x8xf32>
    %103 = arith.truncf %102 : vector<2x8x8xf32> to vector<2x8x8xbf16>
    %104 = arith.truncf %89 : vector<2x8x16xf32> to vector<2x8x16xbf16>
    "tpu.trace_start"() <{level = 10 : i32, message = "bqk,bkd->bqd"}> : () -> ()
    %cst_60 = arith.constant dense<0.000000e+00> : vector<2x8x16xf32>
    %105 = tpu.matmul %103, %104, %cst_60 {dimension_numbers = #tpu.dot_dimension_numbers<[2], [1], [1], [2], [0, 0, 0, 1, 1, 2], [0], [0]>} : vector<2x8x8xbf16>, vector<2x8x16xbf16>, vector<2x8x16xf32> -> vector<2x8x16xf32>
    "tpu.trace_stop"() : () -> ()
    %c1_61 = arith.constant 1 : index
    %c0_62 = arith.constant 0 : index
    %c0_63 = arith.constant 0 : index
    %106 = vector.load %arg9[%c1_61, %c0_62, %c0_63] : memref<4x16x32xbf16, #tpu.memory_space<vmem>>, vector<1x16x32xbf16>
    %107 = vector.shape_cast %106 : vector<1x16x32xbf16> to vector<16x32xbf16>
    %108 = vector.shape_cast %107 : vector<16x32xbf16> to vector<1x16x32xbf16>
    %109 = vector.broadcast %108 : vector<1x16x32xbf16> to vector<2x16x32xbf16>
    %110 = arith.truncf %105 : vector<2x8x16xf32> to vector<2x8x16xbf16>
    "tpu.trace_start"() <{level = 10 : i32, message = "bsd,bde->bse"}> : () -> ()
    %cst_64 = arith.constant dense<0.000000e+00> : vector<2x8x32xf32>
    %111 = tpu.matmul %110, %109, %cst_64 {dimension_numbers = #tpu.dot_dimension_numbers<[2], [1], [1], [2], [0, 0, 0, 1, 1, 2], [0], [0]>} : vector<2x8x16xbf16>, vector<2x16x32xbf16>, vector<2x8x32xf32> -> vector<2x8x32xf32>
    "tpu.trace_stop"() : () -> ()
    %112 = arith.addf %59, %111 : vector<2x8x32xf32>
    %c2 = arith.constant 2 : index
    %c0_65 = arith.constant 0 : index
    %c0_66 = arith.constant 0 : index
    %113 = vector.load %arg3[%c2, %c0_65, %c0_66] : memref<4x32x16xbf16, #tpu.memory_space<vmem>>, vector<1x32x16xbf16>
    %114 = vector.shape_cast %113 : vector<1x32x16xbf16> to vector<32x16xbf16>
    %115 = vector.shape_cast %114 : vector<32x16xbf16> to vector<1x32x16xbf16>
    %116 = vector.broadcast %115 : vector<1x32x16xbf16> to vector<2x32x16xbf16>
    %c2_67 = arith.constant 2 : index
    %c0_68 = arith.constant 0 : index
    %c0_69 = arith.constant 0 : index
    %117 = vector.load %arg5[%c2_67, %c0_68, %c0_69] : memref<4x32x16xbf16, #tpu.memory_space<vmem>>, vector<1x32x16xbf16>
    %118 = vector.shape_cast %117 : vector<1x32x16xbf16> to vector<32x16xbf16>
    %119 = vector.shape_cast %118 : vector<32x16xbf16> to vector<1x32x16xbf16>
    %120 = vector.broadcast %119 : vector<1x32x16xbf16> to vector<2x32x16xbf16>
    %c2_70 = arith.constant 2 : index
    %c0_71 = arith.constant 0 : index
    %c0_72 = arith.constant 0 : index
    %121 = vector.load %arg7[%c2_70, %c0_71, %c0_72] : memref<4x32x16xbf16, #tpu.memory_space<vmem>>, vector<1x32x16xbf16>
    %122 = vector.shape_cast %121 : vector<1x32x16xbf16> to vector<32x16xbf16>
    %123 = vector.shape_cast %122 : vector<32x16xbf16> to vector<1x32x16xbf16>
    %124 = vector.broadcast %123 : vector<1x32x16xbf16> to vector<2x32x16xbf16>
    "tpu.trace_start"() <{level = 10 : i32, message = "bsd,bde->bse"}> : () -> ()
    %cst_73 = arith.constant dense<0.000000e+00> : vector<2x8x16xf32>
    %125 = tpu.matmul %1, %116, %cst_73 {dimension_numbers = #tpu.dot_dimension_numbers<[2], [1], [1], [2], [0, 0, 0, 1, 1, 2], [0], [0]>} : vector<2x8x32xbf16>, vector<2x32x16xbf16>, vector<2x8x16xf32> -> vector<2x8x16xf32>
    "tpu.trace_stop"() : () -> ()
    %c2_74 = arith.constant 2 : index
    %c0_75 = arith.constant 0 : index
    %c0_76 = arith.constant 0 : index
    %126 = vector.load %arg4[%c2_74, %c0_75, %c0_76] : memref<4x1x16xf32, #tpu.memory_space<vmem>>, vector<1x1x16xf32>
    %127 = vector.shape_cast %126 : vector<1x1x16xf32> to vector<1x16xf32>
    %128 = vector.shape_cast %127 : vector<1x16xf32> to vector<1x1x16xf32>
    %129 = vector.broadcast %128 : vector<1x1x16xf32> to vector<2x8x16xf32>
    %130 = arith.addf %125, %129 : vector<2x8x16xf32>
    "tpu.trace_start"() <{level = 10 : i32, message = "bsd,bde->bse"}> : () -> ()
    %cst_77 = arith.constant dense<0.000000e+00> : vector<2x8x16xf32>
    %131 = tpu.matmul %3, %120, %cst_77 {dimension_numbers = #tpu.dot_dimension_numbers<[2], [1], [1], [2], [0, 0, 0, 1, 1, 2], [0], [0]>} : vector<2x8x32xbf16>, vector<2x32x16xbf16>, vector<2x8x16xf32> -> vector<2x8x16xf32>
    "tpu.trace_stop"() : () -> ()
    %c2_78 = arith.constant 2 : index
    %c0_79 = arith.constant 0 : index
    %c0_80 = arith.constant 0 : index
    %132 = vector.load %arg6[%c2_78, %c0_79, %c0_80] : memref<4x1x16xf32, #tpu.memory_space<vmem>>, vector<1x1x16xf32>
    %133 = vector.shape_cast %132 : vector<1x1x16xf32> to vector<1x16xf32>
    %134 = vector.shape_cast %133 : vector<1x16xf32> to vector<1x1x16xf32>
    %135 = vector.broadcast %134 : vector<1x1x16xf32> to vector<2x8x16xf32>
    %136 = arith.addf %131, %135 : vector<2x8x16xf32>
    "tpu.trace_start"() <{level = 10 : i32, message = "bsd,bde->bse"}> : () -> ()
    %cst_81 = arith.constant dense<0.000000e+00> : vector<2x8x16xf32>
    %137 = tpu.matmul %5, %124, %cst_81 {dimension_numbers = #tpu.dot_dimension_numbers<[2], [1], [1], [2], [0, 0, 0, 1, 1, 2], [0], [0]>} : vector<2x8x32xbf16>, vector<2x32x16xbf16>, vector<2x8x16xf32> -> vector<2x8x16xf32>
    "tpu.trace_stop"() : () -> ()
    %c2_82 = arith.constant 2 : index
    %c0_83 = arith.constant 0 : index
    %c0_84 = arith.constant 0 : index
    %138 = vector.load %arg8[%c2_82, %c0_83, %c0_84] : memref<4x1x16xf32, #tpu.memory_space<vmem>>, vector<1x1x16xf32>
    %139 = vector.shape_cast %138 : vector<1x1x16xf32> to vector<1x16xf32>
    %140 = vector.shape_cast %139 : vector<1x16xf32> to vector<1x1x16xf32>
    %141 = vector.broadcast %140 : vector<1x1x16xf32> to vector<2x8x16xf32>
    %142 = arith.addf %137, %141 : vector<2x8x16xf32>
    %143 = arith.truncf %130 : vector<2x8x16xf32> to vector<2x8x16xbf16>
    %144 = arith.truncf %136 : vector<2x8x16xf32> to vector<2x8x16xbf16>
    "tpu.trace_start"() <{level = 10 : i32, message = "bqd,bkd->bqk"}> : () -> ()
    %cst_85 = arith.constant dense<0.000000e+00> : vector<2x8x8xf32>
    %145 = tpu.matmul %143, %144, %cst_85 {dimension_numbers = #tpu.dot_dimension_numbers<[2], [2], [1], [1], [0, 0, 0, 1, 1, 1], [0], [0]>} : vector<2x8x16xbf16>, vector<2x8x16xbf16>, vector<2x8x8xf32> -> vector<2x8x8xf32>
    "tpu.trace_stop"() : () -> ()
    %cst_86 = arith.constant dense<0xFF800000> : vector<2x8xf32>
    %146 = vector.multi_reduction <maximumf>, %145, %cst_86 [2] : vector<2x8x8xf32> to vector<2x8xf32>
    %147 = vector.shape_cast %146 : vector<2x8xf32> to vector<2x8x1xf32>
    %148 = vector.broadcast %147 : vector<2x8x1xf32> to vector<2x8x8xf32>
    %149 = arith.subf %145, %148 : vector<2x8x8xf32>
    %150 = math.exp %149 : vector<2x8x8xf32>
    %cst_87 = arith.constant dense<0.000000e+00> : vector<2x8xf32>
    %151 = vector.multi_reduction <add>, %150, %cst_87 [2] : vector<2x8x8xf32> to vector<2x8xf32>
    %152 = vector.shape_cast %151 : vector<2x8xf32> to vector<2x8x1xf32>
    %153 = tpu.reciprocal %152 {approx = true} : vector<2x8x1xf32> -> vector<2x8x1xf32>
    %154 = vector.broadcast %153 : vector<2x8x1xf32> to vector<2x8x8xf32>
    %155 = arith.mulf %150, %154 : vector<2x8x8xf32>
    %156 = arith.truncf %155 : vector<2x8x8xf32> to vector<2x8x8xbf16>
    %157 = arith.truncf %142 : vector<2x8x16xf32> to vector<2x8x16xbf16>
    "tpu.trace_start"() <{level = 10 : i32, message = "bqk,bkd->bqd"}> : () -> ()
    %cst_88 = arith.constant dense<0.000000e+00> : vector<2x8x16xf32>
    %158 = tpu.matmul %156, %157, %cst_88 {dimension_numbers = #tpu.dot_dimension_numbers<[2], [1], [1], [2], [0, 0, 0, 1, 1, 2], [0], [0]>} : vector<2x8x8xbf16>, vector<2x8x16xbf16>, vector<2x8x16xf32> -> vector<2x8x16xf32>
    "tpu.trace_stop"() : () -> ()
    %c2_89 = arith.constant 2 : index
    %c0_90 = arith.constant 0 : index
    %c0_91 = arith.constant 0 : index
    %159 = vector.load %arg9[%c2_89, %c0_90, %c0_91] : memref<4x16x32xbf16, #tpu.memory_space<vmem>>, vector<1x16x32xbf16>
    %160 = vector.shape_cast %159 : vector<1x16x32xbf16> to vector<16x32xbf16>
    %161 = vector.shape_cast %160 : vector<16x32xbf16> to vector<1x16x32xbf16>
    %162 = vector.broadcast %161 : vector<1x16x32xbf16> to vector<2x16x32xbf16>
    %163 = arith.truncf %158 : vector<2x8x16xf32> to vector<2x8x16xbf16>
    "tpu.trace_start"() <{level = 10 : i32, message = "bsd,bde->bse"}> : () -> ()
    %cst_92 = arith.constant dense<0.000000e+00> : vector<2x8x32xf32>
    %164 = tpu.matmul %163, %162, %cst_92 {dimension_numbers = #tpu.dot_dimension_numbers<[2], [1], [1], [2], [0, 0, 0, 1, 1, 2], [0], [0]>} : vector<2x8x16xbf16>, vector<2x16x32xbf16>, vector<2x8x32xf32> -> vector<2x8x32xf32>
    "tpu.trace_stop"() : () -> ()
    %165 = arith.addf %112, %164 : vector<2x8x32xf32>
    %c3 = arith.constant 3 : index
    %c0_93 = arith.constant 0 : index
    %c0_94 = arith.constant 0 : index
    %166 = vector.load %arg3[%c3, %c0_93, %c0_94] : memref<4x32x16xbf16, #tpu.memory_space<vmem>>, vector<1x32x16xbf16>
    %167 = vector.shape_cast %166 : vector<1x32x16xbf16> to vector<32x16xbf16>
    %168 = vector.shape_cast %167 : vector<32x16xbf16> to vector<1x32x16xbf16>
    %169 = vector.broadcast %168 : vector<1x32x16xbf16> to vector<2x32x16xbf16>
    %c3_95 = arith.constant 3 : index
    %c0_96 = arith.constant 0 : index
    %c0_97 = arith.constant 0 : index
    %170 = vector.load %arg5[%c3_95, %c0_96, %c0_97] : memref<4x32x16xbf16, #tpu.memory_space<vmem>>, vector<1x32x16xbf16>
    %171 = vector.shape_cast %170 : vector<1x32x16xbf16> to vector<32x16xbf16>
    %172 = vector.shape_cast %171 : vector<32x16xbf16> to vector<1x32x16xbf16>
    %173 = vector.broadcast %172 : vector<1x32x16xbf16> to vector<2x32x16xbf16>
    %c3_98 = arith.constant 3 : index
    %c0_99 = arith.constant 0 : index
    %c0_100 = arith.constant 0 : index
    %174 = vector.load %arg7[%c3_98, %c0_99, %c0_100] : memref<4x32x16xbf16, #tpu.memory_space<vmem>>, vector<1x32x16xbf16>
    %175 = vector.shape_cast %174 : vector<1x32x16xbf16> to vector<32x16xbf16>
    %176 = vector.shape_cast %175 : vector<32x16xbf16> to vector<1x32x16xbf16>
    %177 = vector.broadcast %176 : vector<1x32x16xbf16> to vector<2x32x16xbf16>
    "tpu.trace_start"() <{level = 10 : i32, message = "bsd,bde->bse"}> : () -> ()
    %cst_101 = arith.constant dense<0.000000e+00> : vector<2x8x16xf32>
    %178 = tpu.matmul %1, %169, %cst_101 {dimension_numbers = #tpu.dot_dimension_numbers<[2], [1], [1], [2], [0, 0, 0, 1, 1, 2], [0], [0]>} : vector<2x8x32xbf16>, vector<2x32x16xbf16>, vector<2x8x16xf32> -> vector<2x8x16xf32>
    "tpu.trace_stop"() : () -> ()
    %c3_102 = arith.constant 3 : index
    %c0_103 = arith.constant 0 : index
    %c0_104 = arith.constant 0 : index
    %179 = vector.load %arg4[%c3_102, %c0_103, %c0_104] : memref<4x1x16xf32, #tpu.memory_space<vmem>>, vector<1x1x16xf32>
    %180 = vector.shape_cast %179 : vector<1x1x16xf32> to vector<1x16xf32>
    %181 = vector.shape_cast %180 : vector<1x16xf32> to vector<1x1x16xf32>
    %182 = vector.broadcast %181 : vector<1x1x16xf32> to vector<2x8x16xf32>
    %183 = arith.addf %178, %182 : vector<2x8x16xf32>
    "tpu.trace_start"() <{level = 10 : i32, message = "bsd,bde->bse"}> : () -> ()
    %cst_105 = arith.constant dense<0.000000e+00> : vector<2x8x16xf32>
    %184 = tpu.matmul %3, %173, %cst_105 {dimension_numbers = #tpu.dot_dimension_numbers<[2], [1], [1], [2], [0, 0, 0, 1, 1, 2], [0], [0]>} : vector<2x8x32xbf16>, vector<2x32x16xbf16>, vector<2x8x16xf32> -> vector<2x8x16xf32>
    "tpu.trace_stop"() : () -> ()
    %c3_106 = arith.constant 3 : index
    %c0_107 = arith.constant 0 : index
    %c0_108 = arith.constant 0 : index
    %185 = vector.load %arg6[%c3_106, %c0_107, %c0_108] : memref<4x1x16xf32, #tpu.memory_space<vmem>>, vector<1x1x16xf32>
    %186 = vector.shape_cast %185 : vector<1x1x16xf32> to vector<1x16xf32>
    %187 = vector.shape_cast %186 : vector<1x16xf32> to vector<1x1x16xf32>
    %188 = vector.broadcast %187 : vector<1x1x16xf32> to vector<2x8x16xf32>
    %189 = arith.addf %184, %188 : vector<2x8x16xf32>
    "tpu.trace_start"() <{level = 10 : i32, message = "bsd,bde->bse"}> : () -> ()
    %cst_109 = arith.constant dense<0.000000e+00> : vector<2x8x16xf32>
    %190 = tpu.matmul %5, %177, %cst_109 {dimension_numbers = #tpu.dot_dimension_numbers<[2], [1], [1], [2], [0, 0, 0, 1, 1, 2], [0], [0]>} : vector<2x8x32xbf16>, vector<2x32x16xbf16>, vector<2x8x16xf32> -> vector<2x8x16xf32>
    "tpu.trace_stop"() : () -> ()
    %c3_110 = arith.constant 3 : index
    %c0_111 = arith.constant 0 : index
    %c0_112 = arith.constant 0 : index
    %191 = vector.load %arg8[%c3_110, %c0_111, %c0_112] : memref<4x1x16xf32, #tpu.memory_space<vmem>>, vector<1x1x16xf32>
    %192 = vector.shape_cast %191 : vector<1x1x16xf32> to vector<1x16xf32>
    %193 = vector.shape_cast %192 : vector<1x16xf32> to vector<1x1x16xf32>
    %194 = vector.broadcast %193 : vector<1x1x16xf32> to vector<2x8x16xf32>
    %195 = arith.addf %190, %194 : vector<2x8x16xf32>
    %196 = arith.truncf %183 : vector<2x8x16xf32> to vector<2x8x16xbf16>
    %197 = arith.truncf %189 : vector<2x8x16xf32> to vector<2x8x16xbf16>
    "tpu.trace_start"() <{level = 10 : i32, message = "bqd,bkd->bqk"}> : () -> ()
    %cst_113 = arith.constant dense<0.000000e+00> : vector<2x8x8xf32>
    %198 = tpu.matmul %196, %197, %cst_113 {dimension_numbers = #tpu.dot_dimension_numbers<[2], [2], [1], [1], [0, 0, 0, 1, 1, 1], [0], [0]>} : vector<2x8x16xbf16>, vector<2x8x16xbf16>, vector<2x8x8xf32> -> vector<2x8x8xf32>
    "tpu.trace_stop"() : () -> ()
    %cst_114 = arith.constant dense<0xFF800000> : vector<2x8xf32>
    %199 = vector.multi_reduction <maximumf>, %198, %cst_114 [2] : vector<2x8x8xf32> to vector<2x8xf32>
    %200 = vector.shape_cast %199 : vector<2x8xf32> to vector<2x8x1xf32>
    %201 = vector.broadcast %200 : vector<2x8x1xf32> to vector<2x8x8xf32>
    %202 = arith.subf %198, %201 : vector<2x8x8xf32>
    %203 = math.exp %202 : vector<2x8x8xf32>
    %cst_115 = arith.constant dense<0.000000e+00> : vector<2x8xf32>
    %204 = vector.multi_reduction <add>, %203, %cst_115 [2] : vector<2x8x8xf32> to vector<2x8xf32>
    %205 = vector.shape_cast %204 : vector<2x8xf32> to vector<2x8x1xf32>
    %206 = tpu.reciprocal %205 {approx = true} : vector<2x8x1xf32> -> vector<2x8x1xf32>
    %207 = vector.broadcast %206 : vector<2x8x1xf32> to vector<2x8x8xf32>
    %208 = arith.mulf %203, %207 : vector<2x8x8xf32>
    %209 = arith.truncf %208 : vector<2x8x8xf32> to vector<2x8x8xbf16>
    %210 = arith.truncf %195 : vector<2x8x16xf32> to vector<2x8x16xbf16>
    "tpu.trace_start"() <{level = 10 : i32, message = "bqk,bkd->bqd"}> : () -> ()
    %cst_116 = arith.constant dense<0.000000e+00> : vector<2x8x16xf32>
    %211 = tpu.matmul %209, %210, %cst_116 {dimension_numbers = #tpu.dot_dimension_numbers<[2], [1], [1], [2], [0, 0, 0, 1, 1, 2], [0], [0]>} : vector<2x8x8xbf16>, vector<2x8x16xbf16>, vector<2x8x16xf32> -> vector<2x8x16xf32>
    "tpu.trace_stop"() : () -> ()
    %c3_117 = arith.constant 3 : index
    %c0_118 = arith.constant 0 : index
    %c0_119 = arith.constant 0 : index
    %212 = vector.load %arg9[%c3_117, %c0_118, %c0_119] : memref<4x16x32xbf16, #tpu.memory_space<vmem>>, vector<1x16x32xbf16>
    %213 = vector.shape_cast %212 : vector<1x16x32xbf16> to vector<16x32xbf16>
    %214 = vector.shape_cast %213 : vector<16x32xbf16> to vector<1x16x32xbf16>
    %215 = vector.broadcast %214 : vector<1x16x32xbf16> to vector<2x16x32xbf16>
    %216 = arith.truncf %211 : vector<2x8x16xf32> to vector<2x8x16xbf16>
    "tpu.trace_start"() <{level = 10 : i32, message = "bsd,bde->bse"}> : () -> ()
    %cst_120 = arith.constant dense<0.000000e+00> : vector<2x8x32xf32>
    %217 = tpu.matmul %216, %215, %cst_120 {dimension_numbers = #tpu.dot_dimension_numbers<[2], [1], [1], [2], [0, 0, 0, 1, 1, 2], [0], [0]>} : vector<2x8x16xbf16>, vector<2x16x32xbf16>, vector<2x8x32xf32> -> vector<2x8x32xf32>
    "tpu.trace_stop"() : () -> ()
    %218 = arith.addf %165, %217 : vector<2x8x32xf32>
    %c0_121 = arith.constant 0 : index
    %c0_122 = arith.constant 0 : index
    %219 = vector.load %arg10[%c0_121, %c0_122] : memref<1x32xf32, #tpu.memory_space<vmem>>, vector<1x32xf32>
    %220 = vector.shape_cast %219 : vector<1x32xf32> to vector<1x1x32xf32>
    %221 = vector.broadcast %220 : vector<1x1x32xf32> to vector<2x8x32xf32>
    %222 = arith.addf %218, %221 : vector<2x8x32xf32>
    %c0_123 = arith.constant 0 : index
    %c0_124 = arith.constant 0 : index
    %c0_125 = arith.constant 0 : index
    %223 = vector.load %arg11[%c0_123, %c0_124, %c0_125] : memref<2x8x32xf32, #tpu.memory_space<vmem>>, vector<2x8x32xf32>
    tpu.vector_store %arg11[%c0_123, %c0_124, %c0_125], %222 {strides = array<i32>} : memref<2x8x32xf32, #tpu.memory_space<vmem>>, vector<2x8x32xf32>,
    return
  }
}

</mosaic_0001>

<llo_original>
// kernel: tpu_custom_call.1
$region0: #{tpu_custom_call.1}
  #allocation0 [shape = 'u32[]', space=smem, size = 0x4, offset = 0x4, fixed_abs, tag = 'smem constant byte address 0x4 - core index']
  #allocation1 [shape = 'u32[144,128]{1,0:T(1,128)}', space=vmem, size = 0x12000, scoped, tag = 'internal scratch']
  %s0 = inlined_call_operand.vmem [shape: f32[2,8,32], index: 0, kind: input, shape index: {}]
  %s1 = inlined_call_operand.vmem [shape: f32[2,8,32], index: 1, kind: input, shape index: {}]
  %s2 = inlined_call_operand.vmem [shape: f32[2,8,32], index: 2, kind: input, shape index: {}]
  %s3 = inlined_call_operand.vmem [shape: bf16[4,32,16], index: 3, kind: input, shape index: {}]
  %s4 = inlined_call_operand.vmem [shape: f32[4,1,16], index: 4, kind: input, shape index: {}]
  %s5 = inlined_call_operand.vmem [shape: bf16[4,32,16], index: 5, kind: input, shape index: {}]
  %s6 = inlined_call_operand.vmem [shape: f32[4,1,16], index: 6, kind: input, shape index: {}]
  %s7 = inlined_call_operand.vmem [shape: bf16[4,32,16], index: 7, kind: input, shape index: {}]
  %s8 = inlined_call_operand.vmem [shape: f32[4,1,16], index: 8, kind: input, shape index: {}]
  %s9 = inlined_call_operand.vmem [shape: bf16[4,16,32], index: 9, kind: input, shape index: {}]
  %s10 = inlined_call_operand.vmem [shape: f32[1,32], index: 10, kind: input, shape index: {}]
  %s11 = inlined_call_operand.hbm [shape: f32[2,8,32], index: 11, kind: output, shape index: {}]
  %s12 = sld [smem:[#allocation0]]
  $region54: #{tpu_custom_call.1} parent=0
    _
  %s14 = ssub.s32 1, %s12
  %s15 = scalar_select 0, %s14, %s12
  $region1: #{tpu_custom_call.1} parent=0
    #allocation2 [shape = 'u8[8192]{0}', space=vmem, size = 0x2000, scoped, tag = 'output window, operand 0, single buffered']
    #allocation3 [shape = 's32[1]{0}', space=sflag, size = 0x4, scoped, tag = 'scoped memory for tpu_custom_call.1']
    %16 = vsyncpa [#allocation3], 0
    // Predicated region
    $region2: #{tpu_custom_call.1} parent=1 // pred_check
      _
    $region3: #{tpu_custom_call.1} parent=1 // pred_check_branch
      %18 = sbr.rel (0) target = $region5
    $region4: #{tpu_custom_call.1} parent=1 // pred_region
      _
    $region5: #{tpu_custom_call.1} parent=1 // pred_fallthru
      _
    // Predicated region
    $region6: #{tpu_custom_call.1} parent=1 // pred_check
      _
    $region7: #{tpu_custom_call.1} parent=1 // pred_check_branch
      %20 = sbr.rel (0) target = $region9
    $region8: #{tpu_custom_call.1} parent=1 // pred_region
      _
    $region9: #{tpu_custom_call.1} parent=1 // pred_fallthru
      _
    // Predicated region
    $region10: #{tpu_custom_call.1} parent=1 // pred_check
      _
    $region11: #{tpu_custom_call.1} parent=1 // pred_check_branch
      %22 = sbr.rel (0) target = $region13
    $region12: #{tpu_custom_call.1} parent=1 // pred_region
      _
    $region13: #{tpu_custom_call.1} parent=1 // pred_fallthru
      _
    // Predicated region
    $region14: #{tpu_custom_call.1} parent=1 // pred_check
      _
    $region15: #{tpu_custom_call.1} parent=1 // pred_check_branch
      %24 = sbr.rel (0) target = $region17
    $region16: #{tpu_custom_call.1} parent=1 // pred_region
      _
    $region17: #{tpu_custom_call.1} parent=1 // pred_fallthru
      _
    // Predicated region
    $region18: #{tpu_custom_call.1} parent=1 // pred_check
      _
    $region19: #{tpu_custom_call.1} parent=1 // pred_check_branch
      %26 = sbr.rel (0) target = $region21
    $region20: #{tpu_custom_call.1} parent=1 // pred_region
      _
    $region21: #{tpu_custom_call.1} parent=1 // pred_fallthru
      _
    // Predicated region
    $region22: #{tpu_custom_call.1} parent=1 // pred_check
      _
    $region23: #{tpu_custom_call.1} parent=1 // pred_check_branch
      %28 = sbr.rel (0) target = $region25
    $region24: #{tpu_custom_call.1} parent=1 // pred_region
      _
    $region25: #{tpu_custom_call.1} parent=1 // pred_fallthru
      _
    // Predicated region
    $region26: #{tpu_custom_call.1} parent=1 // pred_check
      _
    $region27: #{tpu_custom_call.1} parent=1 // pred_check_branch
      %30 = sbr.rel (0) target = $region29
    $region28: #{tpu_custom_call.1} parent=1 // pred_region
      _
    $region29: #{tpu_custom_call.1} parent=1 // pred_fallthru
      _
    // Predicated region
    $region30: #{tpu_custom_call.1} parent=1 // pred_check
      _
    $region31: #{tpu_custom_call.1} parent=1 // pred_check_branch
      %32 = sbr.rel (0) target = $region33
    $region32: #{tpu_custom_call.1} parent=1 // pred_region
      _
    $region33: #{tpu_custom_call.1} parent=1 // pred_fallthru
      _
    // Predicated region
    $region34: #{tpu_custom_call.1} parent=1 // pred_check
      _
    $region35: #{tpu_custom_call.1} parent=1 // pred_check_branch
      %34 = sbr.rel (0) target = $region37
    $region36: #{tpu_custom_call.1} parent=1 // pred_region
      _
    $region37: #{tpu_custom_call.1} parent=1 // pred_fallthru
      _
    // Predicated region
    $region38: #{tpu_custom_call.1} parent=1 // pred_check
      _
    $region39: #{tpu_custom_call.1} parent=1 // pred_check_branch
      %36 = sbr.rel (0) target = $region41
    $region40: #{tpu_custom_call.1} parent=1 // pred_region
      _
    $region41: #{tpu_custom_call.1} parent=1 // pred_fallthru
      _
    // Predicated region
    $region42: #{tpu_custom_call.1} parent=1 // pred_check
      _
    $region43: #{tpu_custom_call.1} parent=1 // pred_check_branch
      %38 = sbr.rel (0) target = $region45
    $region44: #{tpu_custom_call.1} parent=1 // pred_region
      _
    $region45: #{tpu_custom_call.1} parent=1 // pred_fallthru
      _
    %v40 = vld [vmem:[%s0] sm:$0xff]
    %v41 = vld [vmem:[%s0 + $0x8] sm:$0xff]
    %v42 = vpack.c.bf16 %v40, %v40
    %v43 = vpack.c.bf16 %v41, %v41
    %v44 = vld [vmem:[%s1] sm:$0xff]
    %v45 = vld [vmem:[%s1 + $0x8] sm:$0xff]
    %v46 = vpack.c.bf16 %v44, %v44
    %v47 = vpack.c.bf16 %v45, %v45
    %v48 = vld [vmem:[%s2] sm:$0xff]
    %v49 = vld [vmem:[%s2 + $0x8] sm:$0xff]
    %v50 = vpack.c.bf16 %v48, %v48
    %v51 = vpack.c.bf16 %v49, %v49
    %v52 = vld [vmem:[%s3] sm:$0xf]
    %v53 = vld [vmem:[%s3 + $0x4] sm:$0xf]
    %v54 = vld [vmem:[%s3 + $0x8] sm:$0xf]
    %v55 = vld [vmem:[%s3 + $0xc] sm:$0xf]
    %v56 = vld [vmem:[%s5] sm:$0xf]
    %v57 = vld [vmem:[%s5 + $0x4] sm:$0xf]
    %v58 = vld [vmem:[%s5 + $0x8] sm:$0xf]
    %v59 = vld [vmem:[%s5 + $0xc] sm:$0xf]
    %v60 = vld [vmem:[%s7] sm:$0xf]
    %v61 = vld [vmem:[%s7 + $0x4] sm:$0xf]
    %v62 = vld [vmem:[%s7 + $0x8] sm:$0xf]
    %v63 = vld [vmem:[%s7 + $0xc] sm:$0xf]
    %v64 = vld [vmem:[%s4] sm:$0x1]
    %v66 = vlaneseq
    %v67 = vshrl.u32 %v66, 7
    %v68 = vsub.s32 0, %v67
    %v69 = vrot.slane %v64, %v68
    %v75 = vunpack.c.l.b16 %v52
    %v76 = vunpack.c.l.b16 %v53
    %v77 = vunpack.c.l.b16 %v54
    %v78 = vunpack.c.l.b16 %v55
    %v79 = vpack.c.b16 %v76, %v75
    %v80 = vpack.c.b16 %v78, %v77
    %vm83 = vcmask 261120
    %v85 = vsel %vm83, %v42, 0
    %87 = vmatprep.subr.bf16.mxu0 0
    %88 = vmatpush1.bf16.msra.mxu0 0
    %89 = vmatprep.subr.bf16.mxu0 0
    %90 = vmatpush1.bf16.msra.mxu0 0
    %91 = vmatprep.subr.bf16.mxu0 0
    %92 = vmatpush1.bf16.msra.mxu0 0
    %93 = vmatprep.subr.bf16.mxu0 0
    %94 = vmatpush1.bf16.msra.mxu0 0
    %95 = vmatprep.subr.bf16.mxu0 0
    %96 = vmatpush1.bf16.msra.mxu0 0
    %97 = vmatprep.subr.bf16.mxu0 0
    %98 = vmatpush1.bf16.msra.mxu0 0
    %99 = vmatprep.subr.bf16.mxu0 0
    %100 = vmatpush1.bf16.msra.mxu0 %v80
    %101 = vmatprep.subr.bf16.mxu0 0
    %102 = vmatpush1.bf16.msra.mxu0 %v79
    %103 = vmatprep.subr.bf16.mxu0 0
    %104 = vmatpush2.bf16.msra.mxu0 0
    %105 = vmatprep.subr.bf16.mxu0 0
    %106 = vmatpush2.bf16.msra.mxu0 0
    %107 = vmatprep.subr.bf16.mxu0 0
    %108 = vmatpush2.bf16.msra.mxu0 0
    %109 = vmatprep.subr.bf16.mxu0 0
    %110 = vmatpush2.bf16.msra.mxu0 0
    %111 = vmatprep.subr.bf16.mxu0 0
    %112 = vmatpush2.bf16.msra.mxu0 0
    %113 = vmatprep.subr.bf16.mxu0 0
    %114 = vmatpush2.bf16.msra.mxu0 0
    %115 = vmatprep.subr.bf16.mxu0 0
    %116 = vmatpush2.bf16.msra.mxu0 0
    %117 = vmatprep.subr.bf16.mxu0 0
    %118 = vmatpush2.bf16.msra.mxu0 0
    %119 = vmatprep.mubr.bf16.mxu0 0
    %120 = vmatmul.mubr.bf16.gmra.mxu0 %v85
    %v121 = vpop.f32.mrf.mxu0
    %v122 = vadd.f32 %v69, %v121
    %v123 = vpop.f32.mrf.mxu0
    %v124 = vpop.f32.mrf.mxu0
    %v125 = vpop.f32.mrf.mxu0
    %126 = vdwg.mxu0
    %v128 = vsel %vm83, %v43, 0
    %130 = vmatprep.subr.bf16.mxu0 0
    %131 = vmatpush1.bf16.msra.mxu0 0
    %132 = vmatprep.subr.bf16.mxu0 0
    %133 = vmatpush1.bf16.msra.mxu0 0
    %134 = vmatprep.subr.bf16.mxu0 0
    %135 = vmatpush1.bf16.msra.mxu0 0
    %136 = vmatprep.subr.bf16.mxu0 0
    %137 = vmatpush1.bf16.msra.mxu0 0
    %138 = vmatprep.subr.bf16.mxu0 0
    %139 = vmatpush1.bf16.msra.mxu0 0
    %140 = vmatprep.subr.bf16.mxu0 0
    %141 = vmatpush1.bf16.msra.mxu0 0
    %142 = vmatprep.subr.bf16.mxu0 0
    %143 = vmatpush1.bf16.msra.mxu0 %v80
    %144 = vmatprep.subr.bf16.mxu0 0
    %145 = vmatpush1.bf16.msra.mxu0 %v79
    %146 = vmatprep.subr.bf16.mxu0 0
    %147 = vmatpush2.bf16.msra.mxu0 0
    %148 = vmatprep.subr.bf16.mxu0 0
    %149 = vmatpush2.bf16.msra.mxu0 0
    %150 = vmatprep.subr.bf16.mxu0 0
    %151 = vmatpush2.bf16.msra.mxu0 0
    %152 = vmatprep.subr.bf16.mxu0 0
    %153 = vmatpush2.bf16.msra.mxu0 0
    %154 = vmatprep.subr.bf16.mxu0 0
    %155 = vmatpush2.bf16.msra.mxu0 0
    %156 = vmatprep.subr.bf16.mxu0 0
    %157 = vmatpush2.bf16.msra.mxu0 0
    %158 = vmatprep.subr.bf16.mxu0 0
    %159 = vmatpush2.bf16.msra.mxu0 0
    %160 = vmatprep.subr.bf16.mxu0 0
    %161 = vmatpush2.bf16.msra.mxu0 0
    %162 = vmatprep.mubr.bf16.mxu0 0
    %163 = vmatmul.mubr.bf16.gmra.mxu0 %v128
    %v164 = vpop.f32.mrf.mxu0
    %v165 = vadd.f32 %v69, %v164
    %v166 = vpop.f32.mrf.mxu0
    %v167 = vpop.f32.mrf.mxu0
    %v168 = vpop.f32.mrf.mxu0
    %169 = vdwg.mxu0
    %v170 = vld [vmem:[%s6] sm:$0x1]
    %v172 = vlaneseq
    %v173 = vshrl.u32 %v172, 7
    %v174 = vsub.s32 0, %v173
    %v175 = vrot.slane %v170, %v174
    %v181 = vunpack.c.l.b16 %v56
    %v182 = vunpack.c.l.b16 %v57
    %v183 = vunpack.c.l.b16 %v58
    %v184 = vunpack.c.l.b16 %v59
    %v185 = vpack.c.b16 %v182, %v181
    %v186 = vpack.c.b16 %v184, %v183
    %v190 = vsel %vm83, %v46, 0
    %192 = vmatprep.subr.bf16.mxu0 0
    %193 = vmatpush1.bf16.msra.mxu0 0
    %194 = vmatprep.subr.bf16.mxu0 0
    %195 = vmatpush1.bf16.msra.mxu0 0
    %196 = vmatprep.subr.bf16.mxu0 0
    %197 = vmatpush1.bf16.msra.mxu0 0
    %198 = vmatprep.subr.bf16.mxu0 0
    %199 = vmatpush1.bf16.msra.mxu0 0
    %200 = vmatprep.subr.bf16.mxu0 0
    %201 = vmatpush1.bf16.msra.mxu0 0
    %202 = vmatprep.subr.bf16.mxu0 0
    %203 = vmatpush1.bf16.msra.mxu0 0
    %204 = vmatprep.subr.bf16.mxu0 0
    %205 = vmatpush1.bf16.msra.mxu0 %v186
    %206 = vmatprep.subr.bf16.mxu0 0
    %207 = vmatpush1.bf16.msra.mxu0 %v185
    %208 = vmatprep.subr.bf16.mxu0 0
    %209 = vmatpush2.bf16.msra.mxu0 0
    %210 = vmatprep.subr.bf16.mxu0 0
    %211 = vmatpush2.bf16.msra.mxu0 0
    %212 = vmatprep.subr.bf16.mxu0 0
    %213 = vmatpush2.bf16.msra.mxu0 0
    %214 = vmatprep.subr.bf16.mxu0 0
    %215 = vmatpush2.bf16.msra.mxu0 0
    %216 = vmatprep.subr.bf16.mxu0 0
    %217 = vmatpush2.bf16.msra.mxu0 0
    %218 = vmatprep.subr.bf16.mxu0 0
    %219 = vmatpush2.bf16.msra.mxu0 0
    %220 = vmatprep.subr.bf16.mxu0 0
    %221 = vmatpush2.bf16.msra.mxu0 0
    %222 = vmatprep.subr.bf16.mxu0 0
    %223 = vmatpush2.bf16.msra.mxu0 0
    %224 = vmatprep.mubr.bf16.mxu0 0
    %225 = vmatmul.mubr.bf16.gmra.mxu0 %v190
    %v226 = vpop.f32.mrf.mxu0
    %v227 = vadd.f32 %v175, %v226
    %v228 = vpop.f32.mrf.mxu0
    %v229 = vpop.f32.mrf.mxu0
    %v230 = vpop.f32.mrf.mxu0
    %231 = vdwg.mxu0
    %v233 = vsel %vm83, %v47, 0
    %235 = vmatprep.subr.bf16.mxu0 0
    %236 = vmatpush1.bf16.msra.mxu0 0
    %237 = vmatprep.subr.bf16.mxu0 0
    %238 = vmatpush1.bf16.msra.mxu0 0
    %239 = vmatprep.subr.bf16.mxu0 0
    %240 = vmatpush1.bf16.msra.mxu0 0
    %241 = vmatprep.subr.bf16.mxu0 0
    %242 = vmatpush1.bf16.msra.mxu0 0
    %243 = vmatprep.subr.bf16.mxu0 0
    %244 = vmatpush1.bf16.msra.mxu0 0
    %245 = vmatprep.subr.bf16.mxu0 0
    %246 = vmatpush1.bf16.msra.mxu0 0
    %247 = vmatprep.subr.bf16.mxu0 0
    %248 = vmatpush1.bf16.msra.mxu0 %v186
    %249 = vmatprep.subr.bf16.mxu0 0
    %250 = vmatpush1.bf16.msra.mxu0 %v185
    %251 = vmatprep.subr.bf16.mxu0 0
    %252 = vmatpush2.bf16.msra.mxu0 0
    %253 = vmatprep.subr.bf16.mxu0 0
    %254 = vmatpush2.bf16.msra.mxu0 0
    %255 = vmatprep.subr.bf16.mxu0 0
    %256 = vmatpush2.bf16.msra.mxu0 0
    %257 = vmatprep.subr.bf16.mxu0 0
    %258 = vmatpush2.bf16.msra.mxu0 0
    %259 = vmatprep.subr.bf16.mxu0 0
    %260 = vmatpush2.bf16.msra.mxu0 0
    %261 = vmatprep.subr.bf16.mxu0 0
    %262 = vmatpush2.bf16.msra.mxu0 0
    %263 = vmatprep.subr.bf16.mxu0 0
    %264 = vmatpush2.bf16.msra.mxu0 0
    %265 = vmatprep.subr.bf16.mxu0 0
    %266 = vmatpush2.bf16.msra.mxu0 0
    %267 = vmatprep.mubr.bf16.mxu0 0
    %268 = vmatmul.mubr.bf16.gmra.mxu0 %v233
    %v269 = vpop.f32.mrf.mxu0
    %v270 = vadd.f32 %v175, %v269
    %v271 = vpop.f32.mrf.mxu0
    %v272 = vpop.f32.mrf.mxu0
    %v273 = vpop.f32.mrf.mxu0
    %274 = vdwg.mxu0
    %v275 = vld [vmem:[%s8] sm:$0x1]
    %v277 = vlaneseq
    %v278 = vshrl.u32 %v277, 7
    %v279 = vsub.s32 0, %v278
    %v280 = vrot.slane %v275, %v279
    %v286 = vunpack.c.l.b16 %v60
    %v287 = vunpack.c.l.b16 %v61
    %v288 = vunpack.c.l.b16 %v62
    %v289 = vunpack.c.l.b16 %v63
    %v290 = vpack.c.b16 %v287, %v286
    %v291 = vpack.c.b16 %v289, %v288
    %v295 = vsel %vm83, %v50, 0
    %297 = vmatprep.subr.bf16.mxu0 0
    %298 = vmatpush1.bf16.msra.mxu0 0
    %299 = vmatprep.subr.bf16.mxu0 0
    %300 = vmatpush1.bf16.msra.mxu0 0
    %301 = vmatprep.subr.bf16.mxu0 0
    %302 = vmatpush1.bf16.msra.mxu0 0
    %303 = vmatprep.subr.bf16.mxu0 0
    %304 = vmatpush1.bf16.msra.mxu0 0
    %305 = vmatprep.subr.bf16.mxu0 0
    %306 = vmatpush1.bf16.msra.mxu0 0
    %307 = vmatprep.subr.bf16.mxu0 0
    %308 = vmatpush1.bf16.msra.mxu0 0
    %309 = vmatprep.subr.bf16.mxu0 0
    %310 = vmatpush1.bf16.msra.mxu0 %v291
    %311 = vmatprep.subr.bf16.mxu0 0
    %312 = vmatpush1.bf16.msra.mxu0 %v290
    %313 = vmatprep.subr.bf16.mxu0 0
    %314 = vmatpush2.bf16.msra.mxu0 0
    %315 = vmatprep.subr.bf16.mxu0 0
    %316 = vmatpush2.bf16.msra.mxu0 0
    %317 = vmatprep.subr.bf16.mxu0 0
    %318 = vmatpush2.bf16.msra.mxu0 0
    %319 = vmatprep.subr.bf16.mxu0 0
    %320 = vmatpush2.bf16.msra.mxu0 0
    %321 = vmatprep.subr.bf16.mxu0 0
    %322 = vmatpush2.bf16.msra.mxu0 0
    %323 = vmatprep.subr.bf16.mxu0 0
    %324 = vmatpush2.bf16.msra.mxu0 0
    %325 = vmatprep.subr.bf16.mxu0 0
    %326 = vmatpush2.bf16.msra.mxu0 0
    %327 = vmatprep.subr.bf16.mxu0 0
    %328 = vmatpush2.bf16.msra.mxu0 0
    %329 = vmatprep.mubr.bf16.mxu0 0
    %330 = vmatmul.mubr.bf16.gmra.mxu0 %v295
    %v331 = vpop.f32.mrf.mxu0
    %v332 = vadd.f32 %v280, %v331
    %v333 = vpop.f32.mrf.mxu0
    %v334 = vpop.f32.mrf.mxu0
    %v335 = vpop.f32.mrf.mxu0
    %336 = vdwg.mxu0
    %v338 = vsel %vm83, %v51, 0
    %340 = vmatprep.subr.bf16.mxu0 0
    %341 = vmatpush1.bf16.msra.mxu0 0
    %342 = vmatprep.subr.bf16.mxu0 0
    %343 = vmatpush1.bf16.msra.mxu0 0
    %344 = vmatprep.subr.bf16.mxu0 0
    %345 = vmatpush1.bf16.msra.mxu0 0
    %346 = vmatprep.subr.bf16.mxu0 0
    %347 = vmatpush1.bf16.msra.mxu0 0
    %348 = vmatprep.subr.bf16.mxu0 0
    %349 = vmatpush1.bf16.msra.mxu0 0
    %350 = vmatprep.subr.bf16.mxu0 0
    %351 = vmatpush1.bf16.msra.mxu0 0
    %352 = vmatprep.subr.bf16.mxu0 0
    %353 = vmatpush1.bf16.msra.mxu0 %v291
    %354 = vmatprep.subr.bf16.mxu0 0
    %355 = vmatpush1.bf16.msra.mxu0 %v290
    %356 = vmatprep.subr.bf16.mxu0 0
    %357 = vmatpush2.bf16.msra.mxu0 0
    %358 = vmatprep.subr.bf16.mxu0 0
    %359 = vmatpush2.bf16.msra.mxu0 0
    %360 = vmatprep.subr.bf16.mxu0 0
    %361 = vmatpush2.bf16.msra.mxu0 0
    %362 = vmatprep.subr.bf16.mxu0 0
    %363 = vmatpush2.bf16.msra.mxu0 0
    %364 = vmatprep.subr.bf16.mxu0 0
    %365 = vmatpush2.bf16.msra.mxu0 0
    %366 = vmatprep.subr.bf16.mxu0 0
    %367 = vmatpush2.bf16.msra.mxu0 0
    %368 = vmatprep.subr.bf16.mxu0 0
    %369 = vmatpush2.bf16.msra.mxu0 0
    %370 = vmatprep.subr.bf16.mxu0 0
    %371 = vmatpush2.bf16.msra.mxu0 0
    %372 = vmatprep.mubr.bf16.mxu0 0
    %373 = vmatmul.mubr.bf16.gmra.mxu0 %v338
    %v374 = vpop.f32.mrf.mxu0
    %v375 = vadd.f32 %v280, %v374
    %v376 = vpop.f32.mrf.mxu0
    %v377 = vpop.f32.mrf.mxu0
    %v378 = vpop.f32.mrf.mxu0
    %379 = vdwg.mxu0
    %v380 = vpack.c.bf16 %v122, %v122
    %v381 = vpack.c.bf16 %v165, %v165
    %v382 = vpack.c.bf16 %v227, %v227
    %v383 = vpack.c.bf16 %v270, %v270
    %vm384 = vcmask 130048
    %v386 = vsel %vm384, %v380, 0
    %v389 = vsel %vm384, %v382, 0
    %391 = vmatprep.subr.bf16.mxu0 0
    %392 = vmatpush1.bf16.xpose.msra.mxu0 0
    %393 = vmatprep.subr.bf16.mxu0 0
    %394 = vmatpush1.bf16.xpose.msra.mxu0 0
    %395 = vmatprep.subr.bf16.mxu0 0
    %396 = vmatpush1.bf16.xpose.msra.mxu0 0
    %397 = vmatprep.subr.bf16.mxu0 0
    %398 = vmatpush1.bf16.xpose.msra.mxu0 0
    %399 = vmatprep.subr.bf16.mxu0 0
    %400 = vmatpush1.bf16.xpose.msra.mxu0 0
    %401 = vmatprep.subr.bf16.mxu0 0
    %402 = vmatpush1.bf16.xpose.msra.mxu0 0
    %403 = vmatprep.subr.bf16.mxu0 0
    %404 = vmatpush1.bf16.xpose.msra.mxu0 0
    %405 = vmatprep.subr.bf16.mxu0 0
    %406 = vmatpush1.bf16.xpose.msra.mxu0 %v389
    %407 = vmatprep.subr.bf16.mxu0 0
    %408 = vmatpush2.bf16.xpose.msra.mxu0 0
    %409 = vmatprep.subr.bf16.mxu0 0
    %410 = vmatpush2.bf16.xpose.msra.mxu0 0
    %411 = vmatprep.subr.bf16.mxu0 0
    %412 = vmatpush2.bf16.xpose.msra.mxu0 0
    %413 = vmatprep.subr.bf16.mxu0 0
    %414 = vmatpush2.bf16.xpose.msra.mxu0 0
    %415 = vmatprep.subr.bf16.mxu0 0
    %416 = vmatpush2.bf16.xpose.msra.mxu0 0
    %417 = vmatprep.subr.bf16.mxu0 0
    %418 = vmatpush2.bf16.xpose.msra.mxu0 0
    %419 = vmatprep.subr.bf16.mxu0 0
    %420 = vmatpush2.bf16.xpose.msra.mxu0 0
    %421 = vmatprep.subr.bf16.mxu0 0
    %422 = vmatpush2.bf16.xpose.msra.mxu0 0
    %423 = vmatprep.mubr.bf16.mxu0 0
    %424 = vmatmul.mubr.bf16.gmra.mxu0 %v386
    %v425 = vpop.f32.mrf.mxu0
    %v426 = vadd.f32 0.0, %v425
    %v427 = vpop.f32.mrf.mxu0
    %v428 = vpop.f32.mrf.mxu0
    %v429 = vpop.f32.mrf.mxu0
    %430 = vdwg.mxu0
    %v432 = vsel %vm384, %v381, 0
    %v435 = vsel %vm384, %v383, 0
    %437 = vmatprep.subr.bf16.mxu0 0
    %438 = vmatpush1.bf16.xpose.msra.mxu0 0
    %439 = vmatprep.subr.bf16.mxu0 0
    %440 = vmatpush1.bf16.xpose.msra.mxu0 0
    %441 = vmatprep.subr.bf16.mxu0 0
    %442 = vmatpush1.bf16.xpose.msra.mxu0 0
    %443 = vmatprep.subr.bf16.mxu0 0
    %444 = vmatpush1.bf16.xpose.msra.mxu0 0
    %445 = vmatprep.subr.bf16.mxu0 0
    %446 = vmatpush1.bf16.xpose.msra.mxu0 0
    %447 = vmatprep.subr.bf16.mxu0 0
    %448 = vmatpush1.bf16.xpose.msra.mxu0 0
    %449 = vmatprep.subr.bf16.mxu0 0
    %450 = vmatpush1.bf16.xpose.msra.mxu0 0
    %451 = vmatprep.subr.bf16.mxu0 0
    %452 = vmatpush1.bf16.xpose.msra.mxu0 %v435
    %453 = vmatprep.subr.bf16.mxu0 0
    %454 = vmatpush2.bf16.xpose.msra.mxu0 0
    %455 = vmatprep.subr.bf16.mxu0 0
    %456 = vmatpush2.bf16.xpose.msra.mxu0 0
    %457 = vmatprep.subr.bf16.mxu0 0
    %458 = vmatpush2.bf16.xpose.msra.mxu0 0
    %459 = vmatprep.subr.bf16.mxu0 0
    %460 = vmatpush2.bf16.xpose.msra.mxu0 0
    %461 = vmatprep.subr.bf16.mxu0 0
    %462 = vmatpush2.bf16.xpose.msra.mxu0 0
    %463 = vmatprep.subr.bf16.mxu0 0
    %464 = vmatpush2.bf16.xpose.msra.mxu0 0
    %465 = vmatprep.subr.bf16.mxu0 0
    %466 = vmatpush2.bf16.xpose.msra.mxu0 0
    %467 = vmatprep.subr.bf16.mxu0 0
    %468 = vmatpush2.bf16.xpose.msra.mxu0 0
    %469 = vmatprep.mubr.bf16.mxu0 0
    %470 = vmatmul.mubr.bf16.gmra.mxu0 %v432
    %v471 = vpop.f32.mrf.mxu0
    %v472 = vadd.f32 0.0, %v471
    %v473 = vpop.f32.mrf.mxu0
    %v474 = vpop.f32.mrf.mxu0
    %v475 = vpop.f32.mrf.mxu0
    %476 = vdwg.mxu0
    %vm477 = vcmask 64512
    %v478 = vsel %vm477, %v426, -inf
    %479 = vmax.xlane.f32.xlu0 %v478
    %v480 = vpop.xlane.xlu0 %479
    %v481 = vsel %vm477, %v472, -inf
    %482 = vmax.xlane.f32.xlu0 %v481
    %v483 = vpop.xlane.xlu0 %482
    %v484 = vsub.f32 %v426, %v480
    %v485 = vsub.f32 %v472, %v483
    %v486 = vmul.f32 %v484, 1.442695
    %v487 = vpow.pop %v486
    %v488 = vmul.f32 %v485, 1.442695
    %v489 = vpow.pop %v488
    %v490 = vsel %vm477, %v487, 0.0
    %491 = vadd.xlane.f32.xlu0 %v490
    %v492 = vpop.xlane.xlu0 %491
    %v493 = vsel %vm477, %v489, 0.0
    %494 = vadd.xlane.f32.xlu0 %v493
    %v495 = vpop.xlane.xlu0 %494
    %v496 = vrcp.pop %v492
    %v497 = vrcp.pop %v495
    %v498 = vmul.f32 %v487, %v496
    %v499 = vmul.f32 %v489, %v497
    %v500 = vpack.c.bf16 %v498, %v498
    %v501 = vpack.c.bf16 %v499, %v499
    %v502 = vpack.c.bf16 %v332, %v332
    %v503 = vpack.c.bf16 %v375, %v375
    %v505 = vsel %vm477, %v500, 0
    %vm507 = vcmask 1043456
    %v509 = vsel %vm507, %v502, 0
    %511 = vmatprep.subr.bf16.mxu0 0
    %512 = vmatpush1.bf16.msra.mxu0 0
    %513 = vmatprep.subr.bf16.mxu0 0
    %514 = vmatpush1.bf16.msra.mxu0 0
    %515 = vmatprep.subr.bf16.mxu0 0
    %516 = vmatpush1.bf16.msra.mxu0 0
    %517 = vmatprep.subr.bf16.mxu0 0
    %518 = vmatpush1.bf16.msra.mxu0 0
    %519 = vmatprep.subr.bf16.mxu0 0
    %520 = vmatpush1.bf16.msra.mxu0 0
    %521 = vmatprep.subr.bf16.mxu0 0
    %522 = vmatpush1.bf16.msra.mxu0 0
    %523 = vmatprep.subr.bf16.mxu0 0
    %524 = vmatpush1.bf16.msra.mxu0 0
    %525 = vmatprep.subr.bf16.mxu0 0
    %526 = vmatpush1.bf16.msra.mxu0 %v509
    %527 = vmatprep.subr.bf16.mxu0 0
    %528 = vmatpush2.bf16.msra.mxu0 0
    %529 = vmatprep.subr.bf16.mxu0 0
    %530 = vmatpush2.bf16.msra.mxu0 0
    %531 = vmatprep.subr.bf16.mxu0 0
    %532 = vmatpush2.bf16.msra.mxu0 0
    %533 = vmatprep.subr.bf16.mxu0 0
    %534 = vmatpush2.bf16.msra.mxu0 0
    %535 = vmatprep.subr.bf16.mxu0 0
    %536 = vmatpush2.bf16.msra.mxu0 0
    %537 = vmatprep.subr.bf16.mxu0 0
    %538 = vmatpush2.bf16.msra.mxu0 0
    %539 = vmatprep.subr.bf16.mxu0 0
    %540 = vmatpush2.bf16.msra.mxu0 0
    %541 = vmatprep.subr.bf16.mxu0 0
    %542 = vmatpush2.bf16.msra.mxu0 0
    %543 = vmatprep.mubr.bf16.mxu0 0
    %544 = vmatmul.mubr.bf16.gmra.mxu0 %v505
    %v545 = vpop.f32.mrf.mxu0
    %v546 = vadd.f32 0.0, %v545
    %v547 = vpop.f32.mrf.mxu0
    %v548 = vpop.f32.mrf.mxu0
    %v549 = vpop.f32.mrf.mxu0
    %550 = vdwg.mxu0
    %v552 = vsel %vm477, %v501, 0
    %v555 = vsel %vm507, %v503, 0
    %557 = vmatprep.subr.bf16.mxu0 0
    %558 = vmatpush1.bf16.msra.mxu0 0
    %559 = vmatprep.subr.bf16.mxu0 0
    %560 = vmatpush1.bf16.msra.mxu0 0
    %561 = vmatprep.subr.bf16.mxu0 0
    %562 = vmatpush1.bf16.msra.mxu0 0
    %563 = vmatprep.subr.bf16.mxu0 0
    %564 = vmatpush1.bf16.msra.mxu0 0
    %565 = vmatprep.subr.bf16.mxu0 0
    %566 = vmatpush1.bf16.msra.mxu0 0
    %567 = vmatprep.subr.bf16.mxu0 0
    %568 = vmatpush1.bf16.msra.mxu0 0
    %569 = vmatprep.subr.bf16.mxu0 0
    %570 = vmatpush1.bf16.msra.mxu0 0
    %571 = vmatprep.subr.bf16.mxu0 0
    %572 = vmatpush1.bf16.msra.mxu0 %v555
    %573 = vmatprep.subr.bf16.mxu0 0
    %574 = vmatpush2.bf16.msra.mxu0 0
    %575 = vmatprep.subr.bf16.mxu0 0
    %576 = vmatpush2.bf16.msra.mxu0 0
    %577 = vmatprep.subr.bf16.mxu0 0
    %578 = vmatpush2.bf16.msra.mxu0 0
    %579 = vmatprep.subr.bf16.mxu0 0
    %580 = vmatpush2.bf16.msra.mxu0 0
    %581 = vmatprep.subr.bf16.mxu0 0
    %582 = vmatpush2.bf16.msra.mxu0 0
    %583 = vmatprep.subr.bf16.mxu0 0
    %584 = vmatpush2.bf16.msra.mxu0 0
    %585 = vmatprep.subr.bf16.mxu0 0
    %586 = vmatpush2.bf16.msra.mxu0 0
    %587 = vmatprep.subr.bf16.mxu0 0
    %588 = vmatpush2.bf16.msra.mxu0 0
    %589 = vmatprep.mubr.bf16.mxu0 0
    %590 = vmatmul.mubr.bf16.gmra.mxu0 %v552
    %v591 = vpop.f32.mrf.mxu0
    %v592 = vadd.f32 0.0, %v591
    %v593 = vpop.f32.mrf.mxu0
    %v594 = vpop.f32.mrf.mxu0
    %v595 = vpop.f32.mrf.mxu0
    %596 = vdwg.mxu0
    %v597 = vld [vmem:[%s9] sm:$0xf]
    %v598 = vld [vmem:[%s9 + $0x4] sm:$0xf]
    %v599 = vpack.c.bf16 %v546, %v546
    %v600 = vpack.c.bf16 %v592, %v592
    %s601 = scalar_lea.vmem %s3, 16
    %v602 = vld [vmem:[%s601] sm:$0xf]
    %v603 = vld [vmem:[%s601 + $0x4] sm:$0xf]
    %v604 = vld [vmem:[%s601 + $0x8] sm:$0xf]
    %v605 = vld [vmem:[%s601 + $0xc] sm:$0xf]
    %s606 = scalar_lea.vmem %s5, 16
    %v607 = vld [vmem:[%s606] sm:$0xf]
    %v608 = vld [vmem:[%s606 + $0x4] sm:$0xf]
    %v609 = vld [vmem:[%s606 + $0x8] sm:$0xf]
    %v610 = vld [vmem:[%s606 + $0xc] sm:$0xf]
    %s611 = scalar_lea.vmem %s7, 16
    %v612 = vld [vmem:[%s611] sm:$0xf]
    %v613 = vld [vmem:[%s611 + $0x4] sm:$0xf]
    %v614 = vld [vmem:[%s611 + $0x8] sm:$0xf]
    %v615 = vld [vmem:[%s611 + $0xc] sm:$0xf]
    %s616 = scalar_lea.vmem %s4, 1
    %v617 = vld [vmem:[%s616] sm:$0x1]
    %v619 = vlaneseq
    %v620 = vshrl.u32 %v619, 7
    %v621 = vsub.s32 0, %v620
    %v622 = vrot.slane %v617, %v621
    %v628 = vunpack.c.l.b16 %v602
    %v629 = vunpack.c.l.b16 %v603
    %v630 = vunpack.c.l.b16 %v604
    %v631 = vunpack.c.l.b16 %v605
    %v632 = vpack.c.b16 %v629, %v628
    %v633 = vpack.c.b16 %v631, %v630
    %636 = vmatprep.subr.bf16.mxu0 0
    %637 = vmatpush1.bf16.msra.mxu0 0
    %638 = vmatprep.subr.bf16.mxu0 0
    %639 = vmatpush1.bf16.msra.mxu0 0
    %640 = vmatprep.subr.bf16.mxu0 0
    %641 = vmatpush1.bf16.msra.mxu0 0
    %642 = vmatprep.subr.bf16.mxu0 0
    %643 = vmatpush1.bf16.msra.mxu0 0
    %644 = vmatprep.subr.bf16.mxu0 0
    %645 = vmatpush1.bf16.msra.mxu0 0
    %646 = vmatprep.subr.bf16.mxu0 0
    %647 = vmatpush1.bf16.msra.mxu0 0
    %648 = vmatprep.subr.bf16.mxu0 0
    %649 = vmatpush1.bf16.msra.mxu0 %v633
    %650 = vmatprep.subr.bf16.mxu0 0
    %651 = vmatpush1.bf16.msra.mxu0 %v632
    %652 = vmatprep.subr.bf16.mxu0 0
    %653 = vmatpush2.bf16.msra.mxu0 0
    %654 = vmatprep.subr.bf16.mxu0 0
    %655 = vmatpush2.bf16.msra.mxu0 0
    %656 = vmatprep.subr.bf16.mxu0 0
    %657 = vmatpush2.bf16.msra.mxu0 0
    %658 = vmatprep.subr.bf16.mxu0 0
    %659 = vmatpush2.bf16.msra.mxu0 0
    %660 = vmatprep.subr.bf16.mxu0 0
    %661 = vmatpush2.bf16.msra.mxu0 0
    %662 = vmatprep.subr.bf16.mxu0 0
    %663 = vmatpush2.bf16.msra.mxu0 0
    %664 = vmatprep.subr.bf16.mxu0 0
    %665 = vmatpush2.bf16.msra.mxu0 0
    %666 = vmatprep.subr.bf16.mxu0 0
    %667 = vmatpush2.bf16.msra.mxu0 0
    %668 = vmatprep.mubr.bf16.mxu0 0
    %669 = vmatmul.mubr.bf16.gmra.mxu0 %v85
    %v670 = vpop.f32.mrf.mxu0
    %v671 = vadd.f32 %v622, %v670
    %v672 = vpop.f32.mrf.mxu0
    %v673 = vpop.f32.mrf.mxu0
    %v674 = vpop.f32.mrf.mxu0
    %675 = vdwg.mxu0
    %676 = vmatprep.subr.bf16.mxu0 0
    %677 = vmatpush1.bf16.msra.mxu0 0
    %678 = vmatprep.subr.bf16.mxu0 0
    %679 = vmatpush1.bf16.msra.mxu0 0
    %680 = vmatprep.subr.bf16.mxu0 0
    %681 = vmatpush1.bf16.msra.mxu0 0
    %682 = vmatprep.subr.bf16.mxu0 0
    %683 = vmatpush1.bf16.msra.mxu0 0
    %684 = vmatprep.subr.bf16.mxu0 0
    %685 = vmatpush1.bf16.msra.mxu0 0
    %686 = vmatprep.subr.bf16.mxu0 0
    %687 = vmatpush1.bf16.msra.mxu0 0
    %688 = vmatprep.subr.bf16.mxu0 0
    %689 = vmatpush1.bf16.msra.mxu0 %v633
    %690 = vmatprep.subr.bf16.mxu0 0
    %691 = vmatpush1.bf16.msra.mxu0 %v632
    %692 = vmatprep.subr.bf16.mxu0 0
    %693 = vmatpush2.bf16.msra.mxu0 0
    %694 = vmatprep.subr.bf16.mxu0 0
    %695 = vmatpush2.bf16.msra.mxu0 0
    %696 = vmatprep.subr.bf16.mxu0 0
    %697 = vmatpush2.bf16.msra.mxu0 0
    %698 = vmatprep.subr.bf16.mxu0 0
    %699 = vmatpush2.bf16.msra.mxu0 0
    %700 = vmatprep.subr.bf16.mxu0 0
    %701 = vmatpush2.bf16.msra.mxu0 0
    %702 = vmatprep.subr.bf16.mxu0 0
    %703 = vmatpush2.bf16.msra.mxu0 0
    %704 = vmatprep.subr.bf16.mxu0 0
    %705 = vmatpush2.bf16.msra.mxu0 0
    %706 = vmatprep.subr.bf16.mxu0 0
    %707 = vmatpush2.bf16.msra.mxu0 0
    %708 = vmatprep.mubr.bf16.mxu0 0
    %709 = vmatmul.mubr.bf16.gmra.mxu0 %v128
    %v710 = vpop.f32.mrf.mxu0
    %v711 = vadd.f32 %v622, %v710
    %v712 = vpop.f32.mrf.mxu0
    %v713 = vpop.f32.mrf.mxu0
    %v714 = vpop.f32.mrf.mxu0
    %715 = vdwg.mxu0
    %s716 = scalar_lea.vmem %s6, 1
    %v717 = vld [vmem:[%s716] sm:$0x1]
    %v719 = vlaneseq
    %v720 = vshrl.u32 %v719, 7
    %v721 = vsub.s32 0, %v720
    %v722 = vrot.slane %v717, %v721
    %v728 = vunpack.c.l.b16 %v607
    %v729 = vunpack.c.l.b16 %v608
    %v730 = vunpack.c.l.b16 %v609
    %v731 = vunpack.c.l.b16 %v610
    %v732 = vpack.c.b16 %v729, %v728
    %v733 = vpack.c.b16 %v731, %v730
    %736 = vmatprep.subr.bf16.mxu0 0
    %737 = vmatpush1.bf16.msra.mxu0 0
    %738 = vmatprep.subr.bf16.mxu0 0
    %739 = vmatpush1.bf16.msra.mxu0 0
    %740 = vmatprep.subr.bf16.mxu0 0
    %741 = vmatpush1.bf16.msra.mxu0 0
    %742 = vmatprep.subr.bf16.mxu0 0
    %743 = vmatpush1.bf16.msra.mxu0 0
    %744 = vmatprep.subr.bf16.mxu0 0
    %745 = vmatpush1.bf16.msra.mxu0 0
    %746 = vmatprep.subr.bf16.mxu0 0
    %747 = vmatpush1.bf16.msra.mxu0 0
    %748 = vmatprep.subr.bf16.mxu0 0
    %749 = vmatpush1.bf16.msra.mxu0 %v733
    %750 = vmatprep.subr.bf16.mxu0 0
    %751 = vmatpush1.bf16.msra.mxu0 %v732
    %752 = vmatprep.subr.bf16.mxu0 0
    %753 = vmatpush2.bf16.msra.mxu0 0
    %754 = vmatprep.subr.bf16.mxu0 0
    %755 = vmatpush2.bf16.msra.mxu0 0
    %756 = vmatprep.subr.bf16.mxu0 0
    %757 = vmatpush2.bf16.msra.mxu0 0
    %758 = vmatprep.subr.bf16.mxu0 0
    %759 = vmatpush2.bf16.msra.mxu0 0
    %760 = vmatprep.subr.bf16.mxu0 0
    %761 = vmatpush2.bf16.msra.mxu0 0
    %762 = vmatprep.subr.bf16.mxu0 0
    %763 = vmatpush2.bf16.msra.mxu0 0
    %764 = vmatprep.subr.bf16.mxu0 0
    %765 = vmatpush2.bf16.msra.mxu0 0
    %766 = vmatprep.subr.bf16.mxu0 0
    %767 = vmatpush2.bf16.msra.mxu0 0
    %768 = vmatprep.mubr.bf16.mxu0 0
    %769 = vmatmul.mubr.bf16.gmra.mxu0 %v190
    %v770 = vpop.f32.mrf.mxu0
    %v771 = vadd.f32 %v722, %v770
    %v772 = vpop.f32.mrf.mxu0
    %v773 = vpop.f32.mrf.mxu0
    %v774 = vpop.f32.mrf.mxu0
    %775 = vdwg.mxu0
    %776 = vmatprep.subr.bf16.mxu0 0
    %777 = vmatpush1.bf16.msra.mxu0 0
    %778 = vmatprep.subr.bf16.mxu0 0
    %779 = vmatpush1.bf16.msra.mxu0 0
    %780 = vmatprep.subr.bf16.mxu0 0
    %781 = vmatpush1.bf16.msra.mxu0 0
    %782 = vmatprep.subr.bf16.mxu0 0
    %783 = vmatpush1.bf16.msra.mxu0 0
    %784 = vmatprep.subr.bf16.mxu0 0
    %785 = vmatpush1.bf16.msra.mxu0 0
    %786 = vmatprep.subr.bf16.mxu0 0
    %787 = vmatpush1.bf16.msra.mxu0 0
    %788 = vmatprep.subr.bf16.mxu0 0
    %789 = vmatpush1.bf16.msra.mxu0 %v733
    %790 = vmatprep.subr.bf16.mxu0 0
    %791 = vmatpush1.bf16.msra.mxu0 %v732
    %792 = vmatprep.subr.bf16.mxu0 0
    %793 = vmatpush2.bf16.msra.mxu0 0
    %794 = vmatprep.subr.bf16.mxu0 0
    %795 = vmatpush2.bf16.msra.mxu0 0
    %796 = vmatprep.subr.bf16.mxu0 0
    %797 = vmatpush2.bf16.msra.mxu0 0
    %798 = vmatprep.subr.bf16.mxu0 0
    %799 = vmatpush2.bf16.msra.mxu0 0
    %800 = vmatprep.subr.bf16.mxu0 0
    %801 = vmatpush2.bf16.msra.mxu0 0
    %802 = vmatprep.subr.bf16.mxu0 0
    %803 = vmatpush2.bf16.msra.mxu0 0
    %804 = vmatprep.subr.bf16.mxu0 0
    %805 = vmatpush2.bf16.msra.mxu0 0
    %806 = vmatprep.subr.bf16.mxu0 0
    %807 = vmatpush2.bf16.msra.mxu0 0
    %808 = vmatprep.mubr.bf16.mxu0 0
    %809 = vmatmul.mubr.bf16.gmra.mxu0 %v233
    %v810 = vpop.f32.mrf.mxu0
    %v811 = vadd.f32 %v722, %v810
    %v812 = vpop.f32.mrf.mxu0
    %v813 = vpop.f32.mrf.mxu0
    %v814 = vpop.f32.mrf.mxu0
    %815 = vdwg.mxu0
    %s816 = scalar_lea.vmem %s8, 1
    %v817 = vld [vmem:[%s816] sm:$0x1]
    %v819 = vlaneseq
    %v820 = vshrl.u32 %v819, 7
    %v821 = vsub.s32 0, %v820
    %v822 = vrot.slane %v817, %v821
    %v828 = vunpack.c.l.b16 %v612
    %v829 = vunpack.c.l.b16 %v613
    %v830 = vunpack.c.l.b16 %v614
    %v831 = vunpack.c.l.b16 %v615
    %v832 = vpack.c.b16 %v829, %v828
    %v833 = vpack.c.b16 %v831, %v830
    %836 = vmatprep.subr.bf16.mxu0 0
    %837 = vmatpush1.bf16.msra.mxu0 0
    %838 = vmatprep.subr.bf16.mxu0 0
    %839 = vmatpush1.bf16.msra.mxu0 0
    %840 = vmatprep.subr.bf16.mxu0 0
    %841 = vmatpush1.bf16.msra.mxu0 0
    %842 = vmatprep.subr.bf16.mxu0 0
    %843 = vmatpush1.bf16.msra.mxu0 0
    %844 = vmatprep.subr.bf16.mxu0 0
    %845 = vmatpush1.bf16.msra.mxu0 0
    %846 = vmatprep.subr.bf16.mxu0 0
    %847 = vmatpush1.bf16.msra.mxu0 0
    %848 = vmatprep.subr.bf16.mxu0 0
    %849 = vmatpush1.bf16.msra.mxu0 %v833
    %850 = vmatprep.subr.bf16.mxu0 0
    %851 = vmatpush1.bf16.msra.mxu0 %v832
    %852 = vmatprep.subr.bf16.mxu0 0
    %853 = vmatpush2.bf16.msra.mxu0 0
    %854 = vmatprep.subr.bf16.mxu0 0
    %855 = vmatpush2.bf16.msra.mxu0 0
    %856 = vmatprep.subr.bf16.mxu0 0
    %857 = vmatpush2.bf16.msra.mxu0 0
    %858 = vmatprep.subr.bf16.mxu0 0
    %859 = vmatpush2.bf16.msra.mxu0 0
    %860 = vmatprep.subr.bf16.mxu0 0
    %861 = vmatpush2.bf16.msra.mxu0 0
    %862 = vmatprep.subr.bf16.mxu0 0
    %863 = vmatpush2.bf16.msra.mxu0 0
    %864 = vmatprep.subr.bf16.mxu0 0
    %865 = vmatpush2.bf16.msra.mxu0 0
    %866 = vmatprep.subr.bf16.mxu0 0
    %867 = vmatpush2.bf16.msra.mxu0 0
    %868 = vmatprep.mubr.bf16.mxu0 0
    %869 = vmatmul.mubr.bf16.gmra.mxu0 %v295
    %v870 = vpop.f32.mrf.mxu0
    %v871 = vadd.f32 %v822, %v870
    %v872 = vpop.f32.mrf.mxu0
    %v873 = vpop.f32.mrf.mxu0
    %v874 = vpop.f32.mrf.mxu0
    %875 = vdwg.mxu0
    %876 = vmatprep.subr.bf16.mxu0 0
    %877 = vmatpush1.bf16.msra.mxu0 0
    %878 = vmatprep.subr.bf16.mxu0 0
    %879 = vmatpush1.bf16.msra.mxu0 0
    %880 = vmatprep.subr.bf16.mxu0 0
    %881 = vmatpush1.bf16.msra.mxu0 0
    %882 = vmatprep.subr.bf16.mxu0 0
    %883 = vmatpush1.bf16.msra.mxu0 0
    %884 = vmatprep.subr.bf16.mxu0 0
    %885 = vmatpush1.bf16.msra.mxu0 0
    %886 = vmatprep.subr.bf16.mxu0 0
    %887 = vmatpush1.bf16.msra.mxu0 0
    %888 = vmatprep.subr.bf16.mxu0 0
    %889 = vmatpush1.bf16.msra.mxu0 %v833
    %890 = vmatprep.subr.bf16.mxu0 0
    %891 = vmatpush1.bf16.msra.mxu0 %v832
    %892 = vmatprep.subr.bf16.mxu0 0
    %893 = vmatpush2.bf16.msra.mxu0 0
    %894 = vmatprep.subr.bf16.mxu0 0
    %895 = vmatpush2.bf16.msra.mxu0 0
    %896 = vmatprep.subr.bf16.mxu0 0
    %897 = vmatpush2.bf16.msra.mxu0 0
    %898 = vmatprep.subr.bf16.mxu0 0
    %899 = vmatpush2.bf16.msra.mxu0 0
    %900 = vmatprep.subr.bf16.mxu0 0
    %901 = vmatpush2.bf16.msra.mxu0 0
    %902 = vmatprep.subr.bf16.mxu0 0
    %903 = vmatpush2.bf16.msra.mxu0 0
    %904 = vmatprep.subr.bf16.mxu0 0
    %905 = vmatpush2.bf16.msra.mxu0 0
    %906 = vmatprep.subr.bf16.mxu0 0
    %907 = vmatpush2.bf16.msra.mxu0 0
    %908 = vmatprep.mubr.bf16.mxu0 0
    %909 = vmatmul.mubr.bf16.gmra.mxu0 %v338
    %v910 = vpop.f32.mrf.mxu0
    %v911 = vadd.f32 %v822, %v910
    %v912 = vpop.f32.mrf.mxu0
    %v913 = vpop.f32.mrf.mxu0
    %v914 = vpop.f32.mrf.mxu0
    %915 = vdwg.mxu0
    %v916 = vpack.c.bf16 %v671, %v671
    %v917 = vpack.c.bf16 %v711, %v711
    %v918 = vpack.c.bf16 %v771, %v771
    %v919 = vpack.c.bf16 %v811, %v811
    %v921 = vsel %vm384, %v916, 0
    %v924 = vsel %vm384, %v918, 0
    %926 = vmatprep.subr.bf16.mxu0 0
    %927 = vmatpush1.bf16.xpose.msra.mxu0 0
    %928 = vmatprep.subr.bf16.mxu0 0
    %929 = vmatpush1.bf16.xpose.msra.mxu0 0
    %930 = vmatprep.subr.bf16.mxu0 0
    %931 = vmatpush1.bf16.xpose.msra.mxu0 0
    %932 = vmatprep.subr.bf16.mxu0 0
    %933 = vmatpush1.bf16.xpose.msra.mxu0 0
    %934 = vmatprep.subr.bf16.mxu0 0
    %935 = vmatpush1.bf16.xpose.msra.mxu0 0
    %936 = vmatprep.subr.bf16.mxu0 0
    %937 = vmatpush1.bf16.xpose.msra.mxu0 0
    %938 = vmatprep.subr.bf16.mxu0 0
    %939 = vmatpush1.bf16.xpose.msra.mxu0 0
    %940 = vmatprep.subr.bf16.mxu0 0
    %941 = vmatpush1.bf16.xpose.msra.mxu0 %v924
    %942 = vmatprep.subr.bf16.mxu0 0
    %943 = vmatpush2.bf16.xpose.msra.mxu0 0
    %944 = vmatprep.subr.bf16.mxu0 0
    %945 = vmatpush2.bf16.xpose.msra.mxu0 0
    %946 = vmatprep.subr.bf16.mxu0 0
    %947 = vmatpush2.bf16.xpose.msra.mxu0 0
    %948 = vmatprep.subr.bf16.mxu0 0
    %949 = vmatpush2.bf16.xpose.msra.mxu0 0
    %950 = vmatprep.subr.bf16.mxu0 0
    %951 = vmatpush2.bf16.xpose.msra.mxu0 0
    %952 = vmatprep.subr.bf16.mxu0 0
    %953 = vmatpush2.bf16.xpose.msra.mxu0 0
    %954 = vmatprep.subr.bf16.mxu0 0
    %955 = vmatpush2.bf16.xpose.msra.mxu0 0
    %956 = vmatprep.subr.bf16.mxu0 0
    %957 = vmatpush2.bf16.xpose.msra.mxu0 0
    %958 = vmatprep.mubr.bf16.mxu0 0
    %959 = vmatmul.mubr.bf16.gmra.mxu0 %v921
    %v960 = vpop.f32.mrf.mxu0
    %v961 = vadd.f32 0.0, %v960
    %v962 = vpop.f32.mrf.mxu0
    %v963 = vpop.f32.mrf.mxu0
    %v964 = vpop.f32.mrf.mxu0
    %965 = vdwg.mxu0
    %v967 = vsel %vm384, %v917, 0
    %v970 = vsel %vm384, %v919, 0
    %972 = vmatprep.subr.bf16.mxu0 0
    %973 = vmatpush1.bf16.xpose.msra.mxu0 0
    %974 = vmatprep.subr.bf16.mxu0 0
    %975 = vmatpush1.bf16.xpose.msra.mxu0 0
    %976 = vmatprep.subr.bf16.mxu0 0
    %977 = vmatpush1.bf16.xpose.msra.mxu0 0
    %978 = vmatprep.subr.bf16.mxu0 0
    %979 = vmatpush1.bf16.xpose.msra.mxu0 0
    %980 = vmatprep.subr.bf16.mxu0 0
    %981 = vmatpush1.bf16.xpose.msra.mxu0 0
    %982 = vmatprep.subr.bf16.mxu0 0
    %983 = vmatpush1.bf16.xpose.msra.mxu0 0
    %984 = vmatprep.subr.bf16.mxu0 0
    %985 = vmatpush1.bf16.xpose.msra.mxu0 0
    %986 = vmatprep.subr.bf16.mxu0 0
    %987 = vmatpush1.bf16.xpose.msra.mxu0 %v970
    %988 = vmatprep.subr.bf16.mxu0 0
    %989 = vmatpush2.bf16.xpose.msra.mxu0 0
    %990 = vmatprep.subr.bf16.mxu0 0
    %991 = vmatpush2.bf16.xpose.msra.mxu0 0
    %992 = vmatprep.subr.bf16.mxu0 0
    %993 = vmatpush2.bf16.xpose.msra.mxu0 0
    %994 = vmatprep.subr.bf16.mxu0 0
    %995 = vmatpush2.bf16.xpose.msra.mxu0 0
    %996 = vmatprep.subr.bf16.mxu0 0
    %997 = vmatpush2.bf16.xpose.msra.mxu0 0
    %998 = vmatprep.subr.bf16.mxu0 0
    %999 = vmatpush2.bf16.xpose.msra.mxu0 0
    %1000 = vmatprep.subr.bf16.mxu0 0
    %1001 = vmatpush2.bf16.xpose.msra.mxu0 0
    %1002 = vmatprep.subr.bf16.mxu0 0
    %1003 = vmatpush2.bf16.xpose.msra.mxu0 0
    %1004 = vmatprep.mubr.bf16.mxu0 0
    %1005 = vmatmul.mubr.bf16.gmra.mxu0 %v967
    %v1006 = vpop.f32.mrf.mxu0
    %v1007 = vadd.f32 0.0, %v1006
    %v1008 = vpop.f32.mrf.mxu0
    %v1009 = vpop.f32.mrf.mxu0
    %v1010 = vpop.f32.mrf.mxu0
    %1011 = vdwg.mxu0
    %v1012 = vsel %vm477, %v961, -inf
    %1013 = vmax.xlane.f32.xlu0 %v1012
    %v1014 = vpop.xlane.xlu0 %1013
    %v1015 = vsel %vm477, %v1007, -inf
    %1016 = vmax.xlane.f32.xlu0 %v1015
    %v1017 = vpop.xlane.xlu0 %1016
    %v1018 = vsub.f32 %v961, %v1014
    %v1019 = vsub.f32 %v1007, %v1017
    %v1020 = vmul.f32 %v1018, 1.442695
    %v1021 = vpow.pop %v1020
    %v1022 = vmul.f32 %v1019, 1.442695
    %v1023 = vpow.pop %v1022
    %v1024 = vsel %vm477, %v1021, 0.0
    %1025 = vadd.xlane.f32.xlu0 %v1024
    %v1026 = vpop.xlane.xlu0 %1025
    %v1027 = vsel %vm477, %v1023, 0.0
    %1028 = vadd.xlane.f32.xlu0 %v1027
    %v1029 = vpop.xlane.xlu0 %1028
    %v1030 = vrcp.pop %v1026
    %v1031 = vrcp.pop %v1029
    %v1032 = vmul.f32 %v1021, %v1030
    %v1033 = vmul.f32 %v1023, %v1031
    %v1034 = vpack.c.bf16 %v1032, %v1032
    %v1035 = vpack.c.bf16 %v1033, %v1033
    %v1036 = vpack.c.bf16 %v871, %v871
    %v1037 = vpack.c.bf16 %v911, %v911
    %v1039 = vsel %vm477, %v1034, 0
    %v1042 = vsel %vm507, %v1036, 0
    %1044 = vmatprep.subr.bf16.mxu0 0
    %1045 = vmatpush1.bf16.msra.mxu0 0
    %1046 = vmatprep.subr.bf16.mxu0 0
    %1047 = vmatpush1.bf16.msra.mxu0 0
    %1048 = vmatprep.subr.bf16.mxu0 0
    %1049 = vmatpush1.bf16.msra.mxu0 0
    %1050 = vmatprep.subr.bf16.mxu0 0
    %1051 = vmatpush1.bf16.msra.mxu0 0
    %1052 = vmatprep.subr.bf16.mxu0 0
    %1053 = vmatpush1.bf16.msra.mxu0 0
    %1054 = vmatprep.subr.bf16.mxu0 0
    %1055 = vmatpush1.bf16.msra.mxu0 0
    %1056 = vmatprep.subr.bf16.mxu0 0
    %1057 = vmatpush1.bf16.msra.mxu0 0
    %1058 = vmatprep.subr.bf16.mxu0 0
    %1059 = vmatpush1.bf16.msra.mxu0 %v1042
    %1060 = vmatprep.subr.bf16.mxu0 0
    %1061 = vmatpush2.bf16.msra.mxu0 0
    %1062 = vmatprep.subr.bf16.mxu0 0
    %1063 = vmatpush2.bf16.msra.mxu0 0
    %1064 = vmatprep.subr.bf16.mxu0 0
    %1065 = vmatpush2.bf16.msra.mxu0 0
    %1066 = vmatprep.subr.bf16.mxu0 0
    %1067 = vmatpush2.bf16.msra.mxu0 0
    %1068 = vmatprep.subr.bf16.mxu0 0
    %1069 = vmatpush2.bf16.msra.mxu0 0
    %1070 = vmatprep.subr.bf16.mxu0 0
    %1071 = vmatpush2.bf16.msra.mxu0 0
    %1072 = vmatprep.subr.bf16.mxu0 0
    %1073 = vmatpush2.bf16.msra.mxu0 0
    %1074 = vmatprep.subr.bf16.mxu0 0
    %1075 = vmatpush2.bf16.msra.mxu0 0
    %1076 = vmatprep.mubr.bf16.mxu0 0
    %1077 = vmatmul.mubr.bf16.gmra.mxu0 %v1039
    %v1078 = vpop.f32.mrf.mxu0
    %v1079 = vadd.f32 0.0, %v1078
    %v1080 = vpop.f32.mrf.mxu0
    %v1081 = vpop.f32.mrf.mxu0
    %v1082 = vpop.f32.mrf.mxu0
    %1083 = vdwg.mxu0
    %v1085 = vsel %vm477, %v1035, 0
    %v1088 = vsel %vm507, %v1037, 0
    %1090 = vmatprep.subr.bf16.mxu0 0
    %1091 = vmatpush1.bf16.msra.mxu0 0
    %1092 = vmatprep.subr.bf16.mxu0 0
    %1093 = vmatpush1.bf16.msra.mxu0 0
    %1094 = vmatprep.subr.bf16.mxu0 0
    %1095 = vmatpush1.bf16.msra.mxu0 0
    %1096 = vmatprep.subr.bf16.mxu0 0
    %1097 = vmatpush1.bf16.msra.mxu0 0
    %1098 = vmatprep.subr.bf16.mxu0 0
    %1099 = vmatpush1.bf16.msra.mxu0 0
    %1100 = vmatprep.subr.bf16.mxu0 0
    %1101 = vmatpush1.bf16.msra.mxu0 0
    %1102 = vmatprep.subr.bf16.mxu0 0
    %1103 = vmatpush1.bf16.msra.mxu0 0
    %1104 = vmatprep.subr.bf16.mxu0 0
    %1105 = vmatpush1.bf16.msra.mxu0 %v1088
    %1106 = vmatprep.subr.bf16.mxu0 0
    %1107 = vmatpush2.bf16.msra.mxu0 0
    %1108 = vmatprep.subr.bf16.mxu0 0
    %1109 = vmatpush2.bf16.msra.mxu0 0
    %1110 = vmatprep.subr.bf16.mxu0 0
    %1111 = vmatpush2.bf16.msra.mxu0 0
    %1112 = vmatprep.subr.bf16.mxu0 0
    %1113 = vmatpush2.bf16.msra.mxu0 0
    %1114 = vmatprep.subr.bf16.mxu0 0
    %1115 = vmatpush2.bf16.msra.mxu0 0
    %1116 = vmatprep.subr.bf16.mxu0 0
    %1117 = vmatpush2.bf16.msra.mxu0 0
    %1118 = vmatprep.subr.bf16.mxu0 0
    %1119 = vmatpush2.bf16.msra.mxu0 0
    %1120 = vmatprep.subr.bf16.mxu0 0
    %1121 = vmatpush2.bf16.msra.mxu0 0
    %1122 = vmatprep.mubr.bf16.mxu0 0
    %1123 = vmatmul.mubr.bf16.gmra.mxu0 %v1085
    %v1124 = vpop.f32.mrf.mxu0
    %v1125 = vadd.f32 0.0, %v1124
    %v1126 = vpop.f32.mrf.mxu0
    %v1127 = vpop.f32.mrf.mxu0
    %v1128 = vpop.f32.mrf.mxu0
    %1129 = vdwg.mxu0
    %s1130 = scalar_lea.vmem %s9, 8
    %v1131 = vld [vmem:[%s1130] sm:$0xf]
    %v1132 = vld [vmem:[%s1130 + $0x4] sm:$0xf]
    %v1133 = vpack.c.bf16 %v1079, %v1079
    %v1134 = vpack.c.bf16 %v1125, %v1125
    %v1137 = vunpack.c.l.b16 %v1131
    %v1138 = vunpack.c.l.b16 %v1132
    %v1139 = vpack.c.b16 %v1138, %v1137
    %v1142 = vsel %vm384, %v1133, 0
    %1144 = vmatprep.subr.bf16.mxu0 0
    %1145 = vmatpush1.bf16.msra.mxu0 0
    %1146 = vmatprep.subr.bf16.mxu0 0
    %1147 = vmatpush1.bf16.msra.mxu0 0
    %1148 = vmatprep.subr.bf16.mxu0 0
    %1149 = vmatpush1.bf16.msra.mxu0 0
    %1150 = vmatprep.subr.bf16.mxu0 0
    %1151 = vmatpush1.bf16.msra.mxu0 0
    %1152 = vmatprep.subr.bf16.mxu0 0
    %1153 = vmatpush1.bf16.msra.mxu0 0
    %1154 = vmatprep.subr.bf16.mxu0 0
    %1155 = vmatpush1.bf16.msra.mxu0 0
    %1156 = vmatprep.subr.bf16.mxu0 0
    %1157 = vmatpush1.bf16.msra.mxu0 0
    %1158 = vmatprep.subr.bf16.mxu0 0
    %1159 = vmatpush1.bf16.msra.mxu0 %v1139
    %1160 = vmatprep.subr.bf16.mxu0 0
    %1161 = vmatpush2.bf16.msra.mxu0 0
    %1162 = vmatprep.subr.bf16.mxu0 0
    %1163 = vmatpush2.bf16.msra.mxu0 0
    %1164 = vmatprep.subr.bf16.mxu0 0
    %1165 = vmatpush2.bf16.msra.mxu0 0
    %1166 = vmatprep.subr.bf16.mxu0 0
    %1167 = vmatpush2.bf16.msra.mxu0 0
    %1168 = vmatprep.subr.bf16.mxu0 0
    %1169 = vmatpush2.bf16.msra.mxu0 0
    %1170 = vmatprep.subr.bf16.mxu0 0
    %1171 = vmatpush2.bf16.msra.mxu0 0
    %1172 = vmatprep.subr.bf16.mxu0 0
    %1173 = vmatpush2.bf16.msra.mxu0 0
    %1174 = vmatprep.subr.bf16.mxu0 0
    %1175 = vmatpush2.bf16.msra.mxu0 0
    %1176 = vmatprep.mubr.bf16.mxu0 0
    %1177 = vmatmul.mubr.bf16.gmra.mxu0 %v1142
    %v1178 = vpop.f32.mrf.mxu0
    %v1179 = vadd.f32 0.0, %v1178
    %v1180 = vpop.f32.mrf.mxu0
    %v1181 = vpop.f32.mrf.mxu0
    %v1182 = vpop.f32.mrf.mxu0
    %1183 = vdwg.mxu0
    %v1185 = vsel %vm384, %v1134, 0
    %1187 = vmatprep.subr.bf16.mxu0 0
    %1188 = vmatpush1.bf16.msra.mxu0 0
    %1189 = vmatprep.subr.bf16.mxu0 0
    %1190 = vmatpush1.bf16.msra.mxu0 0
    %1191 = vmatprep.subr.bf16.mxu0 0
    %1192 = vmatpush1.bf16.msra.mxu0 0
    %1193 = vmatprep.subr.bf16.mxu0 0
    %1194 = vmatpush1.bf16.msra.mxu0 0
    %1195 = vmatprep.subr.bf16.mxu0 0
    %1196 = vmatpush1.bf16.msra.mxu0 0
    %1197 = vmatprep.subr.bf16.mxu0 0
    %1198 = vmatpush1.bf16.msra.mxu0 0
    %1199 = vmatprep.subr.bf16.mxu0 0
    %1200 = vmatpush1.bf16.msra.mxu0 0
    %1201 = vmatprep.subr.bf16.mxu0 0
    %1202 = vmatpush1.bf16.msra.mxu0 %v1139
    %1203 = vmatprep.subr.bf16.mxu0 0
    %1204 = vmatpush2.bf16.msra.mxu0 0
    %1205 = vmatprep.subr.bf16.mxu0 0
    %1206 = vmatpush2.bf16.msra.mxu0 0
    %1207 = vmatprep.subr.bf16.mxu0 0
    %1208 = vmatpush2.bf16.msra.mxu0 0
    %1209 = vmatprep.subr.bf16.mxu0 0
    %1210 = vmatpush2.bf16.msra.mxu0 0
    %1211 = vmatprep.subr.bf16.mxu0 0
    %1212 = vmatpush2.bf16.msra.mxu0 0
    %1213 = vmatprep.subr.bf16.mxu0 0
    %1214 = vmatpush2.bf16.msra.mxu0 0
    %1215 = vmatprep.subr.bf16.mxu0 0
    %1216 = vmatpush2.bf16.msra.mxu0 0
    %1217 = vmatprep.subr.bf16.mxu0 0
    %1218 = vmatpush2.bf16.msra.mxu0 0
    %1219 = vmatprep.mubr.bf16.mxu0 0
    %1220 = vmatmul.mubr.bf16.gmra.mxu0 %v1185
    %v1221 = vpop.f32.mrf.mxu0
    %v1222 = vadd.f32 0.0, %v1221
    %v1223 = vpop.f32.mrf.mxu0
    %v1224 = vpop.f32.mrf.mxu0
    %v1225 = vpop.f32.mrf.mxu0
    %1226 = vdwg.mxu0
    %v1229 = vunpack.c.l.b16 %v597
    %v1230 = vunpack.c.l.b16 %v598
    %v1231 = vpack.c.b16 %v1230, %v1229
    %v1234 = vsel %vm384, %v599, 0
    %1236 = vmatprep.subr.bf16.mxu0 0
    %1237 = vmatpush1.bf16.msra.mxu0 0
    %1238 = vmatprep.subr.bf16.mxu0 0
    %1239 = vmatpush1.bf16.msra.mxu0 0
    %1240 = vmatprep.subr.bf16.mxu0 0
    %1241 = vmatpush1.bf16.msra.mxu0 0
    %1242 = vmatprep.subr.bf16.mxu0 0
    %1243 = vmatpush1.bf16.msra.mxu0 0
    %1244 = vmatprep.subr.bf16.mxu0 0
    %1245 = vmatpush1.bf16.msra.mxu0 0
    %1246 = vmatprep.subr.bf16.mxu0 0
    %1247 = vmatpush1.bf16.msra.mxu0 0
    %1248 = vmatprep.subr.bf16.mxu0 0
    %1249 = vmatpush1.bf16.msra.mxu0 0
    %1250 = vmatprep.subr.bf16.mxu0 0
    %1251 = vmatpush1.bf16.msra.mxu0 %v1231
    %1252 = vmatprep.subr.bf16.mxu0 0
    %1253 = vmatpush2.bf16.msra.mxu0 0
    %1254 = vmatprep.subr.bf16.mxu0 0
    %1255 = vmatpush2.bf16.msra.mxu0 0
    %1256 = vmatprep.subr.bf16.mxu0 0
    %1257 = vmatpush2.bf16.msra.mxu0 0
    %1258 = vmatprep.subr.bf16.mxu0 0
    %1259 = vmatpush2.bf16.msra.mxu0 0
    %1260 = vmatprep.subr.bf16.mxu0 0
    %1261 = vmatpush2.bf16.msra.mxu0 0
    %1262 = vmatprep.subr.bf16.mxu0 0
    %1263 = vmatpush2.bf16.msra.mxu0 0
    %1264 = vmatprep.subr.bf16.mxu0 0
    %1265 = vmatpush2.bf16.msra.mxu0 0
    %1266 = vmatprep.subr.bf16.mxu0 0
    %1267 = vmatpush2.bf16.msra.mxu0 0
    %1268 = vmatprep.mubr.bf16.mxu0 0
    %1269 = vmatmul.mubr.bf16.gmra.mxu0 %v1234
    %v1270 = vpop.f32.mrf.mxu0
    %v1271 = vadd.f32 %v1179, %v1270
    %v1272 = vpop.f32.mrf.mxu0
    %v1273 = vpop.f32.mrf.mxu0
    %v1274 = vpop.f32.mrf.mxu0
    %1275 = vdwg.mxu0
    %v1277 = vsel %vm384, %v600, 0
    %1279 = vmatprep.subr.bf16.mxu0 0
    %1280 = vmatpush1.bf16.msra.mxu0 0
    %1281 = vmatprep.subr.bf16.mxu0 0
    %1282 = vmatpush1.bf16.msra.mxu0 0
    %1283 = vmatprep.subr.bf16.mxu0 0
    %1284 = vmatpush1.bf16.msra.mxu0 0
    %1285 = vmatprep.subr.bf16.mxu0 0
    %1286 = vmatpush1.bf16.msra.mxu0 0
    %1287 = vmatprep.subr.bf16.mxu0 0
    %1288 = vmatpush1.bf16.msra.mxu0 0
    %1289 = vmatprep.subr.bf16.mxu0 0
    %1290 = vmatpush1.bf16.msra.mxu0 0
    %1291 = vmatprep.subr.bf16.mxu0 0
    %1292 = vmatpush1.bf16.msra.mxu0 0
    %1293 = vmatprep.subr.bf16.mxu0 0
    %1294 = vmatpush1.bf16.msra.mxu0 %v1231
    %1295 = vmatprep.subr.bf16.mxu0 0
    %1296 = vmatpush2.bf16.msra.mxu0 0
    %1297 = vmatprep.subr.bf16.mxu0 0
    %1298 = vmatpush2.bf16.msra.mxu0 0
    %1299 = vmatprep.subr.bf16.mxu0 0
    %1300 = vmatpush2.bf16.msra.mxu0 0
    %1301 = vmatprep.subr.bf16.mxu0 0
    %1302 = vmatpush2.bf16.msra.mxu0 0
    %1303 = vmatprep.subr.bf16.mxu0 0
    %1304 = vmatpush2.bf16.msra.mxu0 0
    %1305 = vmatprep.subr.bf16.mxu0 0
    %1306 = vmatpush2.bf16.msra.mxu0 0
    %1307 = vmatprep.subr.bf16.mxu0 0
    %1308 = vmatpush2.bf16.msra.mxu0 0
    %1309 = vmatprep.subr.bf16.mxu0 0
    %1310 = vmatpush2.bf16.msra.mxu0 0
    %1311 = vmatprep.mubr.bf16.mxu0 0
    %1312 = vmatmul.mubr.bf16.gmra.mxu0 %v1277
    %v1313 = vpop.f32.mrf.mxu0
    %v1314 = vadd.f32 %v1222, %v1313
    %v1315 = vpop.f32.mrf.mxu0
    %v1316 = vpop.f32.mrf.mxu0
    %v1317 = vpop.f32.mrf.mxu0
    %1318 = vdwg.mxu0
    %s1319 = scalar_lea.vmem %s3, 32
    %v1320 = vld [vmem:[%s1319] sm:$0xf]
    %v1321 = vld [vmem:[%s1319 + $0x4] sm:$0xf]
    %v1322 = vld [vmem:[%s1319 + $0x8] sm:$0xf]
    %v1323 = vld [vmem:[%s1319 + $0xc] sm:$0xf]
    %s1324 = scalar_lea.vmem %s5, 32
    %v1325 = vld [vmem:[%s1324] sm:$0xf]
    %v1326 = vld [vmem:[%s1324 + $0x4] sm:$0xf]
    %v1327 = vld [vmem:[%s1324 + $0x8] sm:$0xf]
    %v1328 = vld [vmem:[%s1324 + $0xc] sm:$0xf]
    %s1329 = scalar_lea.vmem %s7, 32
    %v1330 = vld [vmem:[%s1329] sm:$0xf]
    %v1331 = vld [vmem:[%s1329 + $0x4] sm:$0xf]
    %v1332 = vld [vmem:[%s1329 + $0x8] sm:$0xf]
    %v1333 = vld [vmem:[%s1329 + $0xc] sm:$0xf]
    %s1334 = scalar_lea.vmem %s4, 2
    %v1335 = vld [vmem:[%s1334] sm:$0x1]
    %v1337 = vlaneseq
    %v1338 = vshrl.u32 %v1337, 7
    %v1339 = vsub.s32 0, %v1338
    %v1340 = vrot.slane %v1335, %v1339
    %v1346 = vunpack.c.l.b16 %v1320
    %v1347 = vunpack.c.l.b16 %v1321
    %v1348 = vunpack.c.l.b16 %v1322
    %v1349 = vunpack.c.l.b16 %v1323
    %v1350 = vpack.c.b16 %v1347, %v1346
    %v1351 = vpack.c.b16 %v1349, %v1348
    %1354 = vmatprep.subr.bf16.mxu0 0
    %1355 = vmatpush1.bf16.msra.mxu0 0
    %1356 = vmatprep.subr.bf16.mxu0 0
    %1357 = vmatpush1.bf16.msra.mxu0 0
    %1358 = vmatprep.subr.bf16.mxu0 0
    %1359 = vmatpush1.bf16.msra.mxu0 0
    %1360 = vmatprep.subr.bf16.mxu0 0
    %1361 = vmatpush1.bf16.msra.mxu0 0
    %1362 = vmatprep.subr.bf16.mxu0 0
    %1363 = vmatpush1.bf16.msra.mxu0 0
    %1364 = vmatprep.subr.bf16.mxu0 0
    %1365 = vmatpush1.bf16.msra.mxu0 0
    %1366 = vmatprep.subr.bf16.mxu0 0
    %1367 = vmatpush1.bf16.msra.mxu0 %v1351
    %1368 = vmatprep.subr.bf16.mxu0 0
    %1369 = vmatpush1.bf16.msra.mxu0 %v1350
    %1370 = vmatprep.subr.bf16.mxu0 0
    %1371 = vmatpush2.bf16.msra.mxu0 0
    %1372 = vmatprep.subr.bf16.mxu0 0
    %1373 = vmatpush2.bf16.msra.mxu0 0
    %1374 = vmatprep.subr.bf16.mxu0 0
    %1375 = vmatpush2.bf16.msra.mxu0 0
    %1376 = vmatprep.subr.bf16.mxu0 0
    %1377 = vmatpush2.bf16.msra.mxu0 0
    %1378 = vmatprep.subr.bf16.mxu0 0
    %1379 = vmatpush2.bf16.msra.mxu0 0
    %1380 = vmatprep.subr.bf16.mxu0 0
    %1381 = vmatpush2.bf16.msra.mxu0 0
    %1382 = vmatprep.subr.bf16.mxu0 0
    %1383 = vmatpush2.bf16.msra.mxu0 0
    %1384 = vmatprep.subr.bf16.mxu0 0
    %1385 = vmatpush2.bf16.msra.mxu0 0
    %1386 = vmatprep.mubr.bf16.mxu0 0
    %1387 = vmatmul.mubr.bf16.gmra.mxu0 %v85
    %v1388 = vpop.f32.mrf.mxu0
    %v1389 = vadd.f32 %v1340, %v1388
    %v1390 = vpop.f32.mrf.mxu0
    %v1391 = vpop.f32.mrf.mxu0
    %v1392 = vpop.f32.mrf.mxu0
    %1393 = vdwg.mxu0
    %1394 = vmatprep.subr.bf16.mxu0 0
    %1395 = vmatpush1.bf16.msra.mxu0 0
    %1396 = vmatprep.subr.bf16.mxu0 0
    %1397 = vmatpush1.bf16.msra.mxu0 0
    %1398 = vmatprep.subr.bf16.mxu0 0
    %1399 = vmatpush1.bf16.msra.mxu0 0
    %1400 = vmatprep.subr.bf16.mxu0 0
    %1401 = vmatpush1.bf16.msra.mxu0 0
    %1402 = vmatprep.subr.bf16.mxu0 0
    %1403 = vmatpush1.bf16.msra.mxu0 0
    %1404 = vmatprep.subr.bf16.mxu0 0
    %1405 = vmatpush1.bf16.msra.mxu0 0
    %1406 = vmatprep.subr.bf16.mxu0 0
    %1407 = vmatpush1.bf16.msra.mxu0 %v1351
    %1408 = vmatprep.subr.bf16.mxu0 0
    %1409 = vmatpush1.bf16.msra.mxu0 %v1350
    %1410 = vmatprep.subr.bf16.mxu0 0
    %1411 = vmatpush2.bf16.msra.mxu0 0
    %1412 = vmatprep.subr.bf16.mxu0 0
    %1413 = vmatpush2.bf16.msra.mxu0 0
    %1414 = vmatprep.subr.bf16.mxu0 0
    %1415 = vmatpush2.bf16.msra.mxu0 0
    %1416 = vmatprep.subr.bf16.mxu0 0
    %1417 = vmatpush2.bf16.msra.mxu0 0
    %1418 = vmatprep.subr.bf16.mxu0 0
    %1419 = vmatpush2.bf16.msra.mxu0 0
    %1420 = vmatprep.subr.bf16.mxu0 0
    %1421 = vmatpush2.bf16.msra.mxu0 0
    %1422 = vmatprep.subr.bf16.mxu0 0
    %1423 = vmatpush2.bf16.msra.mxu0 0
    %1424 = vmatprep.subr.bf16.mxu0 0
    %1425 = vmatpush2.bf16.msra.mxu0 0
    %1426 = vmatprep.mubr.bf16.mxu0 0
    %1427 = vmatmul.mubr.bf16.gmra.mxu0 %v128
    %v1428 = vpop.f32.mrf.mxu0
    %v1429 = vadd.f32 %v1340, %v1428
    %v1430 = vpop.f32.mrf.mxu0
    %v1431 = vpop.f32.mrf.mxu0
    %v1432 = vpop.f32.mrf.mxu0
    %1433 = vdwg.mxu0
    %s1434 = scalar_lea.vmem %s6, 2
    %v1435 = vld [vmem:[%s1434] sm:$0x1]
    %v1437 = vlaneseq
    %v1438 = vshrl.u32 %v1437, 7
    %v1439 = vsub.s32 0, %v1438
    %v1440 = vrot.slane %v1435, %v1439
    %v1446 = vunpack.c.l.b16 %v1325
    %v1447 = vunpack.c.l.b16 %v1326
    %v1448 = vunpack.c.l.b16 %v1327
    %v1449 = vunpack.c.l.b16 %v1328
    %v1450 = vpack.c.b16 %v1447, %v1446
    %v1451 = vpack.c.b16 %v1449, %v1448
    %1454 = vmatprep.subr.bf16.mxu0 0
    %1455 = vmatpush1.bf16.msra.mxu0 0
    %1456 = vmatprep.subr.bf16.mxu0 0
    %1457 = vmatpush1.bf16.msra.mxu0 0
    %1458 = vmatprep.subr.bf16.mxu0 0
    %1459 = vmatpush1.bf16.msra.mxu0 0
    %1460 = vmatprep.subr.bf16.mxu0 0
    %1461 = vmatpush1.bf16.msra.mxu0 0
    %1462 = vmatprep.subr.bf16.mxu0 0
    %1463 = vmatpush1.bf16.msra.mxu0 0
    %1464 = vmatprep.subr.bf16.mxu0 0
    %1465 = vmatpush1.bf16.msra.mxu0 0
    %1466 = vmatprep.subr.bf16.mxu0 0
    %1467 = vmatpush1.bf16.msra.mxu0 %v1451
    %1468 = vmatprep.subr.bf16.mxu0 0
    %1469 = vmatpush1.bf16.msra.mxu0 %v1450
    %1470 = vmatprep.subr.bf16.mxu0 0
    %1471 = vmatpush2.bf16.msra.mxu0 0
    %1472 = vmatprep.subr.bf16.mxu0 0
    %1473 = vmatpush2.bf16.msra.mxu0 0
    %1474 = vmatprep.subr.bf16.mxu0 0
    %1475 = vmatpush2.bf16.msra.mxu0 0
    %1476 = vmatprep.subr.bf16.mxu0 0
    %1477 = vmatpush2.bf16.msra.mxu0 0
    %1478 = vmatprep.subr.bf16.mxu0 0
    %1479 = vmatpush2.bf16.msra.mxu0 0
    %1480 = vmatprep.subr.bf16.mxu0 0
    %1481 = vmatpush2.bf16.msra.mxu0 0
    %1482 = vmatprep.subr.bf16.mxu0 0
    %1483 = vmatpush2.bf16.msra.mxu0 0
    %1484 = vmatprep.subr.bf16.mxu0 0
    %1485 = vmatpush2.bf16.msra.mxu0 0
    %1486 = vmatprep.mubr.bf16.mxu0 0
    %1487 = vmatmul.mubr.bf16.gmra.mxu0 %v190
    %v1488 = vpop.f32.mrf.mxu0
    %v1489 = vadd.f32 %v1440, %v1488
    %v1490 = vpop.f32.mrf.mxu0
    %v1491 = vpop.f32.mrf.mxu0
    %v1492 = vpop.f32.mrf.mxu0
    %1493 = vdwg.mxu0
    %1494 = vmatprep.subr.bf16.mxu0 0
    %1495 = vmatpush1.bf16.msra.mxu0 0
    %1496 = vmatprep.subr.bf16.mxu0 0
    %1497 = vmatpush1.bf16.msra.mxu0 0
    %1498 = vmatprep.subr.bf16.mxu0 0
    %1499 = vmatpush1.bf16.msra.mxu0 0
    %1500 = vmatprep.subr.bf16.mxu0 0
    %1501 = vmatpush1.bf16.msra.mxu0 0
    %1502 = vmatprep.subr.bf16.mxu0 0
    %1503 = vmatpush1.bf16.msra.mxu0 0
    %1504 = vmatprep.subr.bf16.mxu0 0
    %1505 = vmatpush1.bf16.msra.mxu0 0
    %1506 = vmatprep.subr.bf16.mxu0 0
    %1507 = vmatpush1.bf16.msra.mxu0 %v1451
    %1508 = vmatprep.subr.bf16.mxu0 0
    %1509 = vmatpush1.bf16.msra.mxu0 %v1450
    %1510 = vmatprep.subr.bf16.mxu0 0
    %1511 = vmatpush2.bf16.msra.mxu0 0
    %1512 = vmatprep.subr.bf16.mxu0 0
    %1513 = vmatpush2.bf16.msra.mxu0 0
    %1514 = vmatprep.subr.bf16.mxu0 0
    %1515 = vmatpush2.bf16.msra.mxu0 0
    %1516 = vmatprep.subr.bf16.mxu0 0
    %1517 = vmatpush2.bf16.msra.mxu0 0
    %1518 = vmatprep.subr.bf16.mxu0 0
    %1519 = vmatpush2.bf16.msra.mxu0 0
    %1520 = vmatprep.subr.bf16.mxu0 0
    %1521 = vmatpush2.bf16.msra.mxu0 0
    %1522 = vmatprep.subr.bf16.mxu0 0
    %1523 = vmatpush2.bf16.msra.mxu0 0
    %1524 = vmatprep.subr.bf16.mxu0 0
    %1525 = vmatpush2.bf16.msra.mxu0 0
    %1526 = vmatprep.mubr.bf16.mxu0 0
    %1527 = vmatmul.mubr.bf16.gmra.mxu0 %v233
    %v1528 = vpop.f32.mrf.mxu0
    %v1529 = vadd.f32 %v1440, %v1528
    %v1530 = vpop.f32.mrf.mxu0
    %v1531 = vpop.f32.mrf.mxu0
    %v1532 = vpop.f32.mrf.mxu0
    %1533 = vdwg.mxu0
    %s1534 = scalar_lea.vmem %s8, 2
    %v1535 = vld [vmem:[%s1534] sm:$0x1]
    %v1537 = vlaneseq
    %v1538 = vshrl.u32 %v1537, 7
    %v1539 = vsub.s32 0, %v1538
    %v1540 = vrot.slane %v1535, %v1539
    %v1546 = vunpack.c.l.b16 %v1330
    %v1547 = vunpack.c.l.b16 %v1331
    %v1548 = vunpack.c.l.b16 %v1332
    %v1549 = vunpack.c.l.b16 %v1333
    %v1550 = vpack.c.b16 %v1547, %v1546
    %v1551 = vpack.c.b16 %v1549, %v1548
    %1554 = vmatprep.subr.bf16.mxu0 0
    %1555 = vmatpush1.bf16.msra.mxu0 0
    %1556 = vmatprep.subr.bf16.mxu0 0
    %1557 = vmatpush1.bf16.msra.mxu0 0
    %1558 = vmatprep.subr.bf16.mxu0 0
    %1559 = vmatpush1.bf16.msra.mxu0 0
    %1560 = vmatprep.subr.bf16.mxu0 0
    %1561 = vmatpush1.bf16.msra.mxu0 0
    %1562 = vmatprep.subr.bf16.mxu0 0
    %1563 = vmatpush1.bf16.msra.mxu0 0
    %1564 = vmatprep.subr.bf16.mxu0 0
    %1565 = vmatpush1.bf16.msra.mxu0 0
    %1566 = vmatprep.subr.bf16.mxu0 0
    %1567 = vmatpush1.bf16.msra.mxu0 %v1551
    %1568 = vmatprep.subr.bf16.mxu0 0
    %1569 = vmatpush1.bf16.msra.mxu0 %v1550
    %1570 = vmatprep.subr.bf16.mxu0 0
    %1571 = vmatpush2.bf16.msra.mxu0 0
    %1572 = vmatprep.subr.bf16.mxu0 0
    %1573 = vmatpush2.bf16.msra.mxu0 0
    %1574 = vmatprep.subr.bf16.mxu0 0
    %1575 = vmatpush2.bf16.msra.mxu0 0
    %1576 = vmatprep.subr.bf16.mxu0 0
    %1577 = vmatpush2.bf16.msra.mxu0 0
    %1578 = vmatprep.subr.bf16.mxu0 0
    %1579 = vmatpush2.bf16.msra.mxu0 0
    %1580 = vmatprep.subr.bf16.mxu0 0
    %1581 = vmatpush2.bf16.msra.mxu0 0
    %1582 = vmatprep.subr.bf16.mxu0 0
    %1583 = vmatpush2.bf16.msra.mxu0 0
    %1584 = vmatprep.subr.bf16.mxu0 0
    %1585 = vmatpush2.bf16.msra.mxu0 0
    %1586 = vmatprep.mubr.bf16.mxu0 0
    %1587 = vmatmul.mubr.bf16.gmra.mxu0 %v295
    %v1588 = vpop.f32.mrf.mxu0
    %v1589 = vadd.f32 %v1540, %v1588
    %v1590 = vpop.f32.mrf.mxu0
    %v1591 = vpop.f32.mrf.mxu0
    %v1592 = vpop.f32.mrf.mxu0
    %1593 = vdwg.mxu0
    %1594 = vmatprep.subr.bf16.mxu0 0
    %1595 = vmatpush1.bf16.msra.mxu0 0
    %1596 = vmatprep.subr.bf16.mxu0 0
    %1597 = vmatpush1.bf16.msra.mxu0 0
    %1598 = vmatprep.subr.bf16.mxu0 0
    %1599 = vmatpush1.bf16.msra.mxu0 0
    %1600 = vmatprep.subr.bf16.mxu0 0
    %1601 = vmatpush1.bf16.msra.mxu0 0
    %1602 = vmatprep.subr.bf16.mxu0 0
    %1603 = vmatpush1.bf16.msra.mxu0 0
    %1604 = vmatprep.subr.bf16.mxu0 0
    %1605 = vmatpush1.bf16.msra.mxu0 0
    %1606 = vmatprep.subr.bf16.mxu0 0
    %1607 = vmatpush1.bf16.msra.mxu0 %v1551
    %1608 = vmatprep.subr.bf16.mxu0 0
    %1609 = vmatpush1.bf16.msra.mxu0 %v1550
    %1610 = vmatprep.subr.bf16.mxu0 0
    %1611 = vmatpush2.bf16.msra.mxu0 0
    %1612 = vmatprep.subr.bf16.mxu0 0
    %1613 = vmatpush2.bf16.msra.mxu0 0
    %1614 = vmatprep.subr.bf16.mxu0 0
    %1615 = vmatpush2.bf16.msra.mxu0 0
    %1616 = vmatprep.subr.bf16.mxu0 0
    %1617 = vmatpush2.bf16.msra.mxu0 0
    %1618 = vmatprep.subr.bf16.mxu0 0
    %1619 = vmatpush2.bf16.msra.mxu0 0
    %1620 = vmatprep.subr.bf16.mxu0 0
    %1621 = vmatpush2.bf16.msra.mxu0 0
    %1622 = vmatprep.subr.bf16.mxu0 0
    %1623 = vmatpush2.bf16.msra.mxu0 0
    %1624 = vmatprep.subr.bf16.mxu0 0
    %1625 = vmatpush2.bf16.msra.mxu0 0
    %1626 = vmatprep.mubr.bf16.mxu0 0
    %1627 = vmatmul.mubr.bf16.gmra.mxu0 %v338
    %v1628 = vpop.f32.mrf.mxu0
    %v1629 = vadd.f32 %v1540, %v1628
    %v1630 = vpop.f32.mrf.mxu0
    %v1631 = vpop.f32.mrf.mxu0
    %v1632 = vpop.f32.mrf.mxu0
    %1633 = vdwg.mxu0
    %v1634 = vpack.c.bf16 %v1389, %v1389
    %v1635 = vpack.c.bf16 %v1429, %v1429
    %v1636 = vpack.c.bf16 %v1489, %v1489
    %v1637 = vpack.c.bf16 %v1529, %v1529
    %v1639 = vsel %vm384, %v1634, 0
    %v1642 = vsel %vm384, %v1636, 0
    %1644 = vmatprep.subr.bf16.mxu0 0
    %1645 = vmatpush1.bf16.xpose.msra.mxu0 0
    %1646 = vmatprep.subr.bf16.mxu0 0
    %1647 = vmatpush1.bf16.xpose.msra.mxu0 0
    %1648 = vmatprep.subr.bf16.mxu0 0
    %1649 = vmatpush1.bf16.xpose.msra.mxu0 0
    %1650 = vmatprep.subr.bf16.mxu0 0
    %1651 = vmatpush1.bf16.xpose.msra.mxu0 0
    %1652 = vmatprep.subr.bf16.mxu0 0
    %1653 = vmatpush1.bf16.xpose.msra.mxu0 0
    %1654 = vmatprep.subr.bf16.mxu0 0
    %1655 = vmatpush1.bf16.xpose.msra.mxu0 0
    %1656 = vmatprep.subr.bf16.mxu0 0
    %1657 = vmatpush1.bf16.xpose.msra.mxu0 0
    %1658 = vmatprep.subr.bf16.mxu0 0
    %1659 = vmatpush1.bf16.xpose.msra.mxu0 %v1642
    %1660 = vmatprep.subr.bf16.mxu0 0
    %1661 = vmatpush2.bf16.xpose.msra.mxu0 0
    %1662 = vmatprep.subr.bf16.mxu0 0
    %1663 = vmatpush2.bf16.xpose.msra.mxu0 0
    %1664 = vmatprep.subr.bf16.mxu0 0
    %1665 = vmatpush2.bf16.xpose.msra.mxu0 0
    %1666 = vmatprep.subr.bf16.mxu0 0
    %1667 = vmatpush2.bf16.xpose.msra.mxu0 0
    %1668 = vmatprep.subr.bf16.mxu0 0
    %1669 = vmatpush2.bf16.xpose.msra.mxu0 0
    %1670 = vmatprep.subr.bf16.mxu0 0
    %1671 = vmatpush2.bf16.xpose.msra.mxu0 0
    %1672 = vmatprep.subr.bf16.mxu0 0
    %1673 = vmatpush2.bf16.xpose.msra.mxu0 0
    %1674 = vmatprep.subr.bf16.mxu0 0
    %1675 = vmatpush2.bf16.xpose.msra.mxu0 0
    %1676 = vmatprep.mubr.bf16.mxu0 0
    %1677 = vmatmul.mubr.bf16.gmra.mxu0 %v1639
    %v1678 = vpop.f32.mrf.mxu0
    %v1679 = vadd.f32 0.0, %v1678
    %v1680 = vpop.f32.mrf.mxu0
    %v1681 = vpop.f32.mrf.mxu0
    %v1682 = vpop.f32.mrf.mxu0
    %1683 = vdwg.mxu0
    %v1685 = vsel %vm384, %v1635, 0
    %v1688 = vsel %vm384, %v1637, 0
    %1690 = vmatprep.subr.bf16.mxu0 0
    %1691 = vmatpush1.bf16.xpose.msra.mxu0 0
    %1692 = vmatprep.subr.bf16.mxu0 0
    %1693 = vmatpush1.bf16.xpose.msra.mxu0 0
    %1694 = vmatprep.subr.bf16.mxu0 0
    %1695 = vmatpush1.bf16.xpose.msra.mxu0 0
    %1696 = vmatprep.subr.bf16.mxu0 0
    %1697 = vmatpush1.bf16.xpose.msra.mxu0 0
    %1698 = vmatprep.subr.bf16.mxu0 0
    %1699 = vmatpush1.bf16.xpose.msra.mxu0 0
    %1700 = vmatprep.subr.bf16.mxu0 0
    %1701 = vmatpush1.bf16.xpose.msra.mxu0 0
    %1702 = vmatprep.subr.bf16.mxu0 0
    %1703 = vmatpush1.bf16.xpose.msra.mxu0 0
    %1704 = vmatprep.subr.bf16.mxu0 0
    %1705 = vmatpush1.bf16.xpose.msra.mxu0 %v1688
    %1706 = vmatprep.subr.bf16.mxu0 0
    %1707 = vmatpush2.bf16.xpose.msra.mxu0 0
    %1708 = vmatprep.subr.bf16.mxu0 0
    %1709 = vmatpush2.bf16.xpose.msra.mxu0 0
    %1710 = vmatprep.subr.bf16.mxu0 0
    %1711 = vmatpush2.bf16.xpose.msra.mxu0 0
    %1712 = vmatprep.subr.bf16.mxu0 0
    %1713 = vmatpush2.bf16.xpose.msra.mxu0 0
    %1714 = vmatprep.subr.bf16.mxu0 0
    %1715 = vmatpush2.bf16.xpose.msra.mxu0 0
    %1716 = vmatprep.subr.bf16.mxu0 0
    %1717 = vmatpush2.bf16.xpose.msra.mxu0 0
    %1718 = vmatprep.subr.bf16.mxu0 0
    %1719 = vmatpush2.bf16.xpose.msra.mxu0 0
    %1720 = vmatprep.subr.bf16.mxu0 0
    %1721 = vmatpush2.bf16.xpose.msra.mxu0 0
    %1722 = vmatprep.mubr.bf16.mxu0 0
    %1723 = vmatmul.mubr.bf16.gmra.mxu0 %v1685
    %v1724 = vpop.f32.mrf.mxu0
    %v1725 = vadd.f32 0.0, %v1724
    %v1726 = vpop.f32.mrf.mxu0
    %v1727 = vpop.f32.mrf.mxu0
    %v1728 = vpop.f32.mrf.mxu0
    %1729 = vdwg.mxu0
    %v1730 = vsel %vm477, %v1679, -inf
    %1731 = vmax.xlane.f32.xlu0 %v1730
    %v1732 = vpop.xlane.xlu0 %1731
    %v1733 = vsel %vm477, %v1725, -inf
    %1734 = vmax.xlane.f32.xlu0 %v1733
    %v1735 = vpop.xlane.xlu0 %1734
    %v1736 = vsub.f32 %v1679, %v1732
    %v1737 = vsub.f32 %v1725, %v1735
    %v1738 = vmul.f32 %v1736, 1.442695
    %v1739 = vpow.pop %v1738
    %v1740 = vmul.f32 %v1737, 1.442695
    %v1741 = vpow.pop %v1740
    %v1742 = vsel %vm477, %v1739, 0.0
    %1743 = vadd.xlane.f32.xlu0 %v1742
    %v1744 = vpop.xlane.xlu0 %1743
    %v1745 = vsel %vm477, %v1741, 0.0
    %1746 = vadd.xlane.f32.xlu0 %v1745
    %v1747 = vpop.xlane.xlu0 %1746
    %v1748 = vrcp.pop %v1744
    %v1749 = vrcp.pop %v1747
    %v1750 = vmul.f32 %v1739, %v1748
    %v1751 = vmul.f32 %v1741, %v1749
    %v1752 = vpack.c.bf16 %v1750, %v1750
    %v1753 = vpack.c.bf16 %v1751, %v1751
    %v1754 = vpack.c.bf16 %v1589, %v1589
    %v1755 = vpack.c.bf16 %v1629, %v1629
    %v1757 = vsel %vm477, %v1752, 0
    %v1760 = vsel %vm507, %v1754, 0
    %1762 = vmatprep.subr.bf16.mxu0 0
    %1763 = vmatpush1.bf16.msra.mxu0 0
    %1764 = vmatprep.subr.bf16.mxu0 0
    %1765 = vmatpush1.bf16.msra.mxu0 0
    %1766 = vmatprep.subr.bf16.mxu0 0
    %1767 = vmatpush1.bf16.msra.mxu0 0
    %1768 = vmatprep.subr.bf16.mxu0 0
    %1769 = vmatpush1.bf16.msra.mxu0 0
    %1770 = vmatprep.subr.bf16.mxu0 0
    %1771 = vmatpush1.bf16.msra.mxu0 0
    %1772 = vmatprep.subr.bf16.mxu0 0
    %1773 = vmatpush1.bf16.msra.mxu0 0
    %1774 = vmatprep.subr.bf16.mxu0 0
    %1775 = vmatpush1.bf16.msra.mxu0 0
    %1776 = vmatprep.subr.bf16.mxu0 0
    %1777 = vmatpush1.bf16.msra.mxu0 %v1760
    %1778 = vmatprep.subr.bf16.mxu0 0
    %1779 = vmatpush2.bf16.msra.mxu0 0
    %1780 = vmatprep.subr.bf16.mxu0 0
    %1781 = vmatpush2.bf16.msra.mxu0 0
    %1782 = vmatprep.subr.bf16.mxu0 0
    %1783 = vmatpush2.bf16.msra.mxu0 0
    %1784 = vmatprep.subr.bf16.mxu0 0
    %1785 = vmatpush2.bf16.msra.mxu0 0
    %1786 = vmatprep.subr.bf16.mxu0 0
    %1787 = vmatpush2.bf16.msra.mxu0 0
    %1788 = vmatprep.subr.bf16.mxu0 0
    %1789 = vmatpush2.bf16.msra.mxu0 0
    %1790 = vmatprep.subr.bf16.mxu0 0
    %1791 = vmatpush2.bf16.msra.mxu0 0
    %1792 = vmatprep.subr.bf16.mxu0 0
    %1793 = vmatpush2.bf16.msra.mxu0 0
    %1794 = vmatprep.mubr.bf16.mxu0 0
    %1795 = vmatmul.mubr.bf16.gmra.mxu0 %v1757
    %v1796 = vpop.f32.mrf.mxu0
    %v1797 = vadd.f32 0.0, %v1796
    %v1798 = vpop.f32.mrf.mxu0
    %v1799 = vpop.f32.mrf.mxu0
    %v1800 = vpop.f32.mrf.mxu0
    %1801 = vdwg.mxu0
    %v1803 = vsel %vm477, %v1753, 0
    %v1806 = vsel %vm507, %v1755, 0
    %1808 = vmatprep.subr.bf16.mxu0 0
    %1809 = vmatpush1.bf16.msra.mxu0 0
    %1810 = vmatprep.subr.bf16.mxu0 0
    %1811 = vmatpush1.bf16.msra.mxu0 0
    %1812 = vmatprep.subr.bf16.mxu0 0
    %1813 = vmatpush1.bf16.msra.mxu0 0
    %1814 = vmatprep.subr.bf16.mxu0 0
    %1815 = vmatpush1.bf16.msra.mxu0 0
    %1816 = vmatprep.subr.bf16.mxu0 0
    %1817 = vmatpush1.bf16.msra.mxu0 0
    %1818 = vmatprep.subr.bf16.mxu0 0
    %1819 = vmatpush1.bf16.msra.mxu0 0
    %1820 = vmatprep.subr.bf16.mxu0 0
    %1821 = vmatpush1.bf16.msra.mxu0 0
    %1822 = vmatprep.subr.bf16.mxu0 0
    %1823 = vmatpush1.bf16.msra.mxu0 %v1806
    %1824 = vmatprep.subr.bf16.mxu0 0
    %1825 = vmatpush2.bf16.msra.mxu0 0
    %1826 = vmatprep.subr.bf16.mxu0 0
    %1827 = vmatpush2.bf16.msra.mxu0 0
    %1828 = vmatprep.subr.bf16.mxu0 0
    %1829 = vmatpush2.bf16.msra.mxu0 0
    %1830 = vmatprep.subr.bf16.mxu0 0
    %1831 = vmatpush2.bf16.msra.mxu0 0
    %1832 = vmatprep.subr.bf16.mxu0 0
    %1833 = vmatpush2.bf16.msra.mxu0 0
    %1834 = vmatprep.subr.bf16.mxu0 0
    %1835 = vmatpush2.bf16.msra.mxu0 0
    %1836 = vmatprep.subr.bf16.mxu0 0
    %1837 = vmatpush2.bf16.msra.mxu0 0
    %1838 = vmatprep.subr.bf16.mxu0 0
    %1839 = vmatpush2.bf16.msra.mxu0 0
    %1840 = vmatprep.mubr.bf16.mxu0 0
    %1841 = vmatmul.mubr.bf16.gmra.mxu0 %v1803
    %v1842 = vpop.f32.mrf.mxu0
    %v1843 = vadd.f32 0.0, %v1842
    %v1844 = vpop.f32.mrf.mxu0
    %v1845 = vpop.f32.mrf.mxu0
    %v1846 = vpop.f32.mrf.mxu0
    %1847 = vdwg.mxu0
    %s1848 = scalar_lea.vmem %s9, 16
    %v1849 = vld [vmem:[%s1848] sm:$0xf]
    %v1850 = vld [vmem:[%s1848 + $0x4] sm:$0xf]
    %v1851 = vpack.c.bf16 %v1797, %v1797
    %v1852 = vpack.c.bf16 %v1843, %v1843
    %v1855 = vunpack.c.l.b16 %v1849
    %v1856 = vunpack.c.l.b16 %v1850
    %v1857 = vpack.c.b16 %v1856, %v1855
    %v1860 = vsel %vm384, %v1851, 0
    %1862 = vmatprep.subr.bf16.mxu0 0
    %1863 = vmatpush1.bf16.msra.mxu0 0
    %1864 = vmatprep.subr.bf16.mxu0 0
    %1865 = vmatpush1.bf16.msra.mxu0 0
    %1866 = vmatprep.subr.bf16.mxu0 0
    %1867 = vmatpush1.bf16.msra.mxu0 0
    %1868 = vmatprep.subr.bf16.mxu0 0
    %1869 = vmatpush1.bf16.msra.mxu0 0
    %1870 = vmatprep.subr.bf16.mxu0 0
    %1871 = vmatpush1.bf16.msra.mxu0 0
    %1872 = vmatprep.subr.bf16.mxu0 0
    %1873 = vmatpush1.bf16.msra.mxu0 0
    %1874 = vmatprep.subr.bf16.mxu0 0
    %1875 = vmatpush1.bf16.msra.mxu0 0
    %1876 = vmatprep.subr.bf16.mxu0 0
    %1877 = vmatpush1.bf16.msra.mxu0 %v1857
    %1878 = vmatprep.subr.bf16.mxu0 0
    %1879 = vmatpush2.bf16.msra.mxu0 0
    %1880 = vmatprep.subr.bf16.mxu0 0
    %1881 = vmatpush2.bf16.msra.mxu0 0
    %1882 = vmatprep.subr.bf16.mxu0 0
    %1883 = vmatpush2.bf16.msra.mxu0 0
    %1884 = vmatprep.subr.bf16.mxu0 0
    %1885 = vmatpush2.bf16.msra.mxu0 0
    %1886 = vmatprep.subr.bf16.mxu0 0
    %1887 = vmatpush2.bf16.msra.mxu0 0
    %1888 = vmatprep.subr.bf16.mxu0 0
    %1889 = vmatpush2.bf16.msra.mxu0 0
    %1890 = vmatprep.subr.bf16.mxu0 0
    %1891 = vmatpush2.bf16.msra.mxu0 0
    %1892 = vmatprep.subr.bf16.mxu0 0
    %1893 = vmatpush2.bf16.msra.mxu0 0
    %1894 = vmatprep.mubr.bf16.mxu0 0
    %1895 = vmatmul.mubr.bf16.gmra.mxu0 %v1860
    %v1896 = vpop.f32.mrf.mxu0
    %v1897 = vadd.f32 0.0, %v1896
    %v1898 = vpop.f32.mrf.mxu0
    %v1899 = vpop.f32.mrf.mxu0
    %v1900 = vpop.f32.mrf.mxu0
    %1901 = vdwg.mxu0
    %v1903 = vsel %vm384, %v1852, 0
    %1905 = vmatprep.subr.bf16.mxu0 0
    %1906 = vmatpush1.bf16.msra.mxu0 0
    %1907 = vmatprep.subr.bf16.mxu0 0
    %1908 = vmatpush1.bf16.msra.mxu0 0
    %1909 = vmatprep.subr.bf16.mxu0 0
    %1910 = vmatpush1.bf16.msra.mxu0 0
    %1911 = vmatprep.subr.bf16.mxu0 0
    %1912 = vmatpush1.bf16.msra.mxu0 0
    %1913 = vmatprep.subr.bf16.mxu0 0
    %1914 = vmatpush1.bf16.msra.mxu0 0
    %1915 = vmatprep.subr.bf16.mxu0 0
    %1916 = vmatpush1.bf16.msra.mxu0 0
    %1917 = vmatprep.subr.bf16.mxu0 0
    %1918 = vmatpush1.bf16.msra.mxu0 0
    %1919 = vmatprep.subr.bf16.mxu0 0
    %1920 = vmatpush1.bf16.msra.mxu0 %v1857
    %1921 = vmatprep.subr.bf16.mxu0 0
    %1922 = vmatpush2.bf16.msra.mxu0 0
    %1923 = vmatprep.subr.bf16.mxu0 0
    %1924 = vmatpush2.bf16.msra.mxu0 0
    %1925 = vmatprep.subr.bf16.mxu0 0
    %1926 = vmatpush2.bf16.msra.mxu0 0
    %1927 = vmatprep.subr.bf16.mxu0 0
    %1928 = vmatpush2.bf16.msra.mxu0 0
    %1929 = vmatprep.subr.bf16.mxu0 0
    %1930 = vmatpush2.bf16.msra.mxu0 0
    %1931 = vmatprep.subr.bf16.mxu0 0
    %1932 = vmatpush2.bf16.msra.mxu0 0
    %1933 = vmatprep.subr.bf16.mxu0 0
    %1934 = vmatpush2.bf16.msra.mxu0 0
    %1935 = vmatprep.subr.bf16.mxu0 0
    %1936 = vmatpush2.bf16.msra.mxu0 0
    %1937 = vmatprep.mubr.bf16.mxu0 0
    %1938 = vmatmul.mubr.bf16.gmra.mxu0 %v1903
    %v1939 = vpop.f32.mrf.mxu0
    %v1940 = vadd.f32 0.0, %v1939
    %v1941 = vpop.f32.mrf.mxu0
    %v1942 = vpop.f32.mrf.mxu0
    %v1943 = vpop.f32.mrf.mxu0
    %1944 = vdwg.mxu0
    %v1945 = vadd.f32 %v1271, %v1897
    %v1946 = vadd.f32 %v1314, %v1940
    %s1947 = scalar_lea.vmem %s3, 48
    %v1948 = vld [vmem:[%s1947] sm:$0xf]
    %v1949 = vld [vmem:[%s1947 + $0x4] sm:$0xf]
    %v1950 = vld [vmem:[%s1947 + $0x8] sm:$0xf]
    %v1951 = vld [vmem:[%s1947 + $0xc] sm:$0xf]
    %s1952 = scalar_lea.vmem %s5, 48
    %v1953 = vld [vmem:[%s1952] sm:$0xf]
    %v1954 = vld [vmem:[%s1952 + $0x4] sm:$0xf]
    %v1955 = vld [vmem:[%s1952 + $0x8] sm:$0xf]
    %v1956 = vld [vmem:[%s1952 + $0xc] sm:$0xf]
    %s1957 = scalar_lea.vmem %s7, 48
    %v1958 = vld [vmem:[%s1957] sm:$0xf]
    %v1959 = vld [vmem:[%s1957 + $0x4] sm:$0xf]
    %v1960 = vld [vmem:[%s1957 + $0x8] sm:$0xf]
    %v1961 = vld [vmem:[%s1957 + $0xc] sm:$0xf]
    %s1962 = scalar_lea.vmem %s4, 3
    %v1963 = vld [vmem:[%s1962] sm:$0x1]
    %v1965 = vlaneseq
    %v1966 = vshrl.u32 %v1965, 7
    %v1967 = vsub.s32 0, %v1966
    %v1968 = vrot.slane %v1963, %v1967
    %v1974 = vunpack.c.l.b16 %v1948
    %v1975 = vunpack.c.l.b16 %v1949
    %v1976 = vunpack.c.l.b16 %v1950
    %v1977 = vunpack.c.l.b16 %v1951
    %v1978 = vpack.c.b16 %v1975, %v1974
    %v1979 = vpack.c.b16 %v1977, %v1976
    %1982 = vmatprep.subr.bf16.mxu0 0
    %1983 = vmatpush1.bf16.msra.mxu0 0
    %1984 = vmatprep.subr.bf16.mxu0 0
    %1985 = vmatpush1.bf16.msra.mxu0 0
    %1986 = vmatprep.subr.bf16.mxu0 0
    %1987 = vmatpush1.bf16.msra.mxu0 0
    %1988 = vmatprep.subr.bf16.mxu0 0
    %1989 = vmatpush1.bf16.msra.mxu0 0
    %1990 = vmatprep.subr.bf16.mxu0 0
    %1991 = vmatpush1.bf16.msra.mxu0 0
    %1992 = vmatprep.subr.bf16.mxu0 0
    %1993 = vmatpush1.bf16.msra.mxu0 0
    %1994 = vmatprep.subr.bf16.mxu0 0
    %1995 = vmatpush1.bf16.msra.mxu0 %v1979
    %1996 = vmatprep.subr.bf16.mxu0 0
    %1997 = vmatpush1.bf16.msra.mxu0 %v1978
    %1998 = vmatprep.subr.bf16.mxu0 0
    %1999 = vmatpush2.bf16.msra.mxu0 0
    %2000 = vmatprep.subr.bf16.mxu0 0
    %2001 = vmatpush2.bf16.msra.mxu0 0
    %2002 = vmatprep.subr.bf16.mxu0 0
    %2003 = vmatpush2.bf16.msra.mxu0 0
    %2004 = vmatprep.subr.bf16.mxu0 0
    %2005 = vmatpush2.bf16.msra.mxu0 0
    %2006 = vmatprep.subr.bf16.mxu0 0
    %2007 = vmatpush2.bf16.msra.mxu0 0
    %2008 = vmatprep.subr.bf16.mxu0 0
    %2009 = vmatpush2.bf16.msra.mxu0 0
    %2010 = vmatprep.subr.bf16.mxu0 0
    %2011 = vmatpush2.bf16.msra.mxu0 0
    %2012 = vmatprep.subr.bf16.mxu0 0
    %2013 = vmatpush2.bf16.msra.mxu0 0
    %2014 = vmatprep.mubr.bf16.mxu0 0
    %2015 = vmatmul.mubr.bf16.gmra.mxu0 %v85
    %v2016 = vpop.f32.mrf.mxu0
    %v2017 = vadd.f32 %v1968, %v2016
    %v2018 = vpop.f32.mrf.mxu0
    %v2019 = vpop.f32.mrf.mxu0
    %v2020 = vpop.f32.mrf.mxu0
    %2021 = vdwg.mxu0
    %2022 = vmatprep.subr.bf16.mxu0 0
    %2023 = vmatpush1.bf16.msra.mxu0 0
    %2024 = vmatprep.subr.bf16.mxu0 0
    %2025 = vmatpush1.bf16.msra.mxu0 0
    %2026 = vmatprep.subr.bf16.mxu0 0
    %2027 = vmatpush1.bf16.msra.mxu0 0
    %2028 = vmatprep.subr.bf16.mxu0 0
    %2029 = vmatpush1.bf16.msra.mxu0 0
    %2030 = vmatprep.subr.bf16.mxu0 0
    %2031 = vmatpush1.bf16.msra.mxu0 0
    %2032 = vmatprep.subr.bf16.mxu0 0
    %2033 = vmatpush1.bf16.msra.mxu0 0
    %2034 = vmatprep.subr.bf16.mxu0 0
    %2035 = vmatpush1.bf16.msra.mxu0 %v1979
    %2036 = vmatprep.subr.bf16.mxu0 0
    %2037 = vmatpush1.bf16.msra.mxu0 %v1978
    %2038 = vmatprep.subr.bf16.mxu0 0
    %2039 = vmatpush2.bf16.msra.mxu0 0
    %2040 = vmatprep.subr.bf16.mxu0 0
    %2041 = vmatpush2.bf16.msra.mxu0 0
    %2042 = vmatprep.subr.bf16.mxu0 0
    %2043 = vmatpush2.bf16.msra.mxu0 0
    %2044 = vmatprep.subr.bf16.mxu0 0
    %2045 = vmatpush2.bf16.msra.mxu0 0
    %2046 = vmatprep.subr.bf16.mxu0 0
    %2047 = vmatpush2.bf16.msra.mxu0 0
    %2048 = vmatprep.subr.bf16.mxu0 0
    %2049 = vmatpush2.bf16.msra.mxu0 0
    %2050 = vmatprep.subr.bf16.mxu0 0
    %2051 = vmatpush2.bf16.msra.mxu0 0
    %2052 = vmatprep.subr.bf16.mxu0 0
    %2053 = vmatpush2.bf16.msra.mxu0 0
    %2054 = vmatprep.mubr.bf16.mxu0 0
    %2055 = vmatmul.mubr.bf16.gmra.mxu0 %v128
    %v2056 = vpop.f32.mrf.mxu0
    %v2057 = vadd.f32 %v1968, %v2056
    %v2058 = vpop.f32.mrf.mxu0
    %v2059 = vpop.f32.mrf.mxu0
    %v2060 = vpop.f32.mrf.mxu0
    %2061 = vdwg.mxu0
    %s2062 = scalar_lea.vmem %s6, 3
    %v2063 = vld [vmem:[%s2062] sm:$0x1]
    %v2065 = vlaneseq
    %v2066 = vshrl.u32 %v2065, 7
    %v2067 = vsub.s32 0, %v2066
    %v2068 = vrot.slane %v2063, %v2067
    %v2074 = vunpack.c.l.b16 %v1953
    %v2075 = vunpack.c.l.b16 %v1954
    %v2076 = vunpack.c.l.b16 %v1955
    %v2077 = vunpack.c.l.b16 %v1956
    %v2078 = vpack.c.b16 %v2075, %v2074
    %v2079 = vpack.c.b16 %v2077, %v2076
    %2082 = vmatprep.subr.bf16.mxu0 0
    %2083 = vmatpush1.bf16.msra.mxu0 0
    %2084 = vmatprep.subr.bf16.mxu0 0
    %2085 = vmatpush1.bf16.msra.mxu0 0
    %2086 = vmatprep.subr.bf16.mxu0 0
    %2087 = vmatpush1.bf16.msra.mxu0 0
    %2088 = vmatprep.subr.bf16.mxu0 0
    %2089 = vmatpush1.bf16.msra.mxu0 0
    %2090 = vmatprep.subr.bf16.mxu0 0
    %2091 = vmatpush1.bf16.msra.mxu0 0
    %2092 = vmatprep.subr.bf16.mxu0 0
    %2093 = vmatpush1.bf16.msra.mxu0 0
    %2094 = vmatprep.subr.bf16.mxu0 0
    %2095 = vmatpush1.bf16.msra.mxu0 %v2079
    %2096 = vmatprep.subr.bf16.mxu0 0
    %2097 = vmatpush1.bf16.msra.mxu0 %v2078
    %2098 = vmatprep.subr.bf16.mxu0 0
    %2099 = vmatpush2.bf16.msra.mxu0 0
    %2100 = vmatprep.subr.bf16.mxu0 0
    %2101 = vmatpush2.bf16.msra.mxu0 0
    %2102 = vmatprep.subr.bf16.mxu0 0
    %2103 = vmatpush2.bf16.msra.mxu0 0
    %2104 = vmatprep.subr.bf16.mxu0 0
    %2105 = vmatpush2.bf16.msra.mxu0 0
    %2106 = vmatprep.subr.bf16.mxu0 0
    %2107 = vmatpush2.bf16.msra.mxu0 0
    %2108 = vmatprep.subr.bf16.mxu0 0
    %2109 = vmatpush2.bf16.msra.mxu0 0
    %2110 = vmatprep.subr.bf16.mxu0 0
    %2111 = vmatpush2.bf16.msra.mxu0 0
    %2112 = vmatprep.subr.bf16.mxu0 0
    %2113 = vmatpush2.bf16.msra.mxu0 0
    %2114 = vmatprep.mubr.bf16.mxu0 0
    %2115 = vmatmul.mubr.bf16.gmra.mxu0 %v190
    %v2116 = vpop.f32.mrf.mxu0
    %v2117 = vadd.f32 %v2068, %v2116
    %v2118 = vpop.f32.mrf.mxu0
    %v2119 = vpop.f32.mrf.mxu0
    %v2120 = vpop.f32.mrf.mxu0
    %2121 = vdwg.mxu0
    %2122 = vmatprep.subr.bf16.mxu0 0
    %2123 = vmatpush1.bf16.msra.mxu0 0
    %2124 = vmatprep.subr.bf16.mxu0 0
    %2125 = vmatpush1.bf16.msra.mxu0 0
    %2126 = vmatprep.subr.bf16.mxu0 0
    %2127 = vmatpush1.bf16.msra.mxu0 0
    %2128 = vmatprep.subr.bf16.mxu0 0
    %2129 = vmatpush1.bf16.msra.mxu0 0
    %2130 = vmatprep.subr.bf16.mxu0 0
    %2131 = vmatpush1.bf16.msra.mxu0 0
    %2132 = vmatprep.subr.bf16.mxu0 0
    %2133 = vmatpush1.bf16.msra.mxu0 0
    %2134 = vmatprep.subr.bf16.mxu0 0
    %2135 = vmatpush1.bf16.msra.mxu0 %v2079
    %2136 = vmatprep.subr.bf16.mxu0 0
    %2137 = vmatpush1.bf16.msra.mxu0 %v2078
    %2138 = vmatprep.subr.bf16.mxu0 0
    %2139 = vmatpush2.bf16.msra.mxu0 0
    %2140 = vmatprep.subr.bf16.mxu0 0
    %2141 = vmatpush2.bf16.msra.mxu0 0
    %2142 = vmatprep.subr.bf16.mxu0 0
    %2143 = vmatpush2.bf16.msra.mxu0 0
    %2144 = vmatprep.subr.bf16.mxu0 0
    %2145 = vmatpush2.bf16.msra.mxu0 0
    %2146 = vmatprep.subr.bf16.mxu0 0
    %2147 = vmatpush2.bf16.msra.mxu0 0
    %2148 = vmatprep.subr.bf16.mxu0 0
    %2149 = vmatpush2.bf16.msra.mxu0 0
    %2150 = vmatprep.subr.bf16.mxu0 0
    %2151 = vmatpush2.bf16.msra.mxu0 0
    %2152 = vmatprep.subr.bf16.mxu0 0
    %2153 = vmatpush2.bf16.msra.mxu0 0
    %2154 = vmatprep.mubr.bf16.mxu0 0
    %2155 = vmatmul.mubr.bf16.gmra.mxu0 %v233
    %v2156 = vpop.f32.mrf.mxu0
    %v2157 = vadd.f32 %v2068, %v2156
    %v2158 = vpop.f32.mrf.mxu0
    %v2159 = vpop.f32.mrf.mxu0
    %v2160 = vpop.f32.mrf.mxu0
    %2161 = vdwg.mxu0
    %s2162 = scalar_lea.vmem %s8, 3
    %v2163 = vld [vmem:[%s2162] sm:$0x1]
    %v2165 = vlaneseq
    %v2166 = vshrl.u32 %v2165, 7
    %v2167 = vsub.s32 0, %v2166
    %v2168 = vrot.slane %v2163, %v2167
    %v2174 = vunpack.c.l.b16 %v1958
    %v2175 = vunpack.c.l.b16 %v1959
    %v2176 = vunpack.c.l.b16 %v1960
    %v2177 = vunpack.c.l.b16 %v1961
    %v2178 = vpack.c.b16 %v2175, %v2174
    %v2179 = vpack.c.b16 %v2177, %v2176
    %2182 = vmatprep.subr.bf16.mxu0 0
    %2183 = vmatpush1.bf16.msra.mxu0 0
    %2184 = vmatprep.subr.bf16.mxu0 0
    %2185 = vmatpush1.bf16.msra.mxu0 0
    %2186 = vmatprep.subr.bf16.mxu0 0
    %2187 = vmatpush1.bf16.msra.mxu0 0
    %2188 = vmatprep.subr.bf16.mxu0 0
    %2189 = vmatpush1.bf16.msra.mxu0 0
    %2190 = vmatprep.subr.bf16.mxu0 0
    %2191 = vmatpush1.bf16.msra.mxu0 0
    %2192 = vmatprep.subr.bf16.mxu0 0
    %2193 = vmatpush1.bf16.msra.mxu0 0
    %2194 = vmatprep.subr.bf16.mxu0 0
    %2195 = vmatpush1.bf16.msra.mxu0 %v2179
    %2196 = vmatprep.subr.bf16.mxu0 0
    %2197 = vmatpush1.bf16.msra.mxu0 %v2178
    %2198 = vmatprep.subr.bf16.mxu0 0
    %2199 = vmatpush2.bf16.msra.mxu0 0
    %2200 = vmatprep.subr.bf16.mxu0 0
    %2201 = vmatpush2.bf16.msra.mxu0 0
    %2202 = vmatprep.subr.bf16.mxu0 0
    %2203 = vmatpush2.bf16.msra.mxu0 0
    %2204 = vmatprep.subr.bf16.mxu0 0
    %2205 = vmatpush2.bf16.msra.mxu0 0
    %2206 = vmatprep.subr.bf16.mxu0 0
    %2207 = vmatpush2.bf16.msra.mxu0 0
    %2208 = vmatprep.subr.bf16.mxu0 0
    %2209 = vmatpush2.bf16.msra.mxu0 0
    %2210 = vmatprep.subr.bf16.mxu0 0
    %2211 = vmatpush2.bf16.msra.mxu0 0
    %2212 = vmatprep.subr.bf16.mxu0 0
    %2213 = vmatpush2.bf16.msra.mxu0 0
    %2214 = vmatprep.mubr.bf16.mxu0 0
    %2215 = vmatmul.mubr.bf16.gmra.mxu0 %v295
    %v2216 = vpop.f32.mrf.mxu0
    %v2217 = vadd.f32 %v2168, %v2216
    %v2218 = vpop.f32.mrf.mxu0
    %v2219 = vpop.f32.mrf.mxu0
    %v2220 = vpop.f32.mrf.mxu0
    %2221 = vdwg.mxu0
    %2222 = vmatprep.subr.bf16.mxu0 0
    %2223 = vmatpush1.bf16.msra.mxu0 0
    %2224 = vmatprep.subr.bf16.mxu0 0
    %2225 = vmatpush1.bf16.msra.mxu0 0
    %2226 = vmatprep.subr.bf16.mxu0 0
    %2227 = vmatpush1.bf16.msra.mxu0 0
    %2228 = vmatprep.subr.bf16.mxu0 0
    %2229 = vmatpush1.bf16.msra.mxu0 0
    %2230 = vmatprep.subr.bf16.mxu0 0
    %2231 = vmatpush1.bf16.msra.mxu0 0
    %2232 = vmatprep.subr.bf16.mxu0 0
    %2233 = vmatpush1.bf16.msra.mxu0 0
    %2234 = vmatprep.subr.bf16.mxu0 0
    %2235 = vmatpush1.bf16.msra.mxu0 %v2179
    %2236 = vmatprep.subr.bf16.mxu0 0
    %2237 = vmatpush1.bf16.msra.mxu0 %v2178
    %2238 = vmatprep.subr.bf16.mxu0 0
    %2239 = vmatpush2.bf16.msra.mxu0 0
    %2240 = vmatprep.subr.bf16.mxu0 0
    %2241 = vmatpush2.bf16.msra.mxu0 0
    %2242 = vmatprep.subr.bf16.mxu0 0
    %2243 = vmatpush2.bf16.msra.mxu0 0
    %2244 = vmatprep.subr.bf16.mxu0 0
    %2245 = vmatpush2.bf16.msra.mxu0 0
    %2246 = vmatprep.subr.bf16.mxu0 0
    %2247 = vmatpush2.bf16.msra.mxu0 0
    %2248 = vmatprep.subr.bf16.mxu0 0
    %2249 = vmatpush2.bf16.msra.mxu0 0
    %2250 = vmatprep.subr.bf16.mxu0 0
    %2251 = vmatpush2.bf16.msra.mxu0 0
    %2252 = vmatprep.subr.bf16.mxu0 0
    %2253 = vmatpush2.bf16.msra.mxu0 0
    %2254 = vmatprep.mubr.bf16.mxu0 0
    %2255 = vmatmul.mubr.bf16.gmra.mxu0 %v338
    %v2256 = vpop.f32.mrf.mxu0
    %v2257 = vadd.f32 %v2168, %v2256
    %v2258 = vpop.f32.mrf.mxu0
    %v2259 = vpop.f32.mrf.mxu0
    %v2260 = vpop.f32.mrf.mxu0
    %2261 = vdwg.mxu0
    %v2262 = vpack.c.bf16 %v2017, %v2017
    %v2263 = vpack.c.bf16 %v2057, %v2057
    %v2264 = vpack.c.bf16 %v2117, %v2117
    %v2265 = vpack.c.bf16 %v2157, %v2157
    %v2267 = vsel %vm384, %v2262, 0
    %v2270 = vsel %vm384, %v2264, 0
    %2272 = vmatprep.subr.bf16.mxu0 0
    %2273 = vmatpush1.bf16.xpose.msra.mxu0 0
    %2274 = vmatprep.subr.bf16.mxu0 0
    %2275 = vmatpush1.bf16.xpose.msra.mxu0 0
    %2276 = vmatprep.subr.bf16.mxu0 0
    %2277 = vmatpush1.bf16.xpose.msra.mxu0 0
    %2278 = vmatprep.subr.bf16.mxu0 0
    %2279 = vmatpush1.bf16.xpose.msra.mxu0 0
    %2280 = vmatprep.subr.bf16.mxu0 0
    %2281 = vmatpush1.bf16.xpose.msra.mxu0 0
    %2282 = vmatprep.subr.bf16.mxu0 0
    %2283 = vmatpush1.bf16.xpose.msra.mxu0 0
    %2284 = vmatprep.subr.bf16.mxu0 0
    %2285 = vmatpush1.bf16.xpose.msra.mxu0 0
    %2286 = vmatprep.subr.bf16.mxu0 0
    %2287 = vmatpush1.bf16.xpose.msra.mxu0 %v2270
    %2288 = vmatprep.subr.bf16.mxu0 0
    %2289 = vmatpush2.bf16.xpose.msra.mxu0 0
    %2290 = vmatprep.subr.bf16.mxu0 0
    %2291 = vmatpush2.bf16.xpose.msra.mxu0 0
    %2292 = vmatprep.subr.bf16.mxu0 0
    %2293 = vmatpush2.bf16.xpose.msra.mxu0 0
    %2294 = vmatprep.subr.bf16.mxu0 0
    %2295 = vmatpush2.bf16.xpose.msra.mxu0 0
    %2296 = vmatprep.subr.bf16.mxu0 0
    %2297 = vmatpush2.bf16.xpose.msra.mxu0 0
    %2298 = vmatprep.subr.bf16.mxu0 0
    %2299 = vmatpush2.bf16.xpose.msra.mxu0 0
    %2300 = vmatprep.subr.bf16.mxu0 0
    %2301 = vmatpush2.bf16.xpose.msra.mxu0 0
    %2302 = vmatprep.subr.bf16.mxu0 0
    %2303 = vmatpush2.bf16.xpose.msra.mxu0 0
    %2304 = vmatprep.mubr.bf16.mxu0 0
    %2305 = vmatmul.mubr.bf16.gmra.mxu0 %v2267
    %v2306 = vpop.f32.mrf.mxu0
    %v2307 = vadd.f32 0.0, %v2306
    %v2308 = vpop.f32.mrf.mxu0
    %v2309 = vpop.f32.mrf.mxu0
    %v2310 = vpop.f32.mrf.mxu0
    %2311 = vdwg.mxu0
    %v2313 = vsel %vm384, %v2263, 0
    %v2316 = vsel %vm384, %v2265, 0
    %2318 = vmatprep.subr.bf16.mxu0 0
    %2319 = vmatpush1.bf16.xpose.msra.mxu0 0
    %2320 = vmatprep.subr.bf16.mxu0 0
    %2321 = vmatpush1.bf16.xpose.msra.mxu0 0
    %2322 = vmatprep.subr.bf16.mxu0 0
    %2323 = vmatpush1.bf16.xpose.msra.mxu0 0
    %2324 = vmatprep.subr.bf16.mxu0 0
    %2325 = vmatpush1.bf16.xpose.msra.mxu0 0
    %2326 = vmatprep.subr.bf16.mxu0 0
    %2327 = vmatpush1.bf16.xpose.msra.mxu0 0
    %2328 = vmatprep.subr.bf16.mxu0 0
    %2329 = vmatpush1.bf16.xpose.msra.mxu0 0
    %2330 = vmatprep.subr.bf16.mxu0 0
    %2331 = vmatpush1.bf16.xpose.msra.mxu0 0
    %2332 = vmatprep.subr.bf16.mxu0 0
    %2333 = vmatpush1.bf16.xpose.msra.mxu0 %v2316
    %2334 = vmatprep.subr.bf16.mxu0 0
    %2335 = vmatpush2.bf16.xpose.msra.mxu0 0
    %2336 = vmatprep.subr.bf16.mxu0 0
    %2337 = vmatpush2.bf16.xpose.msra.mxu0 0
    %2338 = vmatprep.subr.bf16.mxu0 0
    %2339 = vmatpush2.bf16.xpose.msra.mxu0 0
    %2340 = vmatprep.subr.bf16.mxu0 0
    %2341 = vmatpush2.bf16.xpose.msra.mxu0 0
    %2342 = vmatprep.subr.bf16.mxu0 0
    %2343 = vmatpush2.bf16.xpose.msra.mxu0 0
    %2344 = vmatprep.subr.bf16.mxu0 0
    %2345 = vmatpush2.bf16.xpose.msra.mxu0 0
    %2346 = vmatprep.subr.bf16.mxu0 0
    %2347 = vmatpush2.bf16.xpose.msra.mxu0 0
    %2348 = vmatprep.subr.bf16.mxu0 0
    %2349 = vmatpush2.bf16.xpose.msra.mxu0 0
    %2350 = vmatprep.mubr.bf16.mxu0 0
    %2351 = vmatmul.mubr.bf16.gmra.mxu0 %v2313
    %v2352 = vpop.f32.mrf.mxu0
    %v2353 = vadd.f32 0.0, %v2352
    %v2354 = vpop.f32.mrf.mxu0
    %v2355 = vpop.f32.mrf.mxu0
    %v2356 = vpop.f32.mrf.mxu0
    %2357 = vdwg.mxu0
    %v2358 = vsel %vm477, %v2307, -inf
    %2359 = vmax.xlane.f32.xlu0 %v2358
    %v2360 = vpop.xlane.xlu0 %2359
    %v2361 = vsel %vm477, %v2353, -inf
    %2362 = vmax.xlane.f32.xlu0 %v2361
    %v2363 = vpop.xlane.xlu0 %2362
    %v2364 = vsub.f32 %v2307, %v2360
    %v2365 = vsub.f32 %v2353, %v2363
    %v2366 = vmul.f32 %v2364, 1.442695
    %v2367 = vpow.pop %v2366
    %v2368 = vmul.f32 %v2365, 1.442695
    %v2369 = vpow.pop %v2368
    %v2370 = vsel %vm477, %v2367, 0.0
    %2371 = vadd.xlane.f32.xlu0 %v2370
    %v2372 = vpop.xlane.xlu0 %2371
    %v2373 = vsel %vm477, %v2369, 0.0
    %2374 = vadd.xlane.f32.xlu0 %v2373
    %v2375 = vpop.xlane.xlu0 %2374
    %v2376 = vrcp.pop %v2372
    %v2377 = vrcp.pop %v2375
    %v2378 = vmul.f32 %v2367, %v2376
    %v2379 = vmul.f32 %v2369, %v2377
    %v2380 = vpack.c.bf16 %v2378, %v2378
    %v2381 = vpack.c.bf16 %v2379, %v2379
    %v2382 = vpack.c.bf16 %v2217, %v2217
    %v2383 = vpack.c.bf16 %v2257, %v2257
    %v2385 = vsel %vm477, %v2380, 0
    %v2388 = vsel %vm507, %v2382, 0
    %2390 = vmatprep.subr.bf16.mxu0 0
    %2391 = vmatpush1.bf16.msra.mxu0 0
    %2392 = vmatprep.subr.bf16.mxu0 0
    %2393 = vmatpush1.bf16.msra.mxu0 0
    %2394 = vmatprep.subr.bf16.mxu0 0
    %2395 = vmatpush1.bf16.msra.mxu0 0
    %2396 = vmatprep.subr.bf16.mxu0 0
    %2397 = vmatpush1.bf16.msra.mxu0 0
    %2398 = vmatprep.subr.bf16.mxu0 0
    %2399 = vmatpush1.bf16.msra.mxu0 0
    %2400 = vmatprep.subr.bf16.mxu0 0
    %2401 = vmatpush1.bf16.msra.mxu0 0
    %2402 = vmatprep.subr.bf16.mxu0 0
    %2403 = vmatpush1.bf16.msra.mxu0 0
    %2404 = vmatprep.subr.bf16.mxu0 0
    %2405 = vmatpush1.bf16.msra.mxu0 %v2388
    %2406 = vmatprep.subr.bf16.mxu0 0
    %2407 = vmatpush2.bf16.msra.mxu0 0
    %2408 = vmatprep.subr.bf16.mxu0 0
    %2409 = vmatpush2.bf16.msra.mxu0 0
    %2410 = vmatprep.subr.bf16.mxu0 0
    %2411 = vmatpush2.bf16.msra.mxu0 0
    %2412 = vmatprep.subr.bf16.mxu0 0
    %2413 = vmatpush2.bf16.msra.mxu0 0
    %2414 = vmatprep.subr.bf16.mxu0 0
    %2415 = vmatpush2.bf16.msra.mxu0 0
    %2416 = vmatprep.subr.bf16.mxu0 0
    %2417 = vmatpush2.bf16.msra.mxu0 0
    %2418 = vmatprep.subr.bf16.mxu0 0
    %2419 = vmatpush2.bf16.msra.mxu0 0
    %2420 = vmatprep.subr.bf16.mxu0 0
    %2421 = vmatpush2.bf16.msra.mxu0 0
    %2422 = vmatprep.mubr.bf16.mxu0 0
    %2423 = vmatmul.mubr.bf16.gmra.mxu0 %v2385
    %v2424 = vpop.f32.mrf.mxu0
    %v2425 = vadd.f32 0.0, %v2424
    %v2426 = vpop.f32.mrf.mxu0
    %v2427 = vpop.f32.mrf.mxu0
    %v2428 = vpop.f32.mrf.mxu0
    %2429 = vdwg.mxu0
    %v2431 = vsel %vm477, %v2381, 0
    %v2434 = vsel %vm507, %v2383, 0
    %2436 = vmatprep.subr.bf16.mxu0 0
    %2437 = vmatpush1.bf16.msra.mxu0 0
    %2438 = vmatprep.subr.bf16.mxu0 0
    %2439 = vmatpush1.bf16.msra.mxu0 0
    %2440 = vmatprep.subr.bf16.mxu0 0
    %2441 = vmatpush1.bf16.msra.mxu0 0
    %2442 = vmatprep.subr.bf16.mxu0 0
    %2443 = vmatpush1.bf16.msra.mxu0 0
    %2444 = vmatprep.subr.bf16.mxu0 0
    %2445 = vmatpush1.bf16.msra.mxu0 0
    %2446 = vmatprep.subr.bf16.mxu0 0
    %2447 = vmatpush1.bf16.msra.mxu0 0
    %2448 = vmatprep.subr.bf16.mxu0 0
    %2449 = vmatpush1.bf16.msra.mxu0 0
    %2450 = vmatprep.subr.bf16.mxu0 0
    %2451 = vmatpush1.bf16.msra.mxu0 %v2434
    %2452 = vmatprep.subr.bf16.mxu0 0
    %2453 = vmatpush2.bf16.msra.mxu0 0
    %2454 = vmatprep.subr.bf16.mxu0 0
    %2455 = vmatpush2.bf16.msra.mxu0 0
    %2456 = vmatprep.subr.bf16.mxu0 0
    %2457 = vmatpush2.bf16.msra.mxu0 0
    %2458 = vmatprep.subr.bf16.mxu0 0
    %2459 = vmatpush2.bf16.msra.mxu0 0
    %2460 = vmatprep.subr.bf16.mxu0 0
    %2461 = vmatpush2.bf16.msra.mxu0 0
    %2462 = vmatprep.subr.bf16.mxu0 0
    %2463 = vmatpush2.bf16.msra.mxu0 0
    %2464 = vmatprep.subr.bf16.mxu0 0
    %2465 = vmatpush2.bf16.msra.mxu0 0
    %2466 = vmatprep.subr.bf16.mxu0 0
    %2467 = vmatpush2.bf16.msra.mxu0 0
    %2468 = vmatprep.mubr.bf16.mxu0 0
    %2469 = vmatmul.mubr.bf16.gmra.mxu0 %v2431
    %v2470 = vpop.f32.mrf.mxu0
    %v2471 = vadd.f32 0.0, %v2470
    %v2472 = vpop.f32.mrf.mxu0
    %v2473 = vpop.f32.mrf.mxu0
    %v2474 = vpop.f32.mrf.mxu0
    %2475 = vdwg.mxu0
    %s2476 = scalar_lea.vmem %s9, 24
    %v2477 = vld [vmem:[%s2476] sm:$0xf]
    %v2478 = vld [vmem:[%s2476 + $0x4] sm:$0xf]
    %v2479 = vpack.c.bf16 %v2425, %v2425
    %v2480 = vpack.c.bf16 %v2471, %v2471
    %v2483 = vunpack.c.l.b16 %v2477
    %v2484 = vunpack.c.l.b16 %v2478
    %v2485 = vpack.c.b16 %v2484, %v2483
    %v2488 = vsel %vm384, %v2479, 0
    %2490 = vmatprep.subr.bf16.mxu0 0
    %2491 = vmatpush1.bf16.msra.mxu0 0
    %2492 = vmatprep.subr.bf16.mxu0 0
    %2493 = vmatpush1.bf16.msra.mxu0 0
    %2494 = vmatprep.subr.bf16.mxu0 0
    %2495 = vmatpush1.bf16.msra.mxu0 0
    %2496 = vmatprep.subr.bf16.mxu0 0
    %2497 = vmatpush1.bf16.msra.mxu0 0
    %2498 = vmatprep.subr.bf16.mxu0 0
    %2499 = vmatpush1.bf16.msra.mxu0 0
    %2500 = vmatprep.subr.bf16.mxu0 0
    %2501 = vmatpush1.bf16.msra.mxu0 0
    %2502 = vmatprep.subr.bf16.mxu0 0
    %2503 = vmatpush1.bf16.msra.mxu0 0
    %2504 = vmatprep.subr.bf16.mxu0 0
    %2505 = vmatpush1.bf16.msra.mxu0 %v2485
    %2506 = vmatprep.subr.bf16.mxu0 0
    %2507 = vmatpush2.bf16.msra.mxu0 0
    %2508 = vmatprep.subr.bf16.mxu0 0
    %2509 = vmatpush2.bf16.msra.mxu0 0
    %2510 = vmatprep.subr.bf16.mxu0 0
    %2511 = vmatpush2.bf16.msra.mxu0 0
    %2512 = vmatprep.subr.bf16.mxu0 0
    %2513 = vmatpush2.bf16.msra.mxu0 0
    %2514 = vmatprep.subr.bf16.mxu0 0
    %2515 = vmatpush2.bf16.msra.mxu0 0
    %2516 = vmatprep.subr.bf16.mxu0 0
    %2517 = vmatpush2.bf16.msra.mxu0 0
    %2518 = vmatprep.subr.bf16.mxu0 0
    %2519 = vmatpush2.bf16.msra.mxu0 0
    %2520 = vmatprep.subr.bf16.mxu0 0
    %2521 = vmatpush2.bf16.msra.mxu0 0
    %2522 = vmatprep.mubr.bf16.mxu0 0
    %2523 = vmatmul.mubr.bf16.gmra.mxu0 %v2488
    %v2524 = vpop.f32.mrf.mxu0
    %v2525 = vadd.f32 0.0, %v2524
    %v2526 = vpop.f32.mrf.mxu0
    %v2527 = vpop.f32.mrf.mxu0
    %v2528 = vpop.f32.mrf.mxu0
    %2529 = vdwg.mxu0
    %v2531 = vsel %vm384, %v2480, 0
    %2533 = vmatprep.subr.bf16.mxu0 0
    %2534 = vmatpush1.bf16.msra.mxu0 0
    %2535 = vmatprep.subr.bf16.mxu0 0
    %2536 = vmatpush1.bf16.msra.mxu0 0
    %2537 = vmatprep.subr.bf16.mxu0 0
    %2538 = vmatpush1.bf16.msra.mxu0 0
    %2539 = vmatprep.subr.bf16.mxu0 0
    %2540 = vmatpush1.bf16.msra.mxu0 0
    %2541 = vmatprep.subr.bf16.mxu0 0
    %2542 = vmatpush1.bf16.msra.mxu0 0
    %2543 = vmatprep.subr.bf16.mxu0 0
    %2544 = vmatpush1.bf16.msra.mxu0 0
    %2545 = vmatprep.subr.bf16.mxu0 0
    %2546 = vmatpush1.bf16.msra.mxu0 0
    %2547 = vmatprep.subr.bf16.mxu0 0
    %2548 = vmatpush1.bf16.msra.mxu0 %v2485
    %2549 = vmatprep.subr.bf16.mxu0 0
    %2550 = vmatpush2.bf16.msra.mxu0 0
    %2551 = vmatprep.subr.bf16.mxu0 0
    %2552 = vmatpush2.bf16.msra.mxu0 0
    %2553 = vmatprep.subr.bf16.mxu0 0
    %2554 = vmatpush2.bf16.msra.mxu0 0
    %2555 = vmatprep.subr.bf16.mxu0 0
    %2556 = vmatpush2.bf16.msra.mxu0 0
    %2557 = vmatprep.subr.bf16.mxu0 0
    %2558 = vmatpush2.bf16.msra.mxu0 0
    %2559 = vmatprep.subr.bf16.mxu0 0
    %2560 = vmatpush2.bf16.msra.mxu0 0
    %2561 = vmatprep.subr.bf16.mxu0 0
    %2562 = vmatpush2.bf16.msra.mxu0 0
    %2563 = vmatprep.subr.bf16.mxu0 0
    %2564 = vmatpush2.bf16.msra.mxu0 0
    %2565 = vmatprep.mubr.bf16.mxu0 0
    %2566 = vmatmul.mubr.bf16.gmra.mxu0 %v2531
    %v2567 = vpop.f32.mrf.mxu0
    %v2568 = vadd.f32 0.0, %v2567
    %v2569 = vpop.f32.mrf.mxu0
    %v2570 = vpop.f32.mrf.mxu0
    %v2571 = vpop.f32.mrf.mxu0
    %2572 = vdwg.mxu0
    %v2573 = vadd.f32 %v1945, %v2525
    %v2574 = vadd.f32 %v1946, %v2568
    %v2575 = vld [vmem:[%s10] sm:$0x1]
    %v2577 = vlaneseq
    %v2578 = vshrl.u32 %v2577, 7
    %v2579 = vsub.s32 0, %v2578
    %v2580 = vrot.slane %v2575, %v2579
    %v2582 = vadd.f32 %v2573, %v2580
    %v2583 = vadd.f32 %v2574, %v2580
    %2584 = vst.msk [vmem:[#allocation2] sm:$0xff] %vm83, %v2582
    %2585 = vst.msk [vmem:[#allocation2 + $0x8] sm:$0xff] %vm83, %v2583
    // Predicated region
    $region46: #{tpu_custom_call.1} parent=1 // pred_check
      _
    $region47: #{tpu_custom_call.1} parent=1 // pred_check_branch
      %2587 = sbr.rel (0) target = $region49
    $region48: #{tpu_custom_call.1} parent=1 // pred_region
      %s2589 = ssub.s32 256, 256
      %2590 = vsyncadd [#allocation3], %s2589
      %s2591 = sshll.u32 [#allocation2], 4
      %s2592 = int_to_ptr.vmem [resolvable:$true] %s2591
      %2597 = dma.vmem_to_hbm [thread:$0]  %s2592, 256, %s11, [#allocation3], 128, 128, 8
    $region49: #{tpu_custom_call.1} parent=1 // pred_fallthru
      _
    // Predicated region
    $region50: #{tpu_custom_call.1} parent=1 // pred_check
      _
    $region51: #{tpu_custom_call.1} parent=1 // pred_check_branch
      %2599 = sbr.rel (0) target = $region53
    $region52: #{tpu_custom_call.1} parent=1 // pred_region
      %2600 = dma.done [#allocation3], 256
    $region53: #{tpu_custom_call.1} parent=1 // pred_fallthru
      _
    %2601 = vsyncpa [#allocation3], 1

</llo_original>
